<compile_context>
chip_gen: v7x
topology: tpu7x:2x2x1
jax: 0.10.0
libtpu: 0.0.40
codegen_flags: <defaults>
</compile_context>

<pallas_src>
import math

import jax
import jax.numpy as jnp
from jax.experimental import pallas as pl
from jax.experimental.pallas import tpu as pltpu

IN_FEATURES = 784
H1_FEATURES = 800
H2_FEATURES = 500
H2_PADDED = 512           # lane-dense padded hidden width (500 -> 512)
OUT_FEATURES = 10
OUT_PADDED = 128          # lane-dense padded output width (10 -> 128)
DEFAULT_TB = 512          # batch tile


def fc_nn_kernel(x_ref, w1_ref, b1_ref, w2_ref, b2_ref, w3_ref, b3_ref, o_ref):
    x = x_ref[...]                                                    # (TB, 784) bf16

    # fc1 + ReLU : bf16 operands on the MXU, f32 accumulation / elementwise
    h1 = jnp.dot(x, w1_ref[...], preferred_element_type=jnp.float32) + b1_ref[...]
    h1 = jnp.maximum(h1, 0.0)                                         # (TB, 800) f32

    # fc2 + ReLU (output padded to 512 lanes; padded cols are exactly 0)
    h2 = jnp.dot(h1.astype(jnp.bfloat16), w2_ref[...],
                 preferred_element_type=jnp.float32) + b2_ref[...]
    h2 = jnp.maximum(h2, 0.0)                                         # (TB, 512) f32

    # fc3 (padded to 128 lanes) + exact Sigmoid (f32 EUP)
    h3 = jnp.dot(h2.astype(jnp.bfloat16), w3_ref[...],
                 preferred_element_type=jnp.float32) + b3_ref[...]
    o_ref[...] = 1.0 / (1.0 + jnp.exp(-h3))                           # (TB, 128) f32


def _choose_batch_tile(B, tb):
    """8-aligned batch tile; ensure >=2 grid programs whenever B > 8 so the
    'parallel' batch axis shards across v7x's two TensorCores (no-op on the
    single-TC v5e/v6e)."""
    if B <= 8:
        return B                      # full-extent block (exempt from (8,128) rule)
    if B < 2 * tb:
        tb = min(tb, ((B + 1) // 2 + 7) // 8 * 8)
    return max(8, tb)


def fc_nn_split_forward(x, params, *, tb=DEFAULT_TB):
    """x: (B, C, H, W) with C*H*W == 784. Returns (B, 10) float32.

    `params` must come from `prepare_params` (pre-transposed bf16 weights,
    zero-padded H2/output widths).

    Note: if B % tb != 0, the last (partial) batch tile computes on padded
    rows; Pallas masks the out-of-range output writeback, so those rows are
    never observable."""
    B = x.shape[0]
    x2d = x.reshape(B, -1).astype(jnp.bfloat16)        # bf16 stream: half the HBM DMA
    assert x2d.shape[1] == IN_FEATURES, "flattened feature dim must be 784"
    w1, b1, w2, b2, w3, b3 = params

    tb = _choose_batch_tile(B, tb)
    grid = (pl.cdiv(B, tb),)

    const = lambda i: (0, 0)  # weights / biases: VMEM-resident across the grid

    out = pl.pallas_call(
        fc_nn_kernel,
        out_shape=jax.ShapeDtypeStruct((B, OUT_PADDED), jnp.float32),
        grid=grid,
        in_specs=[
            pl.BlockSpec((tb, IN_FEATURES), lambda i: (i, 0)),        # x tile (bf16)
            pl.BlockSpec((IN_FEATURES, H1_FEATURES), const),          # w1 (784, 800) bf16
            pl.BlockSpec((1, H1_FEATURES), const),                    # b1 (1, 800)   f32
            pl.BlockSpec((H1_FEATURES, H2_PADDED), const),            # w2 (800, 512) bf16
            pl.BlockSpec((1, H2_PADDED), const),                      # b2 (1, 512)   f32
            pl.BlockSpec((H2_PADDED, OUT_PADDED), const),             # w3 (512, 128) bf16
            pl.BlockSpec((1, OUT_PADDED), const),                     # b3 (1, 128)   f32
        ],
        out_specs=pl.BlockSpec((tb, OUT_PADDED), lambda i: (i, 0)),
        compiler_params=pltpu.CompilerParams(
            dimension_semantics=("parallel",),   # shard batch tiles over TCs (v7x)
            vmem_limit_bytes=24 << 20,           # ~10 MiB real footprint + headroom
        ),
    )(x2d, w1, b1, w2, b2, w3, b3)

    return out[:, :OUT_FEATURES]


def init_params(key):
    """Deterministic init matching nn.Linear's default U(-1/sqrt(fan_in), +).

    Returns PyTorch-layout f32 params: w (out, in), b (out,)."""
    def linear_init(k, out_f, in_f):
        kw, kb = jax.random.split(k)
        bound = 1.0 / math.sqrt(in_f)
        w = jax.random.uniform(kw, (out_f, in_f), jnp.float32, -bound, bound)
        b = jax.random.uniform(kb, (out_f,), jnp.float32, -bound, bound)
        return w, b

    k1, k2, k3 = jax.random.split(key, 3)
    w1, b1 = linear_init(k1, H1_FEATURES, IN_FEATURES)
    w2, b2 = linear_init(k2, H2_FEATURES, H1_FEATURES)
    w3, b3 = linear_init(k3, OUT_FEATURES, H2_FEATURES)
    return (w1, b1, w2, b2, w3, b3)


def prepare_params(raw_params):
    """One-time conversion to the kernel layout:
       * weights transposed to (in, out) and cast to bf16 (deliberate
         quantization vs. the f32 torch weights)
       * biases reshaped to (1, out), kept f32
       * hidden layer 2 zero-padded 500 -> 512, final layer 10 -> 128.
         Padding is exact: padded h2 columns are relu(0)=0 and contribute
         nothing to fc3; padded outputs are sliced off in the wrapper."""
    w1, b1, w2, b2, w3, b3 = raw_params

    w2p = jnp.zeros((H2_PADDED, H1_FEATURES), jnp.float32).at[:H2_FEATURES].set(w2)
    b2p = jnp.zeros((H2_PADDED,), jnp.float32).at[:H2_FEATURES].set(b2)
    w3p = jnp.zeros((OUT_PADDED, H2_PADDED), jnp.float32)
    w3p = w3p.at[:OUT_FEATURES, :H2_FEATURES].set(w3)
    b3p = jnp.zeros((OUT_PADDED,), jnp.float32).at[:OUT_FEATURES].set(b3)

    return (
        w1.T.astype(jnp.bfloat16),  b1.reshape(1, -1).astype(jnp.float32),
        w2p.T.astype(jnp.bfloat16), b2p.reshape(1, -1).astype(jnp.float32),
        w3p.T.astype(jnp.bfloat16), b3p.reshape(1, -1).astype(jnp.float32),
    )


def reference_forward(x, prepared_params):
    """Pure-JAX reference using the same bf16-quantized prepared weights and
    the same bf16-operand / f32-accumulate matmul recipe."""
    w1, b1, w2, b2, w3, b3 = prepared_params
    B = x.shape[0]
    x2d = x.reshape(B, -1).astype(jnp.bfloat16)
    h = jnp.dot(x2d, w1, preferred_element_type=jnp.float32) + b1
    h = jnp.maximum(h, 0.0)
    h = jnp.dot(h.astype(jnp.bfloat16), w2, preferred_element_type=jnp.float32) + b2
    h = jnp.maximum(h, 0.0)
    y = jax.nn.sigmoid(
        jnp.dot(h.astype(jnp.bfloat16), w3, preferred_element_type=jnp.float32) + b3)
    return y[:, :OUT_FEATURES]


if __name__ == "__main__":
    key = jax.random.PRNGKey(0)
    kx, kp = jax.random.split(key)

    # MNIST-like input: batch=2, NCHW (2, 1, 28, 28) -> flattened 784 features.
    x = jax.random.normal(kx, (2, 1, 28, 28), jnp.float32)
    raw_params = init_params(kp)
    params = prepare_params(raw_params)   # one-time layout/dtype conversion

    out = fc_nn_split_forward(x, params)
    out = jax.block_until_ready(out)

    ref = reference_forward(x, params)
    assert out.shape == (2, OUT_FEATURES)
    max_err = float(jnp.max(jnp.abs(out - ref)))
    assert jnp.allclose(out, ref, atol=5e-3, rtol=5e-3), f"max abs err = {max_err}"

    print("KERNEL_OK")
</pallas_src>

<mosaic_0001>
module attributes {stable_mosaic.version = 11 : i64} {
  func.func @fc_nn_kernel(%arg0: i32, %arg1: memref<2x784xbf16, #tpu.memory_space<vmem>>, %arg2: memref<784x800xbf16, #tpu.memory_space<vmem>>, %arg3: memref<1x800xf32, #tpu.memory_space<vmem>>, %arg4: memref<800x512xbf16, #tpu.memory_space<vmem>>, %arg5: memref<1x512xf32, #tpu.memory_space<vmem>>, %arg6: memref<512x128xbf16, #tpu.memory_space<vmem>>, %arg7: memref<1x128xf32, #tpu.memory_space<vmem>>, %arg8: memref<2x128xf32, #tpu.memory_space<vmem>>) attributes {dimension_semantics = [#tpu.dimension_semantics<parallel>], iteration_bounds = array<i64: 1>, scalar_prefetch = 0 : i64, scratch_operands = 0 : i64, tpu.core_type = #tpu.core_type<tc>, window_params = [{transform_indices = @transform_0, window_bounds = array<i64: 2, 784>}, {pipeline_mode = #tpu.pipeline_mode<synchronous>, transform_indices = @transform_1, window_bounds = array<i64: 784, 800>}, {pipeline_mode = #tpu.pipeline_mode<synchronous>, transform_indices = @transform_2, window_bounds = array<i64: 1, 800>}, {pipeline_mode = #tpu.pipeline_mode<synchronous>, transform_indices = @transform_3, window_bounds = array<i64: 800, 512>}, {pipeline_mode = #tpu.pipeline_mode<synchronous>, transform_indices = @transform_4, window_bounds = array<i64: 1, 512>}, {pipeline_mode = #tpu.pipeline_mode<synchronous>, transform_indices = @transform_5, window_bounds = array<i64: 512, 128>}, {pipeline_mode = #tpu.pipeline_mode<synchronous>, transform_indices = @transform_6, window_bounds = array<i64: 1, 128>}, {transform_indices = @transform_7, window_bounds = array<i64: 2, 128>}]} {
    %c0 = arith.constant 0 : index
    %c0_0 = arith.constant 0 : index
    %0 = vector.load %arg1[%c0, %c0_0] : memref<2x784xbf16, #tpu.memory_space<vmem>>, vector<2x784xbf16>
    %c0_1 = arith.constant 0 : index
    %c0_2 = arith.constant 0 : index
    %1 = vector.load %arg2[%c0_1, %c0_2] : memref<784x800xbf16, #tpu.memory_space<vmem>>, vector<784x800xbf16>
    %cst = arith.constant dense<0.000000e+00> : vector<2x800xf32>
    %2 = tpu.matmul %0, %1, %cst {dimension_numbers = #tpu.dot_dimension_numbers<[1], [0], [0], [1], [0, 0, 1, 1], [], []>} : vector<2x784xbf16>, vector<784x800xbf16>, vector<2x800xf32> -> vector<2x800xf32>
    %c0_3 = arith.constant 0 : index
    %c0_4 = arith.constant 0 : index
    %3 = vector.load %arg3[%c0_3, %c0_4] : memref<1x800xf32, #tpu.memory_space<vmem>>, vector<1x800xf32>
    %4 = vector.broadcast %3 : vector<1x800xf32> to vector<2x800xf32>
    %5 = arith.addf %2, %4 : vector<2x800xf32>
    %cst_5 = arith.constant 0.000000e+00 : f32
    %6 = vector.broadcast %cst_5 : f32 to vector<2x800xf32>
    %7 = arith.maximumf %5, %6 : vector<2x800xf32>
    %8 = arith.truncf %7 : vector<2x800xf32> to vector<2x800xbf16>
    %c0_6 = arith.constant 0 : index
    %c0_7 = arith.constant 0 : index
    %9 = vector.load %arg4[%c0_6, %c0_7] : memref<800x512xbf16, #tpu.memory_space<vmem>>, vector<800x512xbf16>
    %cst_8 = arith.constant dense<0.000000e+00> : vector<2x512xf32>
    %10 = tpu.matmul %8, %9, %cst_8 {dimension_numbers = #tpu.dot_dimension_numbers<[1], [0], [0], [1], [0, 0, 1, 1], [], []>} : vector<2x800xbf16>, vector<800x512xbf16>, vector<2x512xf32> -> vector<2x512xf32>
    %c0_9 = arith.constant 0 : index
    %c0_10 = arith.constant 0 : index
    %11 = vector.load %arg5[%c0_9, %c0_10] : memref<1x512xf32, #tpu.memory_space<vmem>>, vector<1x512xf32>
    %12 = vector.broadcast %11 : vector<1x512xf32> to vector<2x512xf32>
    %13 = arith.addf %10, %12 : vector<2x512xf32>
    %cst_11 = arith.constant 0.000000e+00 : f32
    %14 = vector.broadcast %cst_11 : f32 to vector<2x512xf32>
    %15 = arith.maximumf %13, %14 : vector<2x512xf32>
    %16 = arith.truncf %15 : vector<2x512xf32> to vector<2x512xbf16>
    %c0_12 = arith.constant 0 : index
    %c0_13 = arith.constant 0 : index
    %17 = vector.load %arg6[%c0_12, %c0_13] : memref<512x128xbf16, #tpu.memory_space<vmem>>, vector<512x128xbf16>
    %cst_14 = arith.constant dense<0.000000e+00> : vector<2x128xf32>
    %18 = tpu.matmul %16, %17, %cst_14 {dimension_numbers = #tpu.dot_dimension_numbers<[1], [0], [0], [1], [0, 0, 1, 1], [], []>} : vector<2x512xbf16>, vector<512x128xbf16>, vector<2x128xf32> -> vector<2x128xf32>
    %c0_15 = arith.constant 0 : index
    %c0_16 = arith.constant 0 : index
    %19 = vector.load %arg7[%c0_15, %c0_16] : memref<1x128xf32, #tpu.memory_space<vmem>>, vector<1x128xf32>
    %20 = vector.broadcast %19 : vector<1x128xf32> to vector<2x128xf32>
    %21 = arith.addf %18, %20 : vector<2x128xf32>
    %cst_17 = arith.constant 0.000000e+00 : f32
    %22 = vector.broadcast %cst_17 : f32 to vector<2x128xf32>
    %23 = arith.subf %22, %21 : vector<2x128xf32>
    %24 = math.exp %23 : vector<2x128xf32>
    %cst_18 = arith.constant 1.000000e+00 : f32
    %25 = vector.broadcast %cst_18 : f32 to vector<2x128xf32>
    %26 = arith.addf %25, %24 : vector<2x128xf32>
    %cst_19 = arith.constant 1.000000e+00 : f32
    %27 = vector.broadcast %cst_19 : f32 to vector<2x128xf32>
    %28 = arith.divf %27, %26 : vector<2x128xf32>
    %c0_20 = arith.constant 0 : index
    %c0_21 = arith.constant 0 : index
    %29 = vector.load %arg8[%c0_20, %c0_21] : memref<2x128xf32, #tpu.memory_space<vmem>>, vector<2x128xf32>
    tpu.vector_store %arg8[%c0_20, %c0_21], %28 {strides = array<i32>} : memref<2x128xf32, #tpu.memory_space<vmem>>, vector<2x128xf32>,
    return
  }
  func.func @transform_0(%arg0: i32) -> (i32, i32) {
    %c0_i32 = arith.constant 0 : i32
    %c0_i32_0 = arith.constant 0 : i32
    return %arg0, %c0_i32 : i32, i32
  }
  func.func @transform_1(%arg0: i32) -> (i32, i32) {
    %c0_i32 = arith.constant 0 : i32
    %c0_i32_0 = arith.constant 0 : i32
    %c0_i32_1 = arith.constant 0 : i32
    return %c0_i32, %c0_i32_0 : i32, i32
  }
  func.func @transform_2(%arg0: i32) -> (i32, i32) {
    %c0_i32 = arith.constant 0 : i32
    %c0_i32_0 = arith.constant 0 : i32
    %c0_i32_1 = arith.constant 0 : i32
    return %c0_i32, %c0_i32_0 : i32, i32
  }
  func.func @transform_3(%arg0: i32) -> (i32, i32) {
    %c0_i32 = arith.constant 0 : i32
    %c0_i32_0 = arith.constant 0 : i32
    %c0_i32_1 = arith.constant 0 : i32
    return %c0_i32, %c0_i32_0 : i32, i32
  }
  func.func @transform_4(%arg0: i32) -> (i32, i32) {
    %c0_i32 = arith.constant 0 : i32
    %c0_i32_0 = arith.constant 0 : i32
    %c0_i32_1 = arith.constant 0 : i32
    return %c0_i32, %c0_i32_0 : i32, i32
  }
  func.func @transform_5(%arg0: i32) -> (i32, i32) {
    %c0_i32 = arith.constant 0 : i32
    %c0_i32_0 = arith.constant 0 : i32
    %c0_i32_1 = arith.constant 0 : i32
    return %c0_i32, %c0_i32_0 : i32, i32
  }
  func.func @transform_6(%arg0: i32) -> (i32, i32) {
    %c0_i32 = arith.constant 0 : i32
    %c0_i32_0 = arith.constant 0 : i32
    %c0_i32_1 = arith.constant 0 : i32
    return %c0_i32, %c0_i32_0 : i32, i32
  }
  func.func @transform_7(%arg0: i32) -> (i32, i32) {
    %c0_i32 = arith.constant 0 : i32
    %c0_i32_0 = arith.constant 0 : i32
    return %arg0, %c0_i32 : i32, i32
  }
}

</mosaic_0001>

<llo_original>
// kernel: tpu_custom_call.1
$region0: #{tpu_custom_call.1}
  #allocation0 [shape = 'u32[]', space=smem, size = 0x4, offset = 0x4, fixed_abs, tag = 'smem constant byte address 0x4 - core index']
  #allocation1 [shape = 'u32[144,128]{1,0:T(1,128)}', space=vmem, size = 0x12000, scoped, tag = 'internal scratch']
  %s0 = inlined_call_operand.hbm [shape: bf16[2,784], index: 0, kind: input, shape index: {}]
  %s1 = inlined_call_operand.hbm [shape: bf16[784,800], index: 1, kind: input, shape index: {}]
  %s2 = inlined_call_operand.hbm [shape: f32[1,800], index: 2, kind: input, shape index: {}]
  %s3 = inlined_call_operand.hbm [shape: bf16[800,512], index: 3, kind: input, shape index: {}]
  %s4 = inlined_call_operand.hbm [shape: f32[1,512], index: 4, kind: input, shape index: {}]
  %s5 = inlined_call_operand.hbm [shape: bf16[512,128], index: 5, kind: input, shape index: {}]
  %s6 = inlined_call_operand.hbm [shape: f32[1,128], index: 6, kind: input, shape index: {}]
  %s7 = inlined_call_operand.hbm [shape: f32[2,128], index: 7, kind: output, shape index: {}]
  %s8 = sld [smem:[#allocation0]]
  $region66: #{tpu_custom_call.1} parent=0
    _
  %s10 = ssub.s32 1, %s8
  %s11 = scalar_select 0, %s10, %s8
  $region1: #{tpu_custom_call.1} parent=0
    #allocation2 [shape = 'u8[3584]{0}', space=vmem, size = 0x1000, scoped, tag = 'input window, operand 0, single buffered']
    #allocation3 [shape = 's32[1]{0}', space=sflag, size = 0x4, scoped, tag = 'scoped memory for tpu_custom_call.1']
    #allocation4 [shape = 's32[1]{0}', space=sflag, size = 0x4, scoped, tag = 'scoped memory for tpu_custom_call.1']
    #allocation5 [shape = 'u8[1404928]{0}', space=vmem, size = 0x157000, scoped, tag = 'input window, operand 1, single buffered']
    #allocation6 [shape = 's32[1]{0}', space=sflag, size = 0x4, scoped, tag = 'scoped memory for tpu_custom_call.1']
    #allocation7 [shape = 'u8[3584]{0}', space=vmem, size = 0x1000, scoped, tag = 'input window, operand 2, single buffered']
    #allocation8 [shape = 'u8[819200]{0}', space=vmem, size = 0xc8000, scoped, tag = 'input window, operand 3, single buffered']
    #allocation9 [shape = 's32[1]{0}', space=sflag, size = 0x4, scoped, tag = 'scoped memory for tpu_custom_call.1']
    #allocation10 [shape = 'u8[2048]{0}', space=vmem, size = 0x800, scoped, tag = 'input window, operand 4, single buffered']
    #allocation11 [shape = 'u8[131072]{0}', space=vmem, size = 0x20000, scoped, tag = 'input window, operand 5, single buffered']
    #allocation12 [shape = 's32[1]{0}', space=sflag, size = 0x4, scoped, tag = 'scoped memory for tpu_custom_call.1']
    #allocation13 [shape = 'u8[512]{0}', space=vmem, size = 0x400, scoped, tag = 'input window, operand 6, single buffered']
    #allocation14 [shape = 'u8[1024]{0}', space=vmem, size = 0x400, scoped, tag = 'output window, operand 0, single buffered']
    %12 = vsyncpa [#allocation3], 0
    %13 = vsyncpa [#allocation6], 0
    %14 = vsyncpa [#allocation9], 0
    %15 = vsyncpa [#allocation12], 0
    %16 = vsyncpa [#allocation4], 0
    // Predicated region
    $region2: #{tpu_custom_call.1} parent=1 // pred_check
      _
    $region3: #{tpu_custom_call.1} parent=1 // pred_check_branch
      %18 = sbr.rel (0) target = $region5
    $region4: #{tpu_custom_call.1} parent=1 // pred_region
      %s20 = ssub.s32 112, 112
      %21 = vsyncadd [#allocation3], %s20
      %s23 = sshll.u32 [#allocation2], 4
      %s24 = int_to_ptr.vmem [resolvable:$true] %s23
      %26 = dma.hbm_to_vmem [thread:$0]  %s0, 112, %s24, [#allocation3]
    $region5: #{tpu_custom_call.1} parent=1 // pred_fallthru
      _
    // Predicated region
    $region6: #{tpu_custom_call.1} parent=1 // pred_check
      _
    $region7: #{tpu_custom_call.1} parent=1 // pred_check_branch
      %28 = sbr.rel (0) target = $region9
    $region8: #{tpu_custom_call.1} parent=1 // pred_region
      %s30 = ssub.s32 43904, 43904
      %31 = vsyncadd [#allocation6], %s30
      %s32 = sshll.u32 [#allocation5], 4
      %s33 = int_to_ptr.vmem [resolvable:$true] %s32
      %38 = dma.hbm_to_vmem [thread:$0]  %s1, 43904, %s33, [#allocation6], 448, 448, 28
    $region9: #{tpu_custom_call.1} parent=1 // pred_fallthru
      _
    // Predicated region
    $region10: #{tpu_custom_call.1} parent=1 // pred_check
      _
    $region11: #{tpu_custom_call.1} parent=1 // pred_check_branch
      %40 = sbr.rel (0) target = $region13
    $region12: #{tpu_custom_call.1} parent=1 // pred_region
      %s42 = ssub.s32 112, 112
      %43 = vsyncadd [#allocation6], %s42
      %s45 = sshll.u32 [#allocation7], 4
      %s46 = int_to_ptr.vmem [resolvable:$true] %s45
      %48 = dma.hbm_to_vmem [thread:$0]  %s2, 112, %s46, [#allocation6]
    $region13: #{tpu_custom_call.1} parent=1 // pred_fallthru
      _
    // Predicated region
    $region14: #{tpu_custom_call.1} parent=1 // pred_check
      _
    $region15: #{tpu_custom_call.1} parent=1 // pred_check_branch
      %50 = sbr.rel (0) target = $region17
    $region16: #{tpu_custom_call.1} parent=1 // pred_region
      %s52 = ssub.s32 25600, 25600
      %53 = vsyncadd [#allocation9], %s52
      %s54 = sshll.u32 [#allocation8], 4
      %s55 = int_to_ptr.vmem [resolvable:$true] %s54
      %60 = dma.hbm_to_vmem [thread:$0]  %s3, 25600, %s55, [#allocation9], 256, 256, 16
    $region17: #{tpu_custom_call.1} parent=1 // pred_fallthru
      _
    // Predicated region
    $region18: #{tpu_custom_call.1} parent=1 // pred_check
      _
    $region19: #{tpu_custom_call.1} parent=1 // pred_check_branch
      %62 = sbr.rel (0) target = $region21
    $region20: #{tpu_custom_call.1} parent=1 // pred_region
      %s64 = ssub.s32 64, 64
      %65 = vsyncadd [#allocation9], %s64
      %s67 = sshll.u32 [#allocation10], 4
      %s68 = int_to_ptr.vmem [resolvable:$true] %s67
      %70 = dma.hbm_to_vmem [thread:$0]  %s4, 64, %s68, [#allocation9]
    $region21: #{tpu_custom_call.1} parent=1 // pred_fallthru
      _
    // Predicated region
    $region22: #{tpu_custom_call.1} parent=1 // pred_check
      _
    $region23: #{tpu_custom_call.1} parent=1 // pred_check_branch
      %72 = sbr.rel (0) target = $region25
    $region24: #{tpu_custom_call.1} parent=1 // pred_region
      %s74 = ssub.s32 4096, 4096
      %75 = vsyncadd [#allocation12], %s74
      %s76 = sshll.u32 [#allocation11], 4
      %s77 = int_to_ptr.vmem [resolvable:$true] %s76
      %82 = dma.hbm_to_vmem [thread:$0]  %s5, 4096, %s77, [#allocation12], 64, 64, 4
    $region25: #{tpu_custom_call.1} parent=1 // pred_fallthru
      _
    // Predicated region
    $region26: #{tpu_custom_call.1} parent=1 // pred_check
      _
    $region27: #{tpu_custom_call.1} parent=1 // pred_check_branch
      %84 = sbr.rel (0) target = $region29
    $region28: #{tpu_custom_call.1} parent=1 // pred_region
      %s86 = ssub.s32 16, 16
      %87 = vsyncadd [#allocation12], %s86
      %s89 = sshll.u32 [#allocation13], 4
      %s90 = int_to_ptr.vmem [resolvable:$true] %s89
      %92 = dma.hbm_to_vmem [thread:$0]  %s6, 16, %s90, [#allocation12]
    $region29: #{tpu_custom_call.1} parent=1 // pred_fallthru
      _
    // Predicated region
    $region30: #{tpu_custom_call.1} parent=1 // pred_check
      _
    $region31: #{tpu_custom_call.1} parent=1 // pred_check_branch
      %94 = sbr.rel (0) target = $region33
    $region32: #{tpu_custom_call.1} parent=1 // pred_region
      %95 = dma.done [#allocation3], 112
    $region33: #{tpu_custom_call.1} parent=1 // pred_fallthru
      _
    // Predicated region
    $region34: #{tpu_custom_call.1} parent=1 // pred_check
      _
    $region35: #{tpu_custom_call.1} parent=1 // pred_check_branch
      %97 = sbr.rel (0) target = $region37
    $region36: #{tpu_custom_call.1} parent=1 // pred_region
      %98 = dma.done [#allocation6], 43904
    $region37: #{tpu_custom_call.1} parent=1 // pred_fallthru
      _
    // Predicated region
    $region38: #{tpu_custom_call.1} parent=1 // pred_check
      _
    $region39: #{tpu_custom_call.1} parent=1 // pred_check_branch
      %100 = sbr.rel (0) target = $region41
    $region40: #{tpu_custom_call.1} parent=1 // pred_region
      %101 = dma.done [#allocation6], 112
    $region41: #{tpu_custom_call.1} parent=1 // pred_fallthru
      _
    // Predicated region
    $region42: #{tpu_custom_call.1} parent=1 // pred_check
      _
    $region43: #{tpu_custom_call.1} parent=1 // pred_check_branch
      %103 = sbr.rel (0) target = $region45
    $region44: #{tpu_custom_call.1} parent=1 // pred_region
      %104 = dma.done [#allocation9], 25600
    $region45: #{tpu_custom_call.1} parent=1 // pred_fallthru
      _
    // Predicated region
    $region46: #{tpu_custom_call.1} parent=1 // pred_check
      _
    $region47: #{tpu_custom_call.1} parent=1 // pred_check_branch
      %106 = sbr.rel (0) target = $region49
    $region48: #{tpu_custom_call.1} parent=1 // pred_region
      %107 = dma.done [#allocation9], 64
    $region49: #{tpu_custom_call.1} parent=1 // pred_fallthru
      _
    // Predicated region
    $region50: #{tpu_custom_call.1} parent=1 // pred_check
      _
    $region51: #{tpu_custom_call.1} parent=1 // pred_check_branch
      %109 = sbr.rel (0) target = $region53
    $region52: #{tpu_custom_call.1} parent=1 // pred_region
      %110 = dma.done [#allocation12], 4096
    $region53: #{tpu_custom_call.1} parent=1 // pred_fallthru
      _
    // Predicated region
    $region54: #{tpu_custom_call.1} parent=1 // pred_check
      _
    $region55: #{tpu_custom_call.1} parent=1 // pred_check_branch
      %112 = sbr.rel (0) target = $region57
    $region56: #{tpu_custom_call.1} parent=1 // pred_region
      %113 = dma.done [#allocation12], 16
    $region57: #{tpu_custom_call.1} parent=1 // pred_fallthru
      _
    %v115 = vld [vmem:[#allocation2] sm:$0x7f]
    %v116 = vld [vmem:[#allocation5] sm:$0xff]
    %v117 = vld [vmem:[#allocation5 + $0x8] sm:$0xff]
    %v118 = vld [vmem:[#allocation5 + $0x10] sm:$0xff]
    %v119 = vld [vmem:[#allocation5 + $0x18] sm:$0xf]
    %v120 = vld [vmem:[#allocation5 + $0x1c] sm:$0xff]
    %v121 = vld [vmem:[#allocation5 + $0x24] sm:$0xff]
    %v122 = vld [vmem:[#allocation5 + $0x2c] sm:$0xff]
    %v123 = vld [vmem:[#allocation5 + $0x34] sm:$0xf]
    %v124 = vld [vmem:[#allocation5 + $0x38] sm:$0xff]
    %v125 = vld [vmem:[#allocation5 + $0x40] sm:$0xff]
    %v126 = vld [vmem:[#allocation5 + $0x48] sm:$0xff]
    %v127 = vld [vmem:[#allocation5 + $0x50] sm:$0xf]
    %v128 = vld [vmem:[#allocation5 + $0x54] sm:$0xff]
    %v129 = vld [vmem:[#allocation5 + $0x5c] sm:$0xff]
    %v130 = vld [vmem:[#allocation5 + $0x64] sm:$0xff]
    %v131 = vld [vmem:[#allocation5 + $0x6c] sm:$0xf]
    %v132 = vld [vmem:[#allocation5 + $0x70] sm:$0xff]
    %v133 = vld [vmem:[#allocation5 + $0x78] sm:$0xff]
    %v134 = vld [vmem:[#allocation5 + $0x80] sm:$0xff]
    %v135 = vld [vmem:[#allocation5 + $0x88] sm:$0xf]
    %v136 = vld [vmem:[#allocation5 + $0x8c] sm:$0xff]
    %v137 = vld [vmem:[#allocation5 + $0x94] sm:$0xff]
    %v138 = vld [vmem:[#allocation5 + $0x9c] sm:$0xff]
    %v139 = vld [vmem:[#allocation5 + $0xa4] sm:$0xf]
    %v140 = vld [vmem:[#allocation5 + $0xa8] sm:$0xff]
    %v141 = vld [vmem:[#allocation5 + $0xb0] sm:$0xff]
    %v142 = vld [vmem:[#allocation5 + $0xb8] sm:$0xff]
    %v143 = vld [vmem:[#allocation5 + $0xc0] sm:$0xf]
    %v144 = vld [vmem:[#allocation5 + $0xc4] sm:$0xff]
    %v145 = vld [vmem:[#allocation5 + $0xcc] sm:$0xff]
    %v146 = vld [vmem:[#allocation5 + $0xd4] sm:$0xff]
    %v147 = vld [vmem:[#allocation5 + $0xdc] sm:$0xf]
    %v148 = vld [vmem:[#allocation5 + $0xe0] sm:$0xff]
    %v149 = vld [vmem:[#allocation5 + $0xe8] sm:$0xff]
    %v150 = vld [vmem:[#allocation5 + $0xf0] sm:$0xff]
    %v151 = vld [vmem:[#allocation5 + $0xf8] sm:$0xf]
    %v152 = vld [vmem:[#allocation5 + $0xfc] sm:$0xff]
    %v153 = vld [vmem:[#allocation5 + $0x104] sm:$0xff]
    %v154 = vld [vmem:[#allocation5 + $0x10c] sm:$0xff]
    %v155 = vld [vmem:[#allocation5 + $0x114] sm:$0xf]
    %v156 = vld [vmem:[#allocation5 + $0x118] sm:$0xff]
    %v157 = vld [vmem:[#allocation5 + $0x120] sm:$0xff]
    %v158 = vld [vmem:[#allocation5 + $0x128] sm:$0xff]
    %v159 = vld [vmem:[#allocation5 + $0x130] sm:$0xf]
    %v160 = vld [vmem:[#allocation5 + $0x134] sm:$0xff]
    %v161 = vld [vmem:[#allocation5 + $0x13c] sm:$0xff]
    %v162 = vld [vmem:[#allocation5 + $0x144] sm:$0xff]
    %v163 = vld [vmem:[#allocation5 + $0x14c] sm:$0xf]
    %v164 = vld [vmem:[#allocation5 + $0x150] sm:$0xff]
    %v165 = vld [vmem:[#allocation5 + $0x158] sm:$0xff]
    %v166 = vld [vmem:[#allocation5 + $0x160] sm:$0xff]
    %v167 = vld [vmem:[#allocation5 + $0x168] sm:$0xf]
    %v168 = vld [vmem:[#allocation5 + $0x16c] sm:$0xff]
    %v169 = vld [vmem:[#allocation5 + $0x174] sm:$0xff]
    %v170 = vld [vmem:[#allocation5 + $0x17c] sm:$0xff]
    %v171 = vld [vmem:[#allocation5 + $0x184] sm:$0xf]
    %v172 = vld [vmem:[#allocation5 + $0x188] sm:$0xff]
    %v173 = vld [vmem:[#allocation5 + $0x190] sm:$0xff]
    %v174 = vld [vmem:[#allocation5 + $0x198] sm:$0xff]
    %v175 = vld [vmem:[#allocation5 + $0x1a0] sm:$0xf]
    %v176 = vld [vmem:[#allocation5 + $0x1a4] sm:$0xff]
    %v177 = vld [vmem:[#allocation5 + $0x1ac] sm:$0xff]
    %v178 = vld [vmem:[#allocation5 + $0x1b4] sm:$0xff]
    %v179 = vld [vmem:[#allocation5 + $0x1bc] sm:$0xf]
    %v180 = vld [vmem:[#allocation5 + $0x1c0] sm:$0xff]
    %v181 = vld [vmem:[#allocation5 + $0x1c8] sm:$0xff]
    %v182 = vld [vmem:[#allocation5 + $0x1d0] sm:$0xff]
    %v183 = vld [vmem:[#allocation5 + $0x1d8] sm:$0xf]
    %v184 = vld [vmem:[#allocation5 + $0x1dc] sm:$0xff]
    %v185 = vld [vmem:[#allocation5 + $0x1e4] sm:$0xff]
    %v186 = vld [vmem:[#allocation5 + $0x1ec] sm:$0xff]
    %v187 = vld [vmem:[#allocation5 + $0x1f4] sm:$0xf]
    %v188 = vld [vmem:[#allocation5 + $0x1f8] sm:$0xff]
    %v189 = vld [vmem:[#allocation5 + $0x200] sm:$0xff]
    %v190 = vld [vmem:[#allocation5 + $0x208] sm:$0xff]
    %v191 = vld [vmem:[#allocation5 + $0x210] sm:$0xf]
    %v192 = vld [vmem:[#allocation5 + $0x214] sm:$0xff]
    %v193 = vld [vmem:[#allocation5 + $0x21c] sm:$0xff]
    %v194 = vld [vmem:[#allocation5 + $0x224] sm:$0xff]
    %v195 = vld [vmem:[#allocation5 + $0x22c] sm:$0xf]
    %v196 = vld [vmem:[#allocation5 + $0x230] sm:$0xff]
    %v197 = vld [vmem:[#allocation5 + $0x238] sm:$0xff]
    %v198 = vld [vmem:[#allocation5 + $0x240] sm:$0xff]
    %v199 = vld [vmem:[#allocation5 + $0x248] sm:$0xf]
    %v200 = vld [vmem:[#allocation5 + $0x24c] sm:$0xff]
    %v201 = vld [vmem:[#allocation5 + $0x254] sm:$0xff]
    %v202 = vld [vmem:[#allocation5 + $0x25c] sm:$0xff]
    %v203 = vld [vmem:[#allocation5 + $0x264] sm:$0xf]
    %v204 = vld [vmem:[#allocation5 + $0x268] sm:$0xff]
    %v205 = vld [vmem:[#allocation5 + $0x270] sm:$0xff]
    %v206 = vld [vmem:[#allocation5 + $0x278] sm:$0xff]
    %v207 = vld [vmem:[#allocation5 + $0x280] sm:$0xf]
    %v208 = vld [vmem:[#allocation5 + $0x284] sm:$0xff]
    %v209 = vld [vmem:[#allocation5 + $0x28c] sm:$0xff]
    %v210 = vld [vmem:[#allocation5 + $0x294] sm:$0xff]
    %v211 = vld [vmem:[#allocation5 + $0x29c] sm:$0xf]
    %v212 = vld [vmem:[#allocation5 + $0x2a0] sm:$0xff]
    %v213 = vld [vmem:[#allocation5 + $0x2a8] sm:$0xff]
    %v214 = vld [vmem:[#allocation5 + $0x2b0] sm:$0xff]
    %v215 = vld [vmem:[#allocation5 + $0x2b8] sm:$0xf]
    %v216 = vld [vmem:[#allocation5 + $0x2bc] sm:$0xff]
    %v217 = vld [vmem:[#allocation5 + $0x2c4] sm:$0xff]
    %v218 = vld [vmem:[#allocation5 + $0x2cc] sm:$0xff]
    %v219 = vld [vmem:[#allocation5 + $0x2d4] sm:$0xf]
    %v220 = vld [vmem:[#allocation5 + $0x2d8] sm:$0xff]
    %v221 = vld [vmem:[#allocation5 + $0x2e0] sm:$0xff]
    %v222 = vld [vmem:[#allocation5 + $0x2e8] sm:$0xff]
    %v223 = vld [vmem:[#allocation5 + $0x2f0] sm:$0xf]
    %v224 = vld [vmem:[#allocation5 + $0x2f4] sm:$0xff]
    %v225 = vld [vmem:[#allocation5 + $0x2fc] sm:$0xff]
    %v226 = vld [vmem:[#allocation5 + $0x304] sm:$0xff]
    %v227 = vld [vmem:[#allocation5 + $0x30c] sm:$0xf]
    %v228 = vld [vmem:[#allocation5 + $0x310] sm:$0xff]
    %v229 = vld [vmem:[#allocation5 + $0x318] sm:$0xff]
    %v230 = vld [vmem:[#allocation5 + $0x320] sm:$0xff]
    %v231 = vld [vmem:[#allocation5 + $0x328] sm:$0xf]
    %v232 = vld [vmem:[#allocation5 + $0x32c] sm:$0xff]
    %v233 = vld [vmem:[#allocation5 + $0x334] sm:$0xff]
    %v234 = vld [vmem:[#allocation5 + $0x33c] sm:$0xff]
    %v235 = vld [vmem:[#allocation5 + $0x344] sm:$0xf]
    %v236 = vld [vmem:[#allocation5 + $0x348] sm:$0xff]
    %v237 = vld [vmem:[#allocation5 + $0x350] sm:$0xff]
    %v238 = vld [vmem:[#allocation5 + $0x358] sm:$0xff]
    %v239 = vld [vmem:[#allocation5 + $0x360] sm:$0xf]
    %v240 = vld [vmem:[#allocation5 + $0x364] sm:$0xff]
    %v241 = vld [vmem:[#allocation5 + $0x36c] sm:$0xff]
    %v242 = vld [vmem:[#allocation5 + $0x374] sm:$0xff]
    %v243 = vld [vmem:[#allocation5 + $0x37c] sm:$0xf]
    %v244 = vld [vmem:[#allocation5 + $0x380] sm:$0xff]
    %v245 = vld [vmem:[#allocation5 + $0x388] sm:$0xff]
    %v246 = vld [vmem:[#allocation5 + $0x390] sm:$0xff]
    %v247 = vld [vmem:[#allocation5 + $0x398] sm:$0xf]
    %v248 = vld [vmem:[#allocation5 + $0x39c] sm:$0xff]
    %v249 = vld [vmem:[#allocation5 + $0x3a4] sm:$0xff]
    %v250 = vld [vmem:[#allocation5 + $0x3ac] sm:$0xff]
    %v251 = vld [vmem:[#allocation5 + $0x3b4] sm:$0xf]
    %v252 = vld [vmem:[#allocation5 + $0x3b8] sm:$0xff]
    %v253 = vld [vmem:[#allocation5 + $0x3c0] sm:$0xff]
    %v254 = vld [vmem:[#allocation5 + $0x3c8] sm:$0xff]
    %v255 = vld [vmem:[#allocation5 + $0x3d0] sm:$0xf]
    %v256 = vld [vmem:[#allocation5 + $0x3d4] sm:$0xff]
    %v257 = vld [vmem:[#allocation5 + $0x3dc] sm:$0xff]
    %v258 = vld [vmem:[#allocation5 + $0x3e4] sm:$0xff]
    %v259 = vld [vmem:[#allocation5 + $0x3ec] sm:$0xf]
    %v260 = vld [vmem:[#allocation5 + $0x3f0] sm:$0xff]
    %v261 = vld [vmem:[#allocation5 + $0x3f8] sm:$0xff]
    %v262 = vld [vmem:[#allocation5 + $0x400] sm:$0xff]
    %v263 = vld [vmem:[#allocation5 + $0x408] sm:$0xf]
    %v264 = vld [vmem:[#allocation5 + $0x40c] sm:$0xff]
    %v265 = vld [vmem:[#allocation5 + $0x414] sm:$0xff]
    %v266 = vld [vmem:[#allocation5 + $0x41c] sm:$0xff]
    %v267 = vld [vmem:[#allocation5 + $0x424] sm:$0xf]
    %v268 = vld [vmem:[#allocation5 + $0x428] sm:$0xff]
    %v269 = vld [vmem:[#allocation5 + $0x430] sm:$0xff]
    %v270 = vld [vmem:[#allocation5 + $0x438] sm:$0xff]
    %v271 = vld [vmem:[#allocation5 + $0x440] sm:$0xf]
    %v272 = vld [vmem:[#allocation5 + $0x444] sm:$0xff]
    %v273 = vld [vmem:[#allocation5 + $0x44c] sm:$0xff]
    %v274 = vld [vmem:[#allocation5 + $0x454] sm:$0xff]
    %v275 = vld [vmem:[#allocation5 + $0x45c] sm:$0xf]
    %v276 = vld [vmem:[#allocation5 + $0x460] sm:$0xff]
    %v277 = vld [vmem:[#allocation5 + $0x468] sm:$0xff]
    %v278 = vld [vmem:[#allocation5 + $0x470] sm:$0xff]
    %v279 = vld [vmem:[#allocation5 + $0x478] sm:$0xf]
    %v280 = vld [vmem:[#allocation5 + $0x47c] sm:$0xff]
    %v281 = vld [vmem:[#allocation5 + $0x484] sm:$0xff]
    %v282 = vld [vmem:[#allocation5 + $0x48c] sm:$0xff]
    %v283 = vld [vmem:[#allocation5 + $0x494] sm:$0xf]
    %v284 = vld [vmem:[#allocation5 + $0x498] sm:$0xff]
    %v285 = vld [vmem:[#allocation5 + $0x4a0] sm:$0xff]
    %v286 = vld [vmem:[#allocation5 + $0x4a8] sm:$0xff]
    %v287 = vld [vmem:[#allocation5 + $0x4b0] sm:$0xf]
    %v288 = vld [vmem:[#allocation5 + $0x4b4] sm:$0xff]
    %v289 = vld [vmem:[#allocation5 + $0x4bc] sm:$0xff]
    %v290 = vld [vmem:[#allocation5 + $0x4c4] sm:$0xff]
    %v291 = vld [vmem:[#allocation5 + $0x4cc] sm:$0xf]
    %v292 = vld [vmem:[#allocation5 + $0x4d0] sm:$0xff]
    %v293 = vld [vmem:[#allocation5 + $0x4d8] sm:$0xff]
    %v294 = vld [vmem:[#allocation5 + $0x4e0] sm:$0xff]
    %v295 = vld [vmem:[#allocation5 + $0x4e8] sm:$0xf]
    %v296 = vld [vmem:[#allocation5 + $0x4ec] sm:$0xff]
    %v297 = vld [vmem:[#allocation5 + $0x4f4] sm:$0xff]
    %v298 = vld [vmem:[#allocation5 + $0x4fc] sm:$0xff]
    %v299 = vld [vmem:[#allocation5 + $0x504] sm:$0xf]
    %v300 = vld [vmem:[#allocation5 + $0x508] sm:$0xff]
    %v301 = vld [vmem:[#allocation5 + $0x510] sm:$0xff]
    %v302 = vld [vmem:[#allocation5 + $0x518] sm:$0xff]
    %v303 = vld [vmem:[#allocation5 + $0x520] sm:$0xf]
    %v304 = vld [vmem:[#allocation5 + $0x524] sm:$0xff]
    %v305 = vld [vmem:[#allocation5 + $0x52c] sm:$0xff]
    %v306 = vld [vmem:[#allocation5 + $0x534] sm:$0xff]
    %v307 = vld [vmem:[#allocation5 + $0x53c] sm:$0xf]
    %v308 = vld [vmem:[#allocation5 + $0x540] sm:$0xff]
    %v309 = vld [vmem:[#allocation5 + $0x548] sm:$0xff]
    %v310 = vld [vmem:[#allocation5 + $0x550] sm:$0xff]
    %v311 = vld [vmem:[#allocation5 + $0x558] sm:$0xf]
    %v312 = vld [vmem:[#allocation5 + $0x55c] sm:$0xff]
    %v313 = vld [vmem:[#allocation5 + $0x564] sm:$0xff]
    %v314 = vld [vmem:[#allocation5 + $0x56c] sm:$0xff]
    %v315 = vld [vmem:[#allocation5 + $0x574] sm:$0xf]
    %v316 = vld [vmem:[#allocation5 + $0x578] sm:$0xff]
    %v317 = vld [vmem:[#allocation5 + $0x580] sm:$0xff]
    %v318 = vld [vmem:[#allocation5 + $0x588] sm:$0xff]
    %v319 = vld [vmem:[#allocation5 + $0x590] sm:$0xf]
    %v320 = vld [vmem:[#allocation5 + $0x594] sm:$0xff]
    %v321 = vld [vmem:[#allocation5 + $0x59c] sm:$0xff]
    %v322 = vld [vmem:[#allocation5 + $0x5a4] sm:$0xff]
    %v323 = vld [vmem:[#allocation5 + $0x5ac] sm:$0xf]
    %v324 = vld [vmem:[#allocation5 + $0x5b0] sm:$0xff]
    %v325 = vld [vmem:[#allocation5 + $0x5b8] sm:$0xff]
    %v326 = vld [vmem:[#allocation5 + $0x5c0] sm:$0xff]
    %v327 = vld [vmem:[#allocation5 + $0x5c8] sm:$0xf]
    %v328 = vld [vmem:[#allocation5 + $0x5cc] sm:$0xff]
    %v329 = vld [vmem:[#allocation5 + $0x5d4] sm:$0xff]
    %v330 = vld [vmem:[#allocation5 + $0x5dc] sm:$0xff]
    %v331 = vld [vmem:[#allocation5 + $0x5e4] sm:$0xf]
    %v332 = vld [vmem:[#allocation5 + $0x5e8] sm:$0xff]
    %v333 = vld [vmem:[#allocation5 + $0x5f0] sm:$0xff]
    %v334 = vld [vmem:[#allocation5 + $0x5f8] sm:$0xff]
    %v335 = vld [vmem:[#allocation5 + $0x600] sm:$0xf]
    %v336 = vld [vmem:[#allocation5 + $0x604] sm:$0xff]
    %v337 = vld [vmem:[#allocation5 + $0x60c] sm:$0xff]
    %v338 = vld [vmem:[#allocation5 + $0x614] sm:$0xff]
    %v339 = vld [vmem:[#allocation5 + $0x61c] sm:$0xf]
    %v340 = vld [vmem:[#allocation5 + $0x620] sm:$0xff]
    %v341 = vld [vmem:[#allocation5 + $0x628] sm:$0xff]
    %v342 = vld [vmem:[#allocation5 + $0x630] sm:$0xff]
    %v343 = vld [vmem:[#allocation5 + $0x638] sm:$0xf]
    %v344 = vld [vmem:[#allocation5 + $0x63c] sm:$0xff]
    %v345 = vld [vmem:[#allocation5 + $0x644] sm:$0xff]
    %v346 = vld [vmem:[#allocation5 + $0x64c] sm:$0xff]
    %v347 = vld [vmem:[#allocation5 + $0x654] sm:$0xf]
    %v348 = vld [vmem:[#allocation5 + $0x658] sm:$0xff]
    %v349 = vld [vmem:[#allocation5 + $0x660] sm:$0xff]
    %v350 = vld [vmem:[#allocation5 + $0x668] sm:$0xff]
    %v351 = vld [vmem:[#allocation5 + $0x670] sm:$0xf]
    %v352 = vld [vmem:[#allocation5 + $0x674] sm:$0xff]
    %v353 = vld [vmem:[#allocation5 + $0x67c] sm:$0xff]
    %v354 = vld [vmem:[#allocation5 + $0x684] sm:$0xff]
    %v355 = vld [vmem:[#allocation5 + $0x68c] sm:$0xf]
    %v356 = vld [vmem:[#allocation5 + $0x690] sm:$0xff]
    %v357 = vld [vmem:[#allocation5 + $0x698] sm:$0xff]
    %v358 = vld [vmem:[#allocation5 + $0x6a0] sm:$0xff]
    %v359 = vld [vmem:[#allocation5 + $0x6a8] sm:$0xf]
    %v360 = vld [vmem:[#allocation5 + $0x6ac] sm:$0xff]
    %v361 = vld [vmem:[#allocation5 + $0x6b4] sm:$0xff]
    %v362 = vld [vmem:[#allocation5 + $0x6bc] sm:$0xff]
    %v363 = vld [vmem:[#allocation5 + $0x6c4] sm:$0xf]
    %v364 = vld [vmem:[#allocation5 + $0x6c8] sm:$0xff]
    %v365 = vld [vmem:[#allocation5 + $0x6d0] sm:$0xff]
    %v366 = vld [vmem:[#allocation5 + $0x6d8] sm:$0xff]
    %v367 = vld [vmem:[#allocation5 + $0x6e0] sm:$0xf]
    %v368 = vld [vmem:[#allocation5 + $0x6e4] sm:$0xff]
    %v369 = vld [vmem:[#allocation5 + $0x6ec] sm:$0xff]
    %v370 = vld [vmem:[#allocation5 + $0x6f4] sm:$0xff]
    %v371 = vld [vmem:[#allocation5 + $0x6fc] sm:$0xf]
    %v372 = vld [vmem:[#allocation5 + $0x700] sm:$0xff]
    %v373 = vld [vmem:[#allocation5 + $0x708] sm:$0xff]
    %v374 = vld [vmem:[#allocation5 + $0x710] sm:$0xff]
    %v375 = vld [vmem:[#allocation5 + $0x718] sm:$0xf]
    %v376 = vld [vmem:[#allocation5 + $0x71c] sm:$0xff]
    %v377 = vld [vmem:[#allocation5 + $0x724] sm:$0xff]
    %v378 = vld [vmem:[#allocation5 + $0x72c] sm:$0xff]
    %v379 = vld [vmem:[#allocation5 + $0x734] sm:$0xf]
    %v380 = vld [vmem:[#allocation5 + $0x738] sm:$0xff]
    %v381 = vld [vmem:[#allocation5 + $0x740] sm:$0xff]
    %v382 = vld [vmem:[#allocation5 + $0x748] sm:$0xff]
    %v383 = vld [vmem:[#allocation5 + $0x750] sm:$0xf]
    %v384 = vld [vmem:[#allocation5 + $0x754] sm:$0xff]
    %v385 = vld [vmem:[#allocation5 + $0x75c] sm:$0xff]
    %v386 = vld [vmem:[#allocation5 + $0x764] sm:$0xff]
    %v387 = vld [vmem:[#allocation5 + $0x76c] sm:$0xf]
    %v388 = vld [vmem:[#allocation5 + $0x770] sm:$0xff]
    %v389 = vld [vmem:[#allocation5 + $0x778] sm:$0xff]
    %v390 = vld [vmem:[#allocation5 + $0x780] sm:$0xff]
    %v391 = vld [vmem:[#allocation5 + $0x788] sm:$0xf]
    %v392 = vld [vmem:[#allocation5 + $0x78c] sm:$0xff]
    %v393 = vld [vmem:[#allocation5 + $0x794] sm:$0xff]
    %v394 = vld [vmem:[#allocation5 + $0x79c] sm:$0xff]
    %v395 = vld [vmem:[#allocation5 + $0x7a4] sm:$0xf]
    %v396 = vld [vmem:[#allocation5 + $0x7a8] sm:$0xff]
    %v397 = vld [vmem:[#allocation5 + $0x7b0] sm:$0xff]
    %v398 = vld [vmem:[#allocation5 + $0x7b8] sm:$0xff]
    %v399 = vld [vmem:[#allocation5 + $0x7c0] sm:$0xf]
    %v400 = vld [vmem:[#allocation5 + $0x7c4] sm:$0xff]
    %v401 = vld [vmem:[#allocation5 + $0x7cc] sm:$0xff]
    %v402 = vld [vmem:[#allocation5 + $0x7d4] sm:$0xff]
    %v403 = vld [vmem:[#allocation5 + $0x7dc] sm:$0xf]
    %v404 = vld [vmem:[#allocation5 + $0x7e0] sm:$0xff]
    %v405 = vld [vmem:[#allocation5 + $0x7e8] sm:$0xff]
    %v406 = vld [vmem:[#allocation5 + $0x7f0] sm:$0xff]
    %v407 = vld [vmem:[#allocation5 + $0x7f8] sm:$0xf]
    %v408 = vld [vmem:[#allocation5 + $0x7fc] sm:$0xff]
    %v409 = vld [vmem:[#allocation5 + $0x804] sm:$0xff]
    %v410 = vld [vmem:[#allocation5 + $0x80c] sm:$0xff]
    %v411 = vld [vmem:[#allocation5 + $0x814] sm:$0xf]
    %v412 = vld [vmem:[#allocation5 + $0x818] sm:$0xff]
    %v413 = vld [vmem:[#allocation5 + $0x820] sm:$0xff]
    %v414 = vld [vmem:[#allocation5 + $0x828] sm:$0xff]
    %v415 = vld [vmem:[#allocation5 + $0x830] sm:$0xf]
    %v416 = vld [vmem:[#allocation5 + $0x834] sm:$0xff]
    %v417 = vld [vmem:[#allocation5 + $0x83c] sm:$0xff]
    %v418 = vld [vmem:[#allocation5 + $0x844] sm:$0xff]
    %v419 = vld [vmem:[#allocation5 + $0x84c] sm:$0xf]
    %v420 = vld [vmem:[#allocation5 + $0x850] sm:$0xff]
    %v421 = vld [vmem:[#allocation5 + $0x858] sm:$0xff]
    %v422 = vld [vmem:[#allocation5 + $0x860] sm:$0xff]
    %v423 = vld [vmem:[#allocation5 + $0x868] sm:$0xf]
    %v424 = vld [vmem:[#allocation5 + $0x86c] sm:$0xff]
    %v425 = vld [vmem:[#allocation5 + $0x874] sm:$0xff]
    %v426 = vld [vmem:[#allocation5 + $0x87c] sm:$0xff]
    %v427 = vld [vmem:[#allocation5 + $0x884] sm:$0xf]
    %v428 = vld [vmem:[#allocation5 + $0x888] sm:$0xff]
    %v429 = vld [vmem:[#allocation5 + $0x890] sm:$0xff]
    %v430 = vld [vmem:[#allocation5 + $0x898] sm:$0xff]
    %v431 = vld [vmem:[#allocation5 + $0x8a0] sm:$0xf]
    %v432 = vld [vmem:[#allocation5 + $0x8a4] sm:$0xff]
    %v433 = vld [vmem:[#allocation5 + $0x8ac] sm:$0xff]
    %v434 = vld [vmem:[#allocation5 + $0x8b4] sm:$0xff]
    %v435 = vld [vmem:[#allocation5 + $0x8bc] sm:$0xf]
    %v436 = vld [vmem:[#allocation5 + $0x8c0] sm:$0xff]
    %v437 = vld [vmem:[#allocation5 + $0x8c8] sm:$0xff]
    %v438 = vld [vmem:[#allocation5 + $0x8d0] sm:$0xff]
    %v439 = vld [vmem:[#allocation5 + $0x8d8] sm:$0xf]
    %v440 = vld [vmem:[#allocation5 + $0x8dc] sm:$0xff]
    %v441 = vld [vmem:[#allocation5 + $0x8e4] sm:$0xff]
    %v442 = vld [vmem:[#allocation5 + $0x8ec] sm:$0xff]
    %v443 = vld [vmem:[#allocation5 + $0x8f4] sm:$0xf]
    %v444 = vld [vmem:[#allocation5 + $0x8f8] sm:$0xff]
    %v445 = vld [vmem:[#allocation5 + $0x900] sm:$0xff]
    %v446 = vld [vmem:[#allocation5 + $0x908] sm:$0xff]
    %v447 = vld [vmem:[#allocation5 + $0x910] sm:$0xf]
    %v448 = vld [vmem:[#allocation5 + $0x914] sm:$0xff]
    %v449 = vld [vmem:[#allocation5 + $0x91c] sm:$0xff]
    %v450 = vld [vmem:[#allocation5 + $0x924] sm:$0xff]
    %v451 = vld [vmem:[#allocation5 + $0x92c] sm:$0xf]
    %v452 = vld [vmem:[#allocation5 + $0x930] sm:$0xff]
    %v453 = vld [vmem:[#allocation5 + $0x938] sm:$0xff]
    %v454 = vld [vmem:[#allocation5 + $0x940] sm:$0xff]
    %v455 = vld [vmem:[#allocation5 + $0x948] sm:$0xf]
    %v456 = vld [vmem:[#allocation5 + $0x94c] sm:$0xff]
    %v457 = vld [vmem:[#allocation5 + $0x954] sm:$0xff]
    %v458 = vld [vmem:[#allocation5 + $0x95c] sm:$0xff]
    %v459 = vld [vmem:[#allocation5 + $0x964] sm:$0xf]
    %v460 = vld [vmem:[#allocation5 + $0x968] sm:$0xff]
    %v461 = vld [vmem:[#allocation5 + $0x970] sm:$0xff]
    %v462 = vld [vmem:[#allocation5 + $0x978] sm:$0xff]
    %v463 = vld [vmem:[#allocation5 + $0x980] sm:$0xf]
    %v464 = vld [vmem:[#allocation5 + $0x984] sm:$0xff]
    %v465 = vld [vmem:[#allocation5 + $0x98c] sm:$0xff]
    %v466 = vld [vmem:[#allocation5 + $0x994] sm:$0xff]
    %v467 = vld [vmem:[#allocation5 + $0x99c] sm:$0xf]
    %v468 = vld [vmem:[#allocation5 + $0x9a0] sm:$0xff]
    %v469 = vld [vmem:[#allocation5 + $0x9a8] sm:$0xff]
    %v470 = vld [vmem:[#allocation5 + $0x9b0] sm:$0xff]
    %v471 = vld [vmem:[#allocation5 + $0x9b8] sm:$0xf]
    %v472 = vld [vmem:[#allocation5 + $0x9bc] sm:$0xff]
    %v473 = vld [vmem:[#allocation5 + $0x9c4] sm:$0xff]
    %v474 = vld [vmem:[#allocation5 + $0x9cc] sm:$0xff]
    %v475 = vld [vmem:[#allocation5 + $0x9d4] sm:$0xf]
    %v476 = vld [vmem:[#allocation5 + $0x9d8] sm:$0xff]
    %v477 = vld [vmem:[#allocation5 + $0x9e0] sm:$0xff]
    %v478 = vld [vmem:[#allocation5 + $0x9e8] sm:$0xff]
    %v479 = vld [vmem:[#allocation5 + $0x9f0] sm:$0xf]
    %v480 = vld [vmem:[#allocation5 + $0x9f4] sm:$0xff]
    %v481 = vld [vmem:[#allocation5 + $0x9fc] sm:$0xff]
    %v482 = vld [vmem:[#allocation5 + $0xa04] sm:$0xff]
    %v483 = vld [vmem:[#allocation5 + $0xa0c] sm:$0xf]
    %v484 = vld [vmem:[#allocation5 + $0xa10] sm:$0xff]
    %v485 = vld [vmem:[#allocation5 + $0xa18] sm:$0xff]
    %v486 = vld [vmem:[#allocation5 + $0xa20] sm:$0xff]
    %v487 = vld [vmem:[#allocation5 + $0xa28] sm:$0xf]
    %v488 = vld [vmem:[#allocation5 + $0xa2c] sm:$0xff]
    %v489 = vld [vmem:[#allocation5 + $0xa34] sm:$0xff]
    %v490 = vld [vmem:[#allocation5 + $0xa3c] sm:$0xff]
    %v491 = vld [vmem:[#allocation5 + $0xa44] sm:$0xf]
    %v492 = vld [vmem:[#allocation5 + $0xa48] sm:$0xff]
    %v493 = vld [vmem:[#allocation5 + $0xa50] sm:$0xff]
    %v494 = vld [vmem:[#allocation5 + $0xa58] sm:$0xff]
    %v495 = vld [vmem:[#allocation5 + $0xa60] sm:$0xf]
    %v496 = vld [vmem:[#allocation5 + $0xa64] sm:$0xff]
    %v497 = vld [vmem:[#allocation5 + $0xa6c] sm:$0xff]
    %v498 = vld [vmem:[#allocation5 + $0xa74] sm:$0xff]
    %v499 = vld [vmem:[#allocation5 + $0xa7c] sm:$0xf]
    %v500 = vld [vmem:[#allocation5 + $0xa80] sm:$0xff]
    %v501 = vld [vmem:[#allocation5 + $0xa88] sm:$0xff]
    %v502 = vld [vmem:[#allocation5 + $0xa90] sm:$0xff]
    %v503 = vld [vmem:[#allocation5 + $0xa98] sm:$0xf]
    %v504 = vld [vmem:[#allocation5 + $0xa9c] sm:$0xff]
    %v505 = vld [vmem:[#allocation5 + $0xaa4] sm:$0xff]
    %v506 = vld [vmem:[#allocation5 + $0xaac] sm:$0xff]
    %v507 = vld [vmem:[#allocation5 + $0xab4] sm:$0xf]
    %v508 = vld [vmem:[#allocation7] sm:$0x7f]
    %v510 = vlaneseq
    %v511 = vshrl.u32 %v510, 7
    %v512 = vsub.s32 0, %v511
    %v513 = vrot.slane %v508, %v512
    %v514 = vlaneseq
    %v515 = vshrl.u32 %v514, 7
    %v516 = vsub.s32 1, %v515
    %v517 = vrot.slane %v508, %v516
    %v518 = vlaneseq
    %v519 = vshrl.u32 %v518, 7
    %v520 = vsub.s32 2, %v519
    %v521 = vrot.slane %v508, %v520
    %v522 = vlaneseq
    %v523 = vshrl.u32 %v522, 7
    %v524 = vsub.s32 3, %v523
    %v525 = vrot.slane %v508, %v524
    %v526 = vlaneseq
    %v527 = vshrl.u32 %v526, 7
    %v528 = vsub.s32 4, %v527
    %v529 = vrot.slane %v508, %v528
    %v530 = vlaneseq
    %v531 = vshrl.u32 %v530, 7
    %v532 = vsub.s32 5, %v531
    %v533 = vrot.slane %v508, %v532
    %v534 = vlaneseq
    %v535 = vshrl.u32 %v534, 7
    %v536 = vsub.s32 6, %v535
    %v537 = vrot.slane %v508, %v536
    %v546 = vcombine.high %v115, %v115
    %v548 = vunpack.c.l.s4 1966171168
    %v549 = vunpack.c.0.s8 %v548
    %v550 = vlaneseq
    %v551 = vshrl.u32 %v550, 7
    %v552 = vsub.s32 %v549, %v551
    %v553 = vrot.slane %v115, %v552
    %v555 = vunpack.c.l.s4 1966171168
    %v556 = vunpack.c.0.s8 %v555
    %v557 = vlaneseq
    %v558 = vshrl.u32 %v557, 7
    %v559 = vsub.s32 %v556, %v558
    %v560 = vrot.slane %v546, %v559
    %v561 = vcombine.high %v553, %v553
    %v562 = vcombine.high %v560, %v560
    %v564 = vunpack.c.l.s4 1966171168
    %v565 = vunpack.c.0.s8 %v564
    %v566 = vlaneseq
    %v567 = vshrl.u32 %v566, 7
    %v568 = vsub.s32 %v565, %v567
    %v569 = vrot.slane %v553, %v568
    %v571 = vunpack.c.l.s4 1966171168
    %v572 = vunpack.c.0.s8 %v571
    %v573 = vlaneseq
    %v574 = vshrl.u32 %v573, 7
    %v575 = vsub.s32 %v572, %v574
    %v576 = vrot.slane %v560, %v575
    %v578 = vunpack.c.l.s4 1966171168
    %v579 = vunpack.c.0.s8 %v578
    %v580 = vlaneseq
    %v581 = vshrl.u32 %v580, 7
    %v582 = vsub.s32 %v579, %v581
    %v583 = vrot.slane %v561, %v582
    %v585 = vunpack.c.l.s4 1966171168
    %v586 = vunpack.c.0.s8 %v585
    %v587 = vlaneseq
    %v588 = vshrl.u32 %v587, 7
    %v589 = vsub.s32 %v586, %v588
    %v590 = vrot.slane %v562, %v589
    %v591 = vcombine.high %v569, %v569
    %v592 = vcombine.high %v576, %v576
    %v593 = vcombine.high %v583, %v583
    %v992 = vunpack.c.l.b16 %v116
    %v993 = vunpack.c.h.b16 %v116
    %v994 = vunpack.c.l.b16 %v117
    %v995 = vunpack.c.h.b16 %v117
    %v996 = vunpack.c.l.b16 %v118
    %v997 = vunpack.c.h.b16 %v118
    %v998 = vunpack.c.l.b16 %v119
    %v999 = vunpack.c.l.b16 %v120
    %v1000 = vunpack.c.h.b16 %v120
    %v1001 = vunpack.c.l.b16 %v121
    %v1002 = vunpack.c.h.b16 %v121
    %v1003 = vunpack.c.l.b16 %v122
    %v1004 = vunpack.c.h.b16 %v122
    %v1005 = vunpack.c.l.b16 %v123
    %v1006 = vunpack.c.l.b16 %v124
    %v1007 = vunpack.c.h.b16 %v124
    %v1008 = vunpack.c.l.b16 %v125
    %v1009 = vunpack.c.h.b16 %v125
    %v1010 = vunpack.c.l.b16 %v126
    %v1011 = vunpack.c.h.b16 %v126
    %v1012 = vunpack.c.l.b16 %v127
    %v1013 = vunpack.c.l.b16 %v128
    %v1014 = vunpack.c.h.b16 %v128
    %v1015 = vunpack.c.l.b16 %v129
    %v1016 = vunpack.c.h.b16 %v129
    %v1017 = vunpack.c.l.b16 %v130
    %v1018 = vunpack.c.h.b16 %v130
    %v1019 = vunpack.c.l.b16 %v131
    %v1020 = vunpack.c.l.b16 %v132
    %v1021 = vunpack.c.h.b16 %v132
    %v1022 = vunpack.c.l.b16 %v133
    %v1023 = vunpack.c.h.b16 %v133
    %v1024 = vunpack.c.l.b16 %v134
    %v1025 = vunpack.c.h.b16 %v134
    %v1026 = vunpack.c.l.b16 %v135
    %v1027 = vunpack.c.l.b16 %v136
    %v1028 = vunpack.c.h.b16 %v136
    %v1029 = vunpack.c.l.b16 %v137
    %v1030 = vunpack.c.h.b16 %v137
    %v1031 = vunpack.c.l.b16 %v138
    %v1032 = vunpack.c.h.b16 %v138
    %v1033 = vunpack.c.l.b16 %v139
    %v1034 = vunpack.c.l.b16 %v140
    %v1035 = vunpack.c.h.b16 %v140
    %v1036 = vunpack.c.l.b16 %v141
    %v1037 = vunpack.c.h.b16 %v141
    %v1038 = vunpack.c.l.b16 %v142
    %v1039 = vunpack.c.h.b16 %v142
    %v1040 = vunpack.c.l.b16 %v143
    %v1041 = vunpack.c.l.b16 %v144
    %v1042 = vunpack.c.h.b16 %v144
    %v1043 = vunpack.c.l.b16 %v145
    %v1044 = vunpack.c.h.b16 %v145
    %v1045 = vunpack.c.l.b16 %v146
    %v1046 = vunpack.c.h.b16 %v146
    %v1047 = vunpack.c.l.b16 %v147
    %v1048 = vunpack.c.l.b16 %v148
    %v1049 = vunpack.c.h.b16 %v148
    %v1050 = vunpack.c.l.b16 %v149
    %v1051 = vunpack.c.h.b16 %v149
    %v1052 = vunpack.c.l.b16 %v150
    %v1053 = vunpack.c.h.b16 %v150
    %v1054 = vunpack.c.l.b16 %v151
    %v1055 = vunpack.c.l.b16 %v152
    %v1056 = vunpack.c.h.b16 %v152
    %v1057 = vunpack.c.l.b16 %v153
    %v1058 = vunpack.c.h.b16 %v153
    %v1059 = vunpack.c.l.b16 %v154
    %v1060 = vunpack.c.h.b16 %v154
    %v1061 = vunpack.c.l.b16 %v155
    %v1062 = vunpack.c.l.b16 %v156
    %v1063 = vunpack.c.h.b16 %v156
    %v1064 = vunpack.c.l.b16 %v157
    %v1065 = vunpack.c.h.b16 %v157
    %v1066 = vunpack.c.l.b16 %v158
    %v1067 = vunpack.c.h.b16 %v158
    %v1068 = vunpack.c.l.b16 %v159
    %v1069 = vunpack.c.l.b16 %v160
    %v1070 = vunpack.c.h.b16 %v160
    %v1071 = vunpack.c.l.b16 %v161
    %v1072 = vunpack.c.h.b16 %v161
    %v1073 = vunpack.c.l.b16 %v162
    %v1074 = vunpack.c.h.b16 %v162
    %v1075 = vunpack.c.l.b16 %v163
    %v1076 = vunpack.c.l.b16 %v164
    %v1077 = vunpack.c.h.b16 %v164
    %v1078 = vunpack.c.l.b16 %v165
    %v1079 = vunpack.c.h.b16 %v165
    %v1080 = vunpack.c.l.b16 %v166
    %v1081 = vunpack.c.h.b16 %v166
    %v1082 = vunpack.c.l.b16 %v167
    %v1083 = vunpack.c.l.b16 %v168
    %v1084 = vunpack.c.h.b16 %v168
    %v1085 = vunpack.c.l.b16 %v169
    %v1086 = vunpack.c.h.b16 %v169
    %v1087 = vunpack.c.l.b16 %v170
    %v1088 = vunpack.c.h.b16 %v170
    %v1089 = vunpack.c.l.b16 %v171
    %v1090 = vunpack.c.l.b16 %v172
    %v1091 = vunpack.c.h.b16 %v172
    %v1092 = vunpack.c.l.b16 %v173
    %v1093 = vunpack.c.h.b16 %v173
    %v1094 = vunpack.c.l.b16 %v174
    %v1095 = vunpack.c.h.b16 %v174
    %v1096 = vunpack.c.l.b16 %v175
    %v1097 = vunpack.c.l.b16 %v176
    %v1098 = vunpack.c.h.b16 %v176
    %v1099 = vunpack.c.l.b16 %v177
    %v1100 = vunpack.c.h.b16 %v177
    %v1101 = vunpack.c.l.b16 %v178
    %v1102 = vunpack.c.h.b16 %v178
    %v1103 = vunpack.c.l.b16 %v179
    %v1104 = vunpack.c.l.b16 %v180
    %v1105 = vunpack.c.h.b16 %v180
    %v1106 = vunpack.c.l.b16 %v181
    %v1107 = vunpack.c.h.b16 %v181
    %v1108 = vunpack.c.l.b16 %v182
    %v1109 = vunpack.c.h.b16 %v182
    %v1110 = vunpack.c.l.b16 %v183
    %v1111 = vunpack.c.l.b16 %v184
    %v1112 = vunpack.c.h.b16 %v184
    %v1113 = vunpack.c.l.b16 %v185
    %v1114 = vunpack.c.h.b16 %v185
    %v1115 = vunpack.c.l.b16 %v186
    %v1116 = vunpack.c.h.b16 %v186
    %v1117 = vunpack.c.l.b16 %v187
    %v1118 = vunpack.c.l.b16 %v188
    %v1119 = vunpack.c.h.b16 %v188
    %v1120 = vunpack.c.l.b16 %v189
    %v1121 = vunpack.c.h.b16 %v189
    %v1122 = vunpack.c.l.b16 %v190
    %v1123 = vunpack.c.h.b16 %v190
    %v1124 = vunpack.c.l.b16 %v191
    %v1125 = vunpack.c.l.b16 %v192
    %v1126 = vunpack.c.h.b16 %v192
    %v1127 = vunpack.c.l.b16 %v193
    %v1128 = vunpack.c.h.b16 %v193
    %v1129 = vunpack.c.l.b16 %v194
    %v1130 = vunpack.c.h.b16 %v194
    %v1131 = vunpack.c.l.b16 %v195
    %v1132 = vunpack.c.l.b16 %v196
    %v1133 = vunpack.c.h.b16 %v196
    %v1134 = vunpack.c.l.b16 %v197
    %v1135 = vunpack.c.h.b16 %v197
    %v1136 = vunpack.c.l.b16 %v198
    %v1137 = vunpack.c.h.b16 %v198
    %v1138 = vunpack.c.l.b16 %v199
    %v1139 = vunpack.c.l.b16 %v200
    %v1140 = vunpack.c.h.b16 %v200
    %v1141 = vunpack.c.l.b16 %v201
    %v1142 = vunpack.c.h.b16 %v201
    %v1143 = vunpack.c.l.b16 %v202
    %v1144 = vunpack.c.h.b16 %v202
    %v1145 = vunpack.c.l.b16 %v203
    %v1146 = vunpack.c.l.b16 %v204
    %v1147 = vunpack.c.h.b16 %v204
    %v1148 = vunpack.c.l.b16 %v205
    %v1149 = vunpack.c.h.b16 %v205
    %v1150 = vunpack.c.l.b16 %v206
    %v1151 = vunpack.c.h.b16 %v206
    %v1152 = vunpack.c.l.b16 %v207
    %v1153 = vunpack.c.l.b16 %v208
    %v1154 = vunpack.c.h.b16 %v208
    %v1155 = vunpack.c.l.b16 %v209
    %v1156 = vunpack.c.h.b16 %v209
    %v1157 = vunpack.c.l.b16 %v210
    %v1158 = vunpack.c.h.b16 %v210
    %v1159 = vunpack.c.l.b16 %v211
    %v1160 = vunpack.c.l.b16 %v212
    %v1161 = vunpack.c.h.b16 %v212
    %v1162 = vunpack.c.l.b16 %v213
    %v1163 = vunpack.c.h.b16 %v213
    %v1164 = vunpack.c.l.b16 %v214
    %v1165 = vunpack.c.h.b16 %v214
    %v1166 = vunpack.c.l.b16 %v215
    %v1167 = vunpack.c.l.b16 %v216
    %v1168 = vunpack.c.h.b16 %v216
    %v1169 = vunpack.c.l.b16 %v217
    %v1170 = vunpack.c.h.b16 %v217
    %v1171 = vunpack.c.l.b16 %v218
    %v1172 = vunpack.c.h.b16 %v218
    %v1173 = vunpack.c.l.b16 %v219
    %v1174 = vunpack.c.l.b16 %v220
    %v1175 = vunpack.c.h.b16 %v220
    %v1176 = vunpack.c.l.b16 %v221
    %v1177 = vunpack.c.h.b16 %v221
    %v1178 = vunpack.c.l.b16 %v222
    %v1179 = vunpack.c.h.b16 %v222
    %v1180 = vunpack.c.l.b16 %v223
    %v1181 = vunpack.c.l.b16 %v224
    %v1182 = vunpack.c.h.b16 %v224
    %v1183 = vunpack.c.l.b16 %v225
    %v1184 = vunpack.c.h.b16 %v225
    %v1185 = vunpack.c.l.b16 %v226
    %v1186 = vunpack.c.h.b16 %v226
    %v1187 = vunpack.c.l.b16 %v227
    %v1188 = vunpack.c.l.b16 %v228
    %v1189 = vunpack.c.h.b16 %v228
    %v1190 = vunpack.c.l.b16 %v229
    %v1191 = vunpack.c.h.b16 %v229
    %v1192 = vunpack.c.l.b16 %v230
    %v1193 = vunpack.c.h.b16 %v230
    %v1194 = vunpack.c.l.b16 %v231
    %v1195 = vunpack.c.l.b16 %v232
    %v1196 = vunpack.c.h.b16 %v232
    %v1197 = vunpack.c.l.b16 %v233
    %v1198 = vunpack.c.h.b16 %v233
    %v1199 = vunpack.c.l.b16 %v234
    %v1200 = vunpack.c.h.b16 %v234
    %v1201 = vunpack.c.l.b16 %v235
    %v1202 = vunpack.c.l.b16 %v236
    %v1203 = vunpack.c.h.b16 %v236
    %v1204 = vunpack.c.l.b16 %v237
    %v1205 = vunpack.c.h.b16 %v237
    %v1206 = vunpack.c.l.b16 %v238
    %v1207 = vunpack.c.h.b16 %v238
    %v1208 = vunpack.c.l.b16 %v239
    %v1209 = vunpack.c.l.b16 %v240
    %v1210 = vunpack.c.h.b16 %v240
    %v1211 = vunpack.c.l.b16 %v241
    %v1212 = vunpack.c.h.b16 %v241
    %v1213 = vunpack.c.l.b16 %v242
    %v1214 = vunpack.c.h.b16 %v242
    %v1215 = vunpack.c.l.b16 %v243
    %v1216 = vunpack.c.l.b16 %v244
    %v1217 = vunpack.c.h.b16 %v244
    %v1218 = vunpack.c.l.b16 %v245
    %v1219 = vunpack.c.h.b16 %v245
    %v1220 = vunpack.c.l.b16 %v246
    %v1221 = vunpack.c.h.b16 %v246
    %v1222 = vunpack.c.l.b16 %v247
    %v1223 = vunpack.c.l.b16 %v248
    %v1224 = vunpack.c.h.b16 %v248
    %v1225 = vunpack.c.l.b16 %v249
    %v1226 = vunpack.c.h.b16 %v249
    %v1227 = vunpack.c.l.b16 %v250
    %v1228 = vunpack.c.h.b16 %v250
    %v1229 = vunpack.c.l.b16 %v251
    %v1230 = vunpack.c.l.b16 %v252
    %v1231 = vunpack.c.h.b16 %v252
    %v1232 = vunpack.c.l.b16 %v253
    %v1233 = vunpack.c.h.b16 %v253
    %v1234 = vunpack.c.l.b16 %v254
    %v1235 = vunpack.c.h.b16 %v254
    %v1236 = vunpack.c.l.b16 %v255
    %v1237 = vunpack.c.l.b16 %v256
    %v1238 = vunpack.c.h.b16 %v256
    %v1239 = vunpack.c.l.b16 %v257
    %v1240 = vunpack.c.h.b16 %v257
    %v1241 = vunpack.c.l.b16 %v258
    %v1242 = vunpack.c.h.b16 %v258
    %v1243 = vunpack.c.l.b16 %v259
    %v1244 = vunpack.c.l.b16 %v260
    %v1245 = vunpack.c.h.b16 %v260
    %v1246 = vunpack.c.l.b16 %v261
    %v1247 = vunpack.c.h.b16 %v261
    %v1248 = vunpack.c.l.b16 %v262
    %v1249 = vunpack.c.h.b16 %v262
    %v1250 = vunpack.c.l.b16 %v263
    %v1251 = vunpack.c.l.b16 %v264
    %v1252 = vunpack.c.h.b16 %v264
    %v1253 = vunpack.c.l.b16 %v265
    %v1254 = vunpack.c.h.b16 %v265
    %v1255 = vunpack.c.l.b16 %v266
    %v1256 = vunpack.c.h.b16 %v266
    %v1257 = vunpack.c.l.b16 %v267
    %v1258 = vunpack.c.l.b16 %v268
    %v1259 = vunpack.c.h.b16 %v268
    %v1260 = vunpack.c.l.b16 %v269
    %v1261 = vunpack.c.h.b16 %v269
    %v1262 = vunpack.c.l.b16 %v270
    %v1263 = vunpack.c.h.b16 %v270
    %v1264 = vunpack.c.l.b16 %v271
    %v1265 = vunpack.c.l.b16 %v272
    %v1266 = vunpack.c.h.b16 %v272
    %v1267 = vunpack.c.l.b16 %v273
    %v1268 = vunpack.c.h.b16 %v273
    %v1269 = vunpack.c.l.b16 %v274
    %v1270 = vunpack.c.h.b16 %v274
    %v1271 = vunpack.c.l.b16 %v275
    %v1272 = vunpack.c.l.b16 %v276
    %v1273 = vunpack.c.h.b16 %v276
    %v1274 = vunpack.c.l.b16 %v277
    %v1275 = vunpack.c.h.b16 %v277
    %v1276 = vunpack.c.l.b16 %v278
    %v1277 = vunpack.c.h.b16 %v278
    %v1278 = vunpack.c.l.b16 %v279
    %v1279 = vunpack.c.l.b16 %v280
    %v1280 = vunpack.c.h.b16 %v280
    %v1281 = vunpack.c.l.b16 %v281
    %v1282 = vunpack.c.h.b16 %v281
    %v1283 = vunpack.c.l.b16 %v282
    %v1284 = vunpack.c.h.b16 %v282
    %v1285 = vunpack.c.l.b16 %v283
    %v1286 = vunpack.c.l.b16 %v284
    %v1287 = vunpack.c.h.b16 %v284
    %v1288 = vunpack.c.l.b16 %v285
    %v1289 = vunpack.c.h.b16 %v285
    %v1290 = vunpack.c.l.b16 %v286
    %v1291 = vunpack.c.h.b16 %v286
    %v1292 = vunpack.c.l.b16 %v287
    %v1293 = vunpack.c.l.b16 %v288
    %v1294 = vunpack.c.h.b16 %v288
    %v1295 = vunpack.c.l.b16 %v289
    %v1296 = vunpack.c.h.b16 %v289
    %v1297 = vunpack.c.l.b16 %v290
    %v1298 = vunpack.c.h.b16 %v290
    %v1299 = vunpack.c.l.b16 %v291
    %v1300 = vunpack.c.l.b16 %v292
    %v1301 = vunpack.c.h.b16 %v292
    %v1302 = vunpack.c.l.b16 %v293
    %v1303 = vunpack.c.h.b16 %v293
    %v1304 = vunpack.c.l.b16 %v294
    %v1305 = vunpack.c.h.b16 %v294
    %v1306 = vunpack.c.l.b16 %v295
    %v1307 = vunpack.c.l.b16 %v296
    %v1308 = vunpack.c.h.b16 %v296
    %v1309 = vunpack.c.l.b16 %v297
    %v1310 = vunpack.c.h.b16 %v297
    %v1311 = vunpack.c.l.b16 %v298
    %v1312 = vunpack.c.h.b16 %v298
    %v1313 = vunpack.c.l.b16 %v299
    %v1314 = vunpack.c.l.b16 %v300
    %v1315 = vunpack.c.h.b16 %v300
    %v1316 = vunpack.c.l.b16 %v301
    %v1317 = vunpack.c.h.b16 %v301
    %v1318 = vunpack.c.l.b16 %v302
    %v1319 = vunpack.c.h.b16 %v302
    %v1320 = vunpack.c.l.b16 %v303
    %v1321 = vunpack.c.l.b16 %v304
    %v1322 = vunpack.c.h.b16 %v304
    %v1323 = vunpack.c.l.b16 %v305
    %v1324 = vunpack.c.h.b16 %v305
    %v1325 = vunpack.c.l.b16 %v306
    %v1326 = vunpack.c.h.b16 %v306
    %v1327 = vunpack.c.l.b16 %v307
    %v1328 = vunpack.c.l.b16 %v308
    %v1329 = vunpack.c.h.b16 %v308
    %v1330 = vunpack.c.l.b16 %v309
    %v1331 = vunpack.c.h.b16 %v309
    %v1332 = vunpack.c.l.b16 %v310
    %v1333 = vunpack.c.h.b16 %v310
    %v1334 = vunpack.c.l.b16 %v311
    %v1335 = vunpack.c.l.b16 %v312
    %v1336 = vunpack.c.h.b16 %v312
    %v1337 = vunpack.c.l.b16 %v313
    %v1338 = vunpack.c.h.b16 %v313
    %v1339 = vunpack.c.l.b16 %v314
    %v1340 = vunpack.c.h.b16 %v314
    %v1341 = vunpack.c.l.b16 %v315
    %v1342 = vunpack.c.l.b16 %v316
    %v1343 = vunpack.c.h.b16 %v316
    %v1344 = vunpack.c.l.b16 %v317
    %v1345 = vunpack.c.h.b16 %v317
    %v1346 = vunpack.c.l.b16 %v318
    %v1347 = vunpack.c.h.b16 %v318
    %v1348 = vunpack.c.l.b16 %v319
    %v1349 = vunpack.c.l.b16 %v320
    %v1350 = vunpack.c.h.b16 %v320
    %v1351 = vunpack.c.l.b16 %v321
    %v1352 = vunpack.c.h.b16 %v321
    %v1353 = vunpack.c.l.b16 %v322
    %v1354 = vunpack.c.h.b16 %v322
    %v1355 = vunpack.c.l.b16 %v323
    %v1356 = vunpack.c.l.b16 %v324
    %v1357 = vunpack.c.h.b16 %v324
    %v1358 = vunpack.c.l.b16 %v325
    %v1359 = vunpack.c.h.b16 %v325
    %v1360 = vunpack.c.l.b16 %v326
    %v1361 = vunpack.c.h.b16 %v326
    %v1362 = vunpack.c.l.b16 %v327
    %v1363 = vunpack.c.l.b16 %v328
    %v1364 = vunpack.c.h.b16 %v328
    %v1365 = vunpack.c.l.b16 %v329
    %v1366 = vunpack.c.h.b16 %v329
    %v1367 = vunpack.c.l.b16 %v330
    %v1368 = vunpack.c.h.b16 %v330
    %v1369 = vunpack.c.l.b16 %v331
    %v1370 = vunpack.c.l.b16 %v332
    %v1371 = vunpack.c.h.b16 %v332
    %v1372 = vunpack.c.l.b16 %v333
    %v1373 = vunpack.c.h.b16 %v333
    %v1374 = vunpack.c.l.b16 %v334
    %v1375 = vunpack.c.h.b16 %v334
    %v1376 = vunpack.c.l.b16 %v335
    %v1377 = vunpack.c.l.b16 %v336
    %v1378 = vunpack.c.h.b16 %v336
    %v1379 = vunpack.c.l.b16 %v337
    %v1380 = vunpack.c.h.b16 %v337
    %v1381 = vunpack.c.l.b16 %v338
    %v1382 = vunpack.c.h.b16 %v338
    %v1383 = vunpack.c.l.b16 %v339
    %v1384 = vunpack.c.l.b16 %v340
    %v1385 = vunpack.c.h.b16 %v340
    %v1386 = vunpack.c.l.b16 %v341
    %v1387 = vunpack.c.h.b16 %v341
    %v1388 = vunpack.c.l.b16 %v342
    %v1389 = vunpack.c.h.b16 %v342
    %v1390 = vunpack.c.l.b16 %v343
    %v1391 = vunpack.c.l.b16 %v344
    %v1392 = vunpack.c.h.b16 %v344
    %v1393 = vunpack.c.l.b16 %v345
    %v1394 = vunpack.c.h.b16 %v345
    %v1395 = vunpack.c.l.b16 %v346
    %v1396 = vunpack.c.h.b16 %v346
    %v1397 = vunpack.c.l.b16 %v347
    %v1398 = vunpack.c.l.b16 %v348
    %v1399 = vunpack.c.h.b16 %v348
    %v1400 = vunpack.c.l.b16 %v349
    %v1401 = vunpack.c.h.b16 %v349
    %v1402 = vunpack.c.l.b16 %v350
    %v1403 = vunpack.c.h.b16 %v350
    %v1404 = vunpack.c.l.b16 %v351
    %v1405 = vunpack.c.l.b16 %v352
    %v1406 = vunpack.c.h.b16 %v352
    %v1407 = vunpack.c.l.b16 %v353
    %v1408 = vunpack.c.h.b16 %v353
    %v1409 = vunpack.c.l.b16 %v354
    %v1410 = vunpack.c.h.b16 %v354
    %v1411 = vunpack.c.l.b16 %v355
    %v1412 = vunpack.c.l.b16 %v356
    %v1413 = vunpack.c.h.b16 %v356
    %v1414 = vunpack.c.l.b16 %v357
    %v1415 = vunpack.c.h.b16 %v357
    %v1416 = vunpack.c.l.b16 %v358
    %v1417 = vunpack.c.h.b16 %v358
    %v1418 = vunpack.c.l.b16 %v359
    %v1419 = vunpack.c.l.b16 %v360
    %v1420 = vunpack.c.h.b16 %v360
    %v1421 = vunpack.c.l.b16 %v361
    %v1422 = vunpack.c.h.b16 %v361
    %v1423 = vunpack.c.l.b16 %v362
    %v1424 = vunpack.c.h.b16 %v362
    %v1425 = vunpack.c.l.b16 %v363
    %v1426 = vunpack.c.l.b16 %v364
    %v1427 = vunpack.c.h.b16 %v364
    %v1428 = vunpack.c.l.b16 %v365
    %v1429 = vunpack.c.h.b16 %v365
    %v1430 = vunpack.c.l.b16 %v366
    %v1431 = vunpack.c.h.b16 %v366
    %v1432 = vunpack.c.l.b16 %v367
    %v1433 = vunpack.c.l.b16 %v368
    %v1434 = vunpack.c.h.b16 %v368
    %v1435 = vunpack.c.l.b16 %v369
    %v1436 = vunpack.c.h.b16 %v369
    %v1437 = vunpack.c.l.b16 %v370
    %v1438 = vunpack.c.h.b16 %v370
    %v1439 = vunpack.c.l.b16 %v371
    %v1440 = vunpack.c.l.b16 %v372
    %v1441 = vunpack.c.h.b16 %v372
    %v1442 = vunpack.c.l.b16 %v373
    %v1443 = vunpack.c.h.b16 %v373
    %v1444 = vunpack.c.l.b16 %v374
    %v1445 = vunpack.c.h.b16 %v374
    %v1446 = vunpack.c.l.b16 %v375
    %v1447 = vunpack.c.l.b16 %v376
    %v1448 = vunpack.c.h.b16 %v376
    %v1449 = vunpack.c.l.b16 %v377
    %v1450 = vunpack.c.h.b16 %v377
    %v1451 = vunpack.c.l.b16 %v378
    %v1452 = vunpack.c.h.b16 %v378
    %v1453 = vunpack.c.l.b16 %v379
    %v1454 = vunpack.c.l.b16 %v380
    %v1455 = vunpack.c.h.b16 %v380
    %v1456 = vunpack.c.l.b16 %v381
    %v1457 = vunpack.c.h.b16 %v381
    %v1458 = vunpack.c.l.b16 %v382
    %v1459 = vunpack.c.h.b16 %v382
    %v1460 = vunpack.c.l.b16 %v383
    %v1461 = vunpack.c.l.b16 %v384
    %v1462 = vunpack.c.h.b16 %v384
    %v1463 = vunpack.c.l.b16 %v385
    %v1464 = vunpack.c.h.b16 %v385
    %v1465 = vunpack.c.l.b16 %v386
    %v1466 = vunpack.c.h.b16 %v386
    %v1467 = vunpack.c.l.b16 %v387
    %v1468 = vunpack.c.l.b16 %v388
    %v1469 = vunpack.c.h.b16 %v388
    %v1470 = vunpack.c.l.b16 %v389
    %v1471 = vunpack.c.h.b16 %v389
    %v1472 = vunpack.c.l.b16 %v390
    %v1473 = vunpack.c.h.b16 %v390
    %v1474 = vunpack.c.l.b16 %v391
    %v1475 = vunpack.c.l.b16 %v392
    %v1476 = vunpack.c.h.b16 %v392
    %v1477 = vunpack.c.l.b16 %v393
    %v1478 = vunpack.c.h.b16 %v393
    %v1479 = vunpack.c.l.b16 %v394
    %v1480 = vunpack.c.h.b16 %v394
    %v1481 = vunpack.c.l.b16 %v395
    %v1482 = vunpack.c.l.b16 %v396
    %v1483 = vunpack.c.h.b16 %v396
    %v1484 = vunpack.c.l.b16 %v397
    %v1485 = vunpack.c.h.b16 %v397
    %v1486 = vunpack.c.l.b16 %v398
    %v1487 = vunpack.c.h.b16 %v398
    %v1488 = vunpack.c.l.b16 %v399
    %v1489 = vunpack.c.l.b16 %v400
    %v1490 = vunpack.c.h.b16 %v400
    %v1491 = vunpack.c.l.b16 %v401
    %v1492 = vunpack.c.h.b16 %v401
    %v1493 = vunpack.c.l.b16 %v402
    %v1494 = vunpack.c.h.b16 %v402
    %v1495 = vunpack.c.l.b16 %v403
    %v1496 = vunpack.c.l.b16 %v404
    %v1497 = vunpack.c.h.b16 %v404
    %v1498 = vunpack.c.l.b16 %v405
    %v1499 = vunpack.c.h.b16 %v405
    %v1500 = vunpack.c.l.b16 %v406
    %v1501 = vunpack.c.h.b16 %v406
    %v1502 = vunpack.c.l.b16 %v407
    %v1503 = vunpack.c.l.b16 %v408
    %v1504 = vunpack.c.h.b16 %v408
    %v1505 = vunpack.c.l.b16 %v409
    %v1506 = vunpack.c.h.b16 %v409
    %v1507 = vunpack.c.l.b16 %v410
    %v1508 = vunpack.c.h.b16 %v410
    %v1509 = vunpack.c.l.b16 %v411
    %v1510 = vunpack.c.l.b16 %v412
    %v1511 = vunpack.c.h.b16 %v412
    %v1512 = vunpack.c.l.b16 %v413
    %v1513 = vunpack.c.h.b16 %v413
    %v1514 = vunpack.c.l.b16 %v414
    %v1515 = vunpack.c.h.b16 %v414
    %v1516 = vunpack.c.l.b16 %v415
    %v1517 = vunpack.c.l.b16 %v416
    %v1518 = vunpack.c.h.b16 %v416
    %v1519 = vunpack.c.l.b16 %v417
    %v1520 = vunpack.c.h.b16 %v417
    %v1521 = vunpack.c.l.b16 %v418
    %v1522 = vunpack.c.h.b16 %v418
    %v1523 = vunpack.c.l.b16 %v419
    %v1524 = vunpack.c.l.b16 %v420
    %v1525 = vunpack.c.h.b16 %v420
    %v1526 = vunpack.c.l.b16 %v421
    %v1527 = vunpack.c.h.b16 %v421
    %v1528 = vunpack.c.l.b16 %v422
    %v1529 = vunpack.c.h.b16 %v422
    %v1530 = vunpack.c.l.b16 %v423
    %v1531 = vunpack.c.l.b16 %v424
    %v1532 = vunpack.c.h.b16 %v424
    %v1533 = vunpack.c.l.b16 %v425
    %v1534 = vunpack.c.h.b16 %v425
    %v1535 = vunpack.c.l.b16 %v426
    %v1536 = vunpack.c.h.b16 %v426
    %v1537 = vunpack.c.l.b16 %v427
    %v1538 = vunpack.c.l.b16 %v428
    %v1539 = vunpack.c.h.b16 %v428
    %v1540 = vunpack.c.l.b16 %v429
    %v1541 = vunpack.c.h.b16 %v429
    %v1542 = vunpack.c.l.b16 %v430
    %v1543 = vunpack.c.h.b16 %v430
    %v1544 = vunpack.c.l.b16 %v431
    %v1545 = vunpack.c.l.b16 %v432
    %v1546 = vunpack.c.h.b16 %v432
    %v1547 = vunpack.c.l.b16 %v433
    %v1548 = vunpack.c.h.b16 %v433
    %v1549 = vunpack.c.l.b16 %v434
    %v1550 = vunpack.c.h.b16 %v434
    %v1551 = vunpack.c.l.b16 %v435
    %v1552 = vunpack.c.l.b16 %v436
    %v1553 = vunpack.c.h.b16 %v436
    %v1554 = vunpack.c.l.b16 %v437
    %v1555 = vunpack.c.h.b16 %v437
    %v1556 = vunpack.c.l.b16 %v438
    %v1557 = vunpack.c.h.b16 %v438
    %v1558 = vunpack.c.l.b16 %v439
    %v1559 = vunpack.c.l.b16 %v440
    %v1560 = vunpack.c.h.b16 %v440
    %v1561 = vunpack.c.l.b16 %v441
    %v1562 = vunpack.c.h.b16 %v441
    %v1563 = vunpack.c.l.b16 %v442
    %v1564 = vunpack.c.h.b16 %v442
    %v1565 = vunpack.c.l.b16 %v443
    %v1566 = vunpack.c.l.b16 %v444
    %v1567 = vunpack.c.h.b16 %v444
    %v1568 = vunpack.c.l.b16 %v445
    %v1569 = vunpack.c.h.b16 %v445
    %v1570 = vunpack.c.l.b16 %v446
    %v1571 = vunpack.c.h.b16 %v446
    %v1572 = vunpack.c.l.b16 %v447
    %v1573 = vunpack.c.l.b16 %v448
    %v1574 = vunpack.c.h.b16 %v448
    %v1575 = vunpack.c.l.b16 %v449
    %v1576 = vunpack.c.h.b16 %v449
    %v1577 = vunpack.c.l.b16 %v450
    %v1578 = vunpack.c.h.b16 %v450
    %v1579 = vunpack.c.l.b16 %v451
    %v1580 = vunpack.c.l.b16 %v452
    %v1581 = vunpack.c.h.b16 %v452
    %v1582 = vunpack.c.l.b16 %v453
    %v1583 = vunpack.c.h.b16 %v453
    %v1584 = vunpack.c.l.b16 %v454
    %v1585 = vunpack.c.h.b16 %v454
    %v1586 = vunpack.c.l.b16 %v455
    %v1587 = vunpack.c.l.b16 %v456
    %v1588 = vunpack.c.h.b16 %v456
    %v1589 = vunpack.c.l.b16 %v457
    %v1590 = vunpack.c.h.b16 %v457
    %v1591 = vunpack.c.l.b16 %v458
    %v1592 = vunpack.c.h.b16 %v458
    %v1593 = vunpack.c.l.b16 %v459
    %v1594 = vunpack.c.l.b16 %v460
    %v1595 = vunpack.c.h.b16 %v460
    %v1596 = vunpack.c.l.b16 %v461
    %v1597 = vunpack.c.h.b16 %v461
    %v1598 = vunpack.c.l.b16 %v462
    %v1599 = vunpack.c.h.b16 %v462
    %v1600 = vunpack.c.l.b16 %v463
    %v1601 = vunpack.c.l.b16 %v464
    %v1602 = vunpack.c.h.b16 %v464
    %v1603 = vunpack.c.l.b16 %v465
    %v1604 = vunpack.c.h.b16 %v465
    %v1605 = vunpack.c.l.b16 %v466
    %v1606 = vunpack.c.h.b16 %v466
    %v1607 = vunpack.c.l.b16 %v467
    %v1608 = vunpack.c.l.b16 %v468
    %v1609 = vunpack.c.h.b16 %v468
    %v1610 = vunpack.c.l.b16 %v469
    %v1611 = vunpack.c.h.b16 %v469
    %v1612 = vunpack.c.l.b16 %v470
    %v1613 = vunpack.c.h.b16 %v470
    %v1614 = vunpack.c.l.b16 %v471
    %v1615 = vunpack.c.l.b16 %v472
    %v1616 = vunpack.c.h.b16 %v472
    %v1617 = vunpack.c.l.b16 %v473
    %v1618 = vunpack.c.h.b16 %v473
    %v1619 = vunpack.c.l.b16 %v474
    %v1620 = vunpack.c.h.b16 %v474
    %v1621 = vunpack.c.l.b16 %v475
    %v1622 = vunpack.c.l.b16 %v476
    %v1623 = vunpack.c.h.b16 %v476
    %v1624 = vunpack.c.l.b16 %v477
    %v1625 = vunpack.c.h.b16 %v477
    %v1626 = vunpack.c.l.b16 %v478
    %v1627 = vunpack.c.h.b16 %v478
    %v1628 = vunpack.c.l.b16 %v479
    %v1629 = vunpack.c.l.b16 %v480
    %v1630 = vunpack.c.h.b16 %v480
    %v1631 = vunpack.c.l.b16 %v481
    %v1632 = vunpack.c.h.b16 %v481
    %v1633 = vunpack.c.l.b16 %v482
    %v1634 = vunpack.c.h.b16 %v482
    %v1635 = vunpack.c.l.b16 %v483
    %v1636 = vunpack.c.l.b16 %v484
    %v1637 = vunpack.c.h.b16 %v484
    %v1638 = vunpack.c.l.b16 %v485
    %v1639 = vunpack.c.h.b16 %v485
    %v1640 = vunpack.c.l.b16 %v486
    %v1641 = vunpack.c.h.b16 %v486
    %v1642 = vunpack.c.l.b16 %v487
    %v1643 = vunpack.c.l.b16 %v488
    %v1644 = vunpack.c.h.b16 %v488
    %v1645 = vunpack.c.l.b16 %v489
    %v1646 = vunpack.c.h.b16 %v489
    %v1647 = vunpack.c.l.b16 %v490
    %v1648 = vunpack.c.h.b16 %v490
    %v1649 = vunpack.c.l.b16 %v491
    %v1650 = vunpack.c.l.b16 %v492
    %v1651 = vunpack.c.h.b16 %v492
    %v1652 = vunpack.c.l.b16 %v493
    %v1653 = vunpack.c.h.b16 %v493
    %v1654 = vunpack.c.l.b16 %v494
    %v1655 = vunpack.c.h.b16 %v494
    %v1656 = vunpack.c.l.b16 %v495
    %v1657 = vunpack.c.l.b16 %v496
    %v1658 = vunpack.c.h.b16 %v496
    %v1659 = vunpack.c.l.b16 %v497
    %v1660 = vunpack.c.h.b16 %v497
    %v1661 = vunpack.c.l.b16 %v498
    %v1662 = vunpack.c.h.b16 %v498
    %v1663 = vunpack.c.l.b16 %v499
    %v1664 = vunpack.c.l.b16 %v500
    %v1665 = vunpack.c.h.b16 %v500
    %v1666 = vunpack.c.l.b16 %v501
    %v1667 = vunpack.c.h.b16 %v501
    %v1668 = vunpack.c.l.b16 %v502
    %v1669 = vunpack.c.h.b16 %v502
    %v1670 = vunpack.c.l.b16 %v503
    %v1671 = vunpack.c.l.b16 %v504
    %v1672 = vunpack.c.h.b16 %v504
    %v1673 = vunpack.c.l.b16 %v505
    %v1674 = vunpack.c.h.b16 %v505
    %v1675 = vunpack.c.l.b16 %v506
    %v1676 = vunpack.c.h.b16 %v506
    %v1677 = vunpack.c.l.b16 %v507
    %v1678 = vpack.c.b16 %v999, %v992
    %v1679 = vpack.c.b16 %v1000, %v993
    %v1680 = vpack.c.b16 %v1001, %v994
    %v1681 = vpack.c.b16 %v1002, %v995
    %v1682 = vpack.c.b16 %v1003, %v996
    %v1683 = vpack.c.b16 %v1004, %v997
    %v1684 = vpack.c.b16 %v1005, %v998
    %v1685 = vpack.c.b16 %v1013, %v1006
    %v1686 = vpack.c.b16 %v1014, %v1007
    %v1687 = vpack.c.b16 %v1015, %v1008
    %v1688 = vpack.c.b16 %v1016, %v1009
    %v1689 = vpack.c.b16 %v1017, %v1010
    %v1690 = vpack.c.b16 %v1018, %v1011
    %v1691 = vpack.c.b16 %v1019, %v1012
    %v1692 = vpack.c.b16 %v1027, %v1020
    %v1693 = vpack.c.b16 %v1028, %v1021
    %v1694 = vpack.c.b16 %v1029, %v1022
    %v1695 = vpack.c.b16 %v1030, %v1023
    %v1696 = vpack.c.b16 %v1031, %v1024
    %v1697 = vpack.c.b16 %v1032, %v1025
    %v1698 = vpack.c.b16 %v1033, %v1026
    %v1699 = vpack.c.b16 %v1041, %v1034
    %v1700 = vpack.c.b16 %v1042, %v1035
    %v1701 = vpack.c.b16 %v1043, %v1036
    %v1702 = vpack.c.b16 %v1044, %v1037
    %v1703 = vpack.c.b16 %v1045, %v1038
    %v1704 = vpack.c.b16 %v1046, %v1039
    %v1705 = vpack.c.b16 %v1047, %v1040
    %v1706 = vpack.c.b16 %v1055, %v1048
    %v1707 = vpack.c.b16 %v1056, %v1049
    %v1708 = vpack.c.b16 %v1057, %v1050
    %v1709 = vpack.c.b16 %v1058, %v1051
    %v1710 = vpack.c.b16 %v1059, %v1052
    %v1711 = vpack.c.b16 %v1060, %v1053
    %v1712 = vpack.c.b16 %v1061, %v1054
    %v1713 = vpack.c.b16 %v1069, %v1062
    %v1714 = vpack.c.b16 %v1070, %v1063
    %v1715 = vpack.c.b16 %v1071, %v1064
    %v1716 = vpack.c.b16 %v1072, %v1065
    %v1717 = vpack.c.b16 %v1073, %v1066
    %v1718 = vpack.c.b16 %v1074, %v1067
    %v1719 = vpack.c.b16 %v1075, %v1068
    %v1720 = vpack.c.b16 %v1083, %v1076
    %v1721 = vpack.c.b16 %v1084, %v1077
    %v1722 = vpack.c.b16 %v1085, %v1078
    %v1723 = vpack.c.b16 %v1086, %v1079
    %v1724 = vpack.c.b16 %v1087, %v1080
    %v1725 = vpack.c.b16 %v1088, %v1081
    %v1726 = vpack.c.b16 %v1089, %v1082
    %v1727 = vpack.c.b16 %v1097, %v1090
    %v1728 = vpack.c.b16 %v1098, %v1091
    %v1729 = vpack.c.b16 %v1099, %v1092
    %v1730 = vpack.c.b16 %v1100, %v1093
    %v1731 = vpack.c.b16 %v1101, %v1094
    %v1732 = vpack.c.b16 %v1102, %v1095
    %v1733 = vpack.c.b16 %v1103, %v1096
    %v1734 = vpack.c.b16 %v1111, %v1104
    %v1735 = vpack.c.b16 %v1112, %v1105
    %v1736 = vpack.c.b16 %v1113, %v1106
    %v1737 = vpack.c.b16 %v1114, %v1107
    %v1738 = vpack.c.b16 %v1115, %v1108
    %v1739 = vpack.c.b16 %v1116, %v1109
    %v1740 = vpack.c.b16 %v1117, %v1110
    %v1741 = vpack.c.b16 %v1125, %v1118
    %v1742 = vpack.c.b16 %v1126, %v1119
    %v1743 = vpack.c.b16 %v1127, %v1120
    %v1744 = vpack.c.b16 %v1128, %v1121
    %v1745 = vpack.c.b16 %v1129, %v1122
    %v1746 = vpack.c.b16 %v1130, %v1123
    %v1747 = vpack.c.b16 %v1131, %v1124
    %v1748 = vpack.c.b16 %v1139, %v1132
    %v1749 = vpack.c.b16 %v1140, %v1133
    %v1750 = vpack.c.b16 %v1141, %v1134
    %v1751 = vpack.c.b16 %v1142, %v1135
    %v1752 = vpack.c.b16 %v1143, %v1136
    %v1753 = vpack.c.b16 %v1144, %v1137
    %v1754 = vpack.c.b16 %v1145, %v1138
    %v1755 = vpack.c.b16 %v1153, %v1146
    %v1756 = vpack.c.b16 %v1154, %v1147
    %v1757 = vpack.c.b16 %v1155, %v1148
    %v1758 = vpack.c.b16 %v1156, %v1149
    %v1759 = vpack.c.b16 %v1157, %v1150
    %v1760 = vpack.c.b16 %v1158, %v1151
    %v1761 = vpack.c.b16 %v1159, %v1152
    %v1762 = vpack.c.b16 %v1167, %v1160
    %v1763 = vpack.c.b16 %v1168, %v1161
    %v1764 = vpack.c.b16 %v1169, %v1162
    %v1765 = vpack.c.b16 %v1170, %v1163
    %v1766 = vpack.c.b16 %v1171, %v1164
    %v1767 = vpack.c.b16 %v1172, %v1165
    %v1768 = vpack.c.b16 %v1173, %v1166
    %v1769 = vpack.c.b16 %v1181, %v1174
    %v1770 = vpack.c.b16 %v1182, %v1175
    %v1771 = vpack.c.b16 %v1183, %v1176
    %v1772 = vpack.c.b16 %v1184, %v1177
    %v1773 = vpack.c.b16 %v1185, %v1178
    %v1774 = vpack.c.b16 %v1186, %v1179
    %v1775 = vpack.c.b16 %v1187, %v1180
    %v1776 = vpack.c.b16 %v1195, %v1188
    %v1777 = vpack.c.b16 %v1196, %v1189
    %v1778 = vpack.c.b16 %v1197, %v1190
    %v1779 = vpack.c.b16 %v1198, %v1191
    %v1780 = vpack.c.b16 %v1199, %v1192
    %v1781 = vpack.c.b16 %v1200, %v1193
    %v1782 = vpack.c.b16 %v1201, %v1194
    %v1783 = vpack.c.b16 %v1209, %v1202
    %v1784 = vpack.c.b16 %v1210, %v1203
    %v1785 = vpack.c.b16 %v1211, %v1204
    %v1786 = vpack.c.b16 %v1212, %v1205
    %v1787 = vpack.c.b16 %v1213, %v1206
    %v1788 = vpack.c.b16 %v1214, %v1207
    %v1789 = vpack.c.b16 %v1215, %v1208
    %v1790 = vpack.c.b16 %v1223, %v1216
    %v1791 = vpack.c.b16 %v1224, %v1217
    %v1792 = vpack.c.b16 %v1225, %v1218
    %v1793 = vpack.c.b16 %v1226, %v1219
    %v1794 = vpack.c.b16 %v1227, %v1220
    %v1795 = vpack.c.b16 %v1228, %v1221
    %v1796 = vpack.c.b16 %v1229, %v1222
    %v1797 = vpack.c.b16 %v1237, %v1230
    %v1798 = vpack.c.b16 %v1238, %v1231
    %v1799 = vpack.c.b16 %v1239, %v1232
    %v1800 = vpack.c.b16 %v1240, %v1233
    %v1801 = vpack.c.b16 %v1241, %v1234
    %v1802 = vpack.c.b16 %v1242, %v1235
    %v1803 = vpack.c.b16 %v1243, %v1236
    %v1804 = vpack.c.b16 %v1251, %v1244
    %v1805 = vpack.c.b16 %v1252, %v1245
    %v1806 = vpack.c.b16 %v1253, %v1246
    %v1807 = vpack.c.b16 %v1254, %v1247
    %v1808 = vpack.c.b16 %v1255, %v1248
    %v1809 = vpack.c.b16 %v1256, %v1249
    %v1810 = vpack.c.b16 %v1257, %v1250
    %v1811 = vpack.c.b16 %v1265, %v1258
    %v1812 = vpack.c.b16 %v1266, %v1259
    %v1813 = vpack.c.b16 %v1267, %v1260
    %v1814 = vpack.c.b16 %v1268, %v1261
    %v1815 = vpack.c.b16 %v1269, %v1262
    %v1816 = vpack.c.b16 %v1270, %v1263
    %v1817 = vpack.c.b16 %v1271, %v1264
    %v1818 = vpack.c.b16 %v1279, %v1272
    %v1819 = vpack.c.b16 %v1280, %v1273
    %v1820 = vpack.c.b16 %v1281, %v1274
    %v1821 = vpack.c.b16 %v1282, %v1275
    %v1822 = vpack.c.b16 %v1283, %v1276
    %v1823 = vpack.c.b16 %v1284, %v1277
    %v1824 = vpack.c.b16 %v1285, %v1278
    %v1825 = vpack.c.b16 %v1293, %v1286
    %v1826 = vpack.c.b16 %v1294, %v1287
    %v1827 = vpack.c.b16 %v1295, %v1288
    %v1828 = vpack.c.b16 %v1296, %v1289
    %v1829 = vpack.c.b16 %v1297, %v1290
    %v1830 = vpack.c.b16 %v1298, %v1291
    %v1831 = vpack.c.b16 %v1299, %v1292
    %v1832 = vpack.c.b16 %v1307, %v1300
    %v1833 = vpack.c.b16 %v1308, %v1301
    %v1834 = vpack.c.b16 %v1309, %v1302
    %v1835 = vpack.c.b16 %v1310, %v1303
    %v1836 = vpack.c.b16 %v1311, %v1304
    %v1837 = vpack.c.b16 %v1312, %v1305
    %v1838 = vpack.c.b16 %v1313, %v1306
    %v1839 = vpack.c.b16 %v1321, %v1314
    %v1840 = vpack.c.b16 %v1322, %v1315
    %v1841 = vpack.c.b16 %v1323, %v1316
    %v1842 = vpack.c.b16 %v1324, %v1317
    %v1843 = vpack.c.b16 %v1325, %v1318
    %v1844 = vpack.c.b16 %v1326, %v1319
    %v1845 = vpack.c.b16 %v1327, %v1320
    %v1846 = vpack.c.b16 %v1335, %v1328
    %v1847 = vpack.c.b16 %v1336, %v1329
    %v1848 = vpack.c.b16 %v1337, %v1330
    %v1849 = vpack.c.b16 %v1338, %v1331
    %v1850 = vpack.c.b16 %v1339, %v1332
    %v1851 = vpack.c.b16 %v1340, %v1333
    %v1852 = vpack.c.b16 %v1341, %v1334
    %v1853 = vpack.c.b16 %v1349, %v1342
    %v1854 = vpack.c.b16 %v1350, %v1343
    %v1855 = vpack.c.b16 %v1351, %v1344
    %v1856 = vpack.c.b16 %v1352, %v1345
    %v1857 = vpack.c.b16 %v1353, %v1346
    %v1858 = vpack.c.b16 %v1354, %v1347
    %v1859 = vpack.c.b16 %v1355, %v1348
    %v1860 = vpack.c.b16 %v1363, %v1356
    %v1861 = vpack.c.b16 %v1364, %v1357
    %v1862 = vpack.c.b16 %v1365, %v1358
    %v1863 = vpack.c.b16 %v1366, %v1359
    %v1864 = vpack.c.b16 %v1367, %v1360
    %v1865 = vpack.c.b16 %v1368, %v1361
    %v1866 = vpack.c.b16 %v1369, %v1362
    %v1867 = vpack.c.b16 %v1377, %v1370
    %v1868 = vpack.c.b16 %v1378, %v1371
    %v1869 = vpack.c.b16 %v1379, %v1372
    %v1870 = vpack.c.b16 %v1380, %v1373
    %v1871 = vpack.c.b16 %v1381, %v1374
    %v1872 = vpack.c.b16 %v1382, %v1375
    %v1873 = vpack.c.b16 %v1383, %v1376
    %v1874 = vpack.c.b16 %v1391, %v1384
    %v1875 = vpack.c.b16 %v1392, %v1385
    %v1876 = vpack.c.b16 %v1393, %v1386
    %v1877 = vpack.c.b16 %v1394, %v1387
    %v1878 = vpack.c.b16 %v1395, %v1388
    %v1879 = vpack.c.b16 %v1396, %v1389
    %v1880 = vpack.c.b16 %v1397, %v1390
    %v1881 = vpack.c.b16 %v1405, %v1398
    %v1882 = vpack.c.b16 %v1406, %v1399
    %v1883 = vpack.c.b16 %v1407, %v1400
    %v1884 = vpack.c.b16 %v1408, %v1401
    %v1885 = vpack.c.b16 %v1409, %v1402
    %v1886 = vpack.c.b16 %v1410, %v1403
    %v1887 = vpack.c.b16 %v1411, %v1404
    %v1888 = vpack.c.b16 %v1419, %v1412
    %v1889 = vpack.c.b16 %v1420, %v1413
    %v1890 = vpack.c.b16 %v1421, %v1414
    %v1891 = vpack.c.b16 %v1422, %v1415
    %v1892 = vpack.c.b16 %v1423, %v1416
    %v1893 = vpack.c.b16 %v1424, %v1417
    %v1894 = vpack.c.b16 %v1425, %v1418
    %v1895 = vpack.c.b16 %v1433, %v1426
    %v1896 = vpack.c.b16 %v1434, %v1427
    %v1897 = vpack.c.b16 %v1435, %v1428
    %v1898 = vpack.c.b16 %v1436, %v1429
    %v1899 = vpack.c.b16 %v1437, %v1430
    %v1900 = vpack.c.b16 %v1438, %v1431
    %v1901 = vpack.c.b16 %v1439, %v1432
    %v1902 = vpack.c.b16 %v1447, %v1440
    %v1903 = vpack.c.b16 %v1448, %v1441
    %v1904 = vpack.c.b16 %v1449, %v1442
    %v1905 = vpack.c.b16 %v1450, %v1443
    %v1906 = vpack.c.b16 %v1451, %v1444
    %v1907 = vpack.c.b16 %v1452, %v1445
    %v1908 = vpack.c.b16 %v1453, %v1446
    %v1909 = vpack.c.b16 %v1461, %v1454
    %v1910 = vpack.c.b16 %v1462, %v1455
    %v1911 = vpack.c.b16 %v1463, %v1456
    %v1912 = vpack.c.b16 %v1464, %v1457
    %v1913 = vpack.c.b16 %v1465, %v1458
    %v1914 = vpack.c.b16 %v1466, %v1459
    %v1915 = vpack.c.b16 %v1467, %v1460
    %v1916 = vpack.c.b16 %v1475, %v1468
    %v1917 = vpack.c.b16 %v1476, %v1469
    %v1918 = vpack.c.b16 %v1477, %v1470
    %v1919 = vpack.c.b16 %v1478, %v1471
    %v1920 = vpack.c.b16 %v1479, %v1472
    %v1921 = vpack.c.b16 %v1480, %v1473
    %v1922 = vpack.c.b16 %v1481, %v1474
    %v1923 = vpack.c.b16 %v1489, %v1482
    %v1924 = vpack.c.b16 %v1490, %v1483
    %v1925 = vpack.c.b16 %v1491, %v1484
    %v1926 = vpack.c.b16 %v1492, %v1485
    %v1927 = vpack.c.b16 %v1493, %v1486
    %v1928 = vpack.c.b16 %v1494, %v1487
    %v1929 = vpack.c.b16 %v1495, %v1488
    %v1930 = vpack.c.b16 %v1503, %v1496
    %v1931 = vpack.c.b16 %v1504, %v1497
    %v1932 = vpack.c.b16 %v1505, %v1498
    %v1933 = vpack.c.b16 %v1506, %v1499
    %v1934 = vpack.c.b16 %v1507, %v1500
    %v1935 = vpack.c.b16 %v1508, %v1501
    %v1936 = vpack.c.b16 %v1509, %v1502
    %v1937 = vpack.c.b16 %v1517, %v1510
    %v1938 = vpack.c.b16 %v1518, %v1511
    %v1939 = vpack.c.b16 %v1519, %v1512
    %v1940 = vpack.c.b16 %v1520, %v1513
    %v1941 = vpack.c.b16 %v1521, %v1514
    %v1942 = vpack.c.b16 %v1522, %v1515
    %v1943 = vpack.c.b16 %v1523, %v1516
    %v1944 = vpack.c.b16 %v1531, %v1524
    %v1945 = vpack.c.b16 %v1532, %v1525
    %v1946 = vpack.c.b16 %v1533, %v1526
    %v1947 = vpack.c.b16 %v1534, %v1527
    %v1948 = vpack.c.b16 %v1535, %v1528
    %v1949 = vpack.c.b16 %v1536, %v1529
    %v1950 = vpack.c.b16 %v1537, %v1530
    %v1951 = vpack.c.b16 %v1545, %v1538
    %v1952 = vpack.c.b16 %v1546, %v1539
    %v1953 = vpack.c.b16 %v1547, %v1540
    %v1954 = vpack.c.b16 %v1548, %v1541
    %v1955 = vpack.c.b16 %v1549, %v1542
    %v1956 = vpack.c.b16 %v1550, %v1543
    %v1957 = vpack.c.b16 %v1551, %v1544
    %v1958 = vpack.c.b16 %v1559, %v1552
    %v1959 = vpack.c.b16 %v1560, %v1553
    %v1960 = vpack.c.b16 %v1561, %v1554
    %v1961 = vpack.c.b16 %v1562, %v1555
    %v1962 = vpack.c.b16 %v1563, %v1556
    %v1963 = vpack.c.b16 %v1564, %v1557
    %v1964 = vpack.c.b16 %v1565, %v1558
    %v1965 = vpack.c.b16 %v1573, %v1566
    %v1966 = vpack.c.b16 %v1574, %v1567
    %v1967 = vpack.c.b16 %v1575, %v1568
    %v1968 = vpack.c.b16 %v1576, %v1569
    %v1969 = vpack.c.b16 %v1577, %v1570
    %v1970 = vpack.c.b16 %v1578, %v1571
    %v1971 = vpack.c.b16 %v1579, %v1572
    %v1972 = vpack.c.b16 %v1587, %v1580
    %v1973 = vpack.c.b16 %v1588, %v1581
    %v1974 = vpack.c.b16 %v1589, %v1582
    %v1975 = vpack.c.b16 %v1590, %v1583
    %v1976 = vpack.c.b16 %v1591, %v1584
    %v1977 = vpack.c.b16 %v1592, %v1585
    %v1978 = vpack.c.b16 %v1593, %v1586
    %v1979 = vpack.c.b16 %v1601, %v1594
    %v1980 = vpack.c.b16 %v1602, %v1595
    %v1981 = vpack.c.b16 %v1603, %v1596
    %v1982 = vpack.c.b16 %v1604, %v1597
    %v1983 = vpack.c.b16 %v1605, %v1598
    %v1984 = vpack.c.b16 %v1606, %v1599
    %v1985 = vpack.c.b16 %v1607, %v1600
    %v1986 = vpack.c.b16 %v1615, %v1608
    %v1987 = vpack.c.b16 %v1616, %v1609
    %v1988 = vpack.c.b16 %v1617, %v1610
    %v1989 = vpack.c.b16 %v1618, %v1611
    %v1990 = vpack.c.b16 %v1619, %v1612
    %v1991 = vpack.c.b16 %v1620, %v1613
    %v1992 = vpack.c.b16 %v1621, %v1614
    %v1993 = vpack.c.b16 %v1629, %v1622
    %v1994 = vpack.c.b16 %v1630, %v1623
    %v1995 = vpack.c.b16 %v1631, %v1624
    %v1996 = vpack.c.b16 %v1632, %v1625
    %v1997 = vpack.c.b16 %v1633, %v1626
    %v1998 = vpack.c.b16 %v1634, %v1627
    %v1999 = vpack.c.b16 %v1635, %v1628
    %v2000 = vpack.c.b16 %v1643, %v1636
    %v2001 = vpack.c.b16 %v1644, %v1637
    %v2002 = vpack.c.b16 %v1645, %v1638
    %v2003 = vpack.c.b16 %v1646, %v1639
    %v2004 = vpack.c.b16 %v1647, %v1640
    %v2005 = vpack.c.b16 %v1648, %v1641
    %v2006 = vpack.c.b16 %v1649, %v1642
    %v2007 = vpack.c.b16 %v1657, %v1650
    %v2008 = vpack.c.b16 %v1658, %v1651
    %v2009 = vpack.c.b16 %v1659, %v1652
    %v2010 = vpack.c.b16 %v1660, %v1653
    %v2011 = vpack.c.b16 %v1661, %v1654
    %v2012 = vpack.c.b16 %v1662, %v1655
    %v2013 = vpack.c.b16 %v1663, %v1656
    %v2014 = vpack.c.b16 %v1671, %v1664
    %v2015 = vpack.c.b16 %v1672, %v1665
    %v2016 = vpack.c.b16 %v1673, %v1666
    %v2017 = vpack.c.b16 %v1674, %v1667
    %v2018 = vpack.c.b16 %v1675, %v1668
    %v2019 = vpack.c.b16 %v1676, %v1669
    %v2020 = vpack.c.b16 %v1677, %v1670
    %vm2364 = vcmask 130048
    %v2366 = vsel %vm2364, %v592, 0
    %2368 = vmatprep.subr.bf16.mxu0 %v1679
    %2369 = vmatpush1.bf16.msra.mxu0 %v1678
    %2370 = vmatprep.subr.bf16.mxu0 %v1686
    %2371 = vmatpush1.bf16.msra.mxu0 %v1685
    %2372 = vmatprep.subr.bf16.mxu0 %v1693
    %2373 = vmatpush1.bf16.msra.mxu0 %v1692
    %2374 = vmatprep.subr.bf16.mxu0 %v1700
    %2375 = vmatpush1.bf16.msra.mxu0 %v1699
    %2376 = vmatprep.subr.bf16.mxu0 %v1707
    %2377 = vmatpush1.bf16.msra.mxu0 %v1706
    %2378 = vmatprep.subr.bf16.mxu0 %v1714
    %2379 = vmatpush1.bf16.msra.mxu0 %v1713
    %2380 = vmatprep.subr.bf16.mxu0 %v1721
    %2381 = vmatpush1.bf16.msra.mxu0 %v1720
    %2382 = vmatprep.subr.bf16.mxu0 %v1728
    %2383 = vmatpush1.bf16.msra.mxu0 %v1727
    %2384 = vmatprep.subr.bf16.mxu0 %v1735
    %2385 = vmatpush1.bf16.msra.mxu0 %v1734
    %2386 = vmatprep.subr.bf16.mxu0 %v1742
    %2387 = vmatpush1.bf16.msra.mxu0 %v1741
    %2388 = vmatprep.subr.bf16.mxu0 %v1749
    %2389 = vmatpush1.bf16.msra.mxu0 %v1748
    %2390 = vmatprep.subr.bf16.mxu0 %v1756
    %2391 = vmatpush1.bf16.msra.mxu0 %v1755
    %2392 = vmatprep.subr.bf16.mxu0 %v1763
    %2393 = vmatpush1.bf16.msra.mxu0 %v1762
    %2394 = vmatprep.subr.bf16.mxu0 %v1770
    %2395 = vmatpush1.bf16.msra.mxu0 %v1769
    %2396 = vmatprep.subr.bf16.mxu0 %v1777
    %2397 = vmatpush1.bf16.msra.mxu0 %v1776
    %2398 = vmatprep.subr.bf16.mxu0 %v1784
    %2399 = vmatpush1.bf16.msra.mxu0 %v1783
    %2400 = vmatprep.mubr.bf16.mxu0 %v583
    %2401 = vmatmul.mubr.bf16.gmra.mrb[0].mxu0 %v569
    %v2402 = vpop.f32.mrb[0].mxu0
    %v2403 = vadd.f32 %v513, %v2402
    %v2404 = vpop.f32.mrb[0].mxu0
    %v2405 = vadd.f32 %v517, %v2404
    %v2406 = vpop.f32.mrb[0].mxu0
    %v2407 = vpop.f32.mrb[0].mxu0
    %2408 = vdwg.mxu0
    %2409 = vmatprep.subr.bf16.mxu0 %v1791
    %2410 = vmatpush1.bf16.msra.mxu0 %v1790
    %2411 = vmatprep.subr.bf16.mxu0 %v1798
    %2412 = vmatpush1.bf16.msra.mxu0 %v1797
    %2413 = vmatprep.subr.bf16.mxu0 %v1805
    %2414 = vmatpush1.bf16.msra.mxu0 %v1804
    %2415 = vmatprep.subr.bf16.mxu0 %v1812
    %2416 = vmatpush1.bf16.msra.mxu0 %v1811
    %2417 = vmatprep.subr.bf16.mxu0 %v1819
    %2418 = vmatpush1.bf16.msra.mxu0 %v1818
    %2419 = vmatprep.subr.bf16.mxu0 %v1826
    %2420 = vmatpush1.bf16.msra.mxu0 %v1825
    %2421 = vmatprep.subr.bf16.mxu0 %v1833
    %2422 = vmatpush1.bf16.msra.mxu0 %v1832
    %2423 = vmatprep.subr.bf16.mxu0 %v1840
    %2424 = vmatpush1.bf16.msra.mxu0 %v1839
    %2425 = vmatprep.subr.bf16.mxu0 %v1847
    %2426 = vmatpush1.bf16.msra.mxu0 %v1846
    %2427 = vmatprep.subr.bf16.mxu0 %v1854
    %2428 = vmatpush1.bf16.msra.mxu0 %v1853
    %2429 = vmatprep.subr.bf16.mxu0 %v1861
    %2430 = vmatpush1.bf16.msra.mxu0 %v1860
    %2431 = vmatprep.subr.bf16.mxu0 %v1868
    %2432 = vmatpush1.bf16.msra.mxu0 %v1867
    %2433 = vmatprep.subr.bf16.mxu0 %v1875
    %2434 = vmatpush1.bf16.msra.mxu0 %v1874
    %2435 = vmatprep.subr.bf16.mxu0 %v1882
    %2436 = vmatpush1.bf16.msra.mxu0 %v1881
    %2437 = vmatprep.subr.bf16.mxu0 %v1889
    %2438 = vmatpush1.bf16.msra.mxu0 %v1888
    %2439 = vmatprep.subr.bf16.mxu0 %v1896
    %2440 = vmatpush1.bf16.msra.mxu0 %v1895
    %2441 = vmatprep.mubr.bf16.mxu0 %v593
    %2442 = vmatmul.mubr.bf16.gmra.mrb[0].mxu0 %v591
    %v2443 = vpop.f32.mrb[0].mxu0
    %v2444 = vadd.f32 %v2403, %v2443
    %v2445 = vpop.f32.mrb[0].mxu0
    %v2446 = vadd.f32 %v2405, %v2445
    %v2447 = vpop.f32.mrb[0].mxu0
    %v2448 = vpop.f32.mrb[0].mxu0
    %2449 = vdwg.mxu0
    %2450 = vmatprep.subr.bf16.mxu0 %v1903
    %2451 = vmatpush1.bf16.msra.mxu0 %v1902
    %2452 = vmatprep.subr.bf16.mxu0 %v1910
    %2453 = vmatpush1.bf16.msra.mxu0 %v1909
    %2454 = vmatprep.subr.bf16.mxu0 %v1917
    %2455 = vmatpush1.bf16.msra.mxu0 %v1916
    %2456 = vmatprep.subr.bf16.mxu0 %v1924
    %2457 = vmatpush1.bf16.msra.mxu0 %v1923
    %2458 = vmatprep.subr.bf16.mxu0 %v1931
    %2459 = vmatpush1.bf16.msra.mxu0 %v1930
    %2460 = vmatprep.subr.bf16.mxu0 %v1938
    %2461 = vmatpush1.bf16.msra.mxu0 %v1937
    %2462 = vmatprep.subr.bf16.mxu0 %v1945
    %2463 = vmatpush1.bf16.msra.mxu0 %v1944
    %2464 = vmatprep.subr.bf16.mxu0 %v1952
    %2465 = vmatpush1.bf16.msra.mxu0 %v1951
    %2466 = vmatprep.subr.bf16.mxu0 %v1959
    %2467 = vmatpush1.bf16.msra.mxu0 %v1958
    %2468 = vmatprep.subr.bf16.mxu0 %v1966
    %2469 = vmatpush1.bf16.msra.mxu0 %v1965
    %2470 = vmatprep.subr.bf16.mxu0 %v1973
    %2471 = vmatpush1.bf16.msra.mxu0 %v1972
    %2472 = vmatprep.subr.bf16.mxu0 %v1980
    %2473 = vmatpush1.bf16.msra.mxu0 %v1979
    %2474 = vmatprep.subr.bf16.mxu0 %v1987
    %2475 = vmatpush1.bf16.msra.mxu0 %v1986
    %2476 = vmatprep.subr.bf16.mxu0 %v1994
    %2477 = vmatpush1.bf16.msra.mxu0 %v1993
    %2478 = vmatprep.subr.bf16.mxu0 %v2001
    %2479 = vmatpush1.bf16.msra.mxu0 %v2000
    %2480 = vmatprep.subr.bf16.mxu0 %v2008
    %2481 = vmatpush1.bf16.msra.mxu0 %v2007
    %2482 = vmatprep.mubr.bf16.mxu0 %v590
    %2483 = vmatmul.mubr.bf16.gmra.mrb[0].mxu0 %v576
    %v2484 = vpop.f32.mrb[0].mxu0
    %v2485 = vadd.f32 %v2444, %v2484
    %v2486 = vpop.f32.mrb[0].mxu0
    %v2487 = vadd.f32 %v2446, %v2486
    %v2488 = vpop.f32.mrb[0].mxu0
    %v2489 = vpop.f32.mrb[0].mxu0
    %2490 = vdwg.mxu0
    %2491 = vmatprep.subr.bf16.mxu0 %v2015
    %2492 = vmatpush1.bf16.msra.mxu0 %v2014
    %2493 = vmatprep.subr.bf16.mxu0 0
    %2494 = vmatpush1.bf16.msra.mxu0 0
    %2495 = vmatprep.subr.bf16.mxu0 0
    %2496 = vmatpush1.bf16.msra.mxu0 0
    %2497 = vmatprep.subr.bf16.mxu0 0
    %2498 = vmatpush1.bf16.msra.mxu0 0
    %2499 = vmatprep.subr.bf16.mxu0 0
    %2500 = vmatpush1.bf16.msra.mxu0 0
    %2501 = vmatprep.subr.bf16.mxu0 0
    %2502 = vmatpush1.bf16.msra.mxu0 0
    %2503 = vmatprep.subr.bf16.mxu0 0
    %2504 = vmatpush1.bf16.msra.mxu0 0
    %2505 = vmatprep.subr.bf16.mxu0 0
    %2506 = vmatpush1.bf16.msra.mxu0 0
    %2507 = vmatprep.subr.bf16.mxu0 0
    %2508 = vmatpush1.bf16.msra.mxu0 0
    %2509 = vmatprep.subr.bf16.mxu0 0
    %2510 = vmatpush1.bf16.msra.mxu0 0
    %2511 = vmatprep.subr.bf16.mxu0 0
    %2512 = vmatpush1.bf16.msra.mxu0 0
    %2513 = vmatprep.subr.bf16.mxu0 0
    %2514 = vmatpush1.bf16.msra.mxu0 0
    %2515 = vmatprep.subr.bf16.mxu0 0
    %2516 = vmatpush1.bf16.msra.mxu0 0
    %2517 = vmatprep.subr.bf16.mxu0 0
    %2518 = vmatpush1.bf16.msra.mxu0 0
    %2519 = vmatprep.subr.bf16.mxu0 0
    %2520 = vmatpush1.bf16.msra.mxu0 0
    %2521 = vmatprep.subr.bf16.mxu0 0
    %2522 = vmatpush1.bf16.msra.mxu0 0
    %2523 = vmatprep.mubr.bf16.mxu0 0
    %2524 = vmatmul.mubr.bf16.gmra.mrb[0].mxu0 %v2366
    %v2525 = vpop.f32.mrb[0].mxu0
    %v2526 = vadd.f32 %v2485, %v2525
    %v2527 = vpop.f32.mrb[0].mxu0
    %v2528 = vadd.f32 %v2487, %v2527
    %v2529 = vpop.f32.mrb[0].mxu0
    %v2530 = vpop.f32.mrb[0].mxu0
    %2531 = vdwg.mxu0
    %2532 = vmatprep.subr.bf16.mxu0 %v1681
    %2533 = vmatpush1.bf16.msra.mxu0 %v1680
    %2534 = vmatprep.subr.bf16.mxu0 %v1688
    %2535 = vmatpush1.bf16.msra.mxu0 %v1687
    %2536 = vmatprep.subr.bf16.mxu0 %v1695
    %2537 = vmatpush1.bf16.msra.mxu0 %v1694
    %2538 = vmatprep.subr.bf16.mxu0 %v1702
    %2539 = vmatpush1.bf16.msra.mxu0 %v1701
    %2540 = vmatprep.subr.bf16.mxu0 %v1709
    %2541 = vmatpush1.bf16.msra.mxu0 %v1708
    %2542 = vmatprep.subr.bf16.mxu0 %v1716
    %2543 = vmatpush1.bf16.msra.mxu0 %v1715
    %2544 = vmatprep.subr.bf16.mxu0 %v1723
    %2545 = vmatpush1.bf16.msra.mxu0 %v1722
    %2546 = vmatprep.subr.bf16.mxu0 %v1730
    %2547 = vmatpush1.bf16.msra.mxu0 %v1729
    %2548 = vmatprep.subr.bf16.mxu0 %v1737
    %2549 = vmatpush1.bf16.msra.mxu0 %v1736
    %2550 = vmatprep.subr.bf16.mxu0 %v1744
    %2551 = vmatpush1.bf16.msra.mxu0 %v1743
    %2552 = vmatprep.subr.bf16.mxu0 %v1751
    %2553 = vmatpush1.bf16.msra.mxu0 %v1750
    %2554 = vmatprep.subr.bf16.mxu0 %v1758
    %2555 = vmatpush1.bf16.msra.mxu0 %v1757
    %2556 = vmatprep.subr.bf16.mxu0 %v1765
    %2557 = vmatpush1.bf16.msra.mxu0 %v1764
    %2558 = vmatprep.subr.bf16.mxu0 %v1772
    %2559 = vmatpush1.bf16.msra.mxu0 %v1771
    %2560 = vmatprep.subr.bf16.mxu0 %v1779
    %2561 = vmatpush1.bf16.msra.mxu0 %v1778
    %2562 = vmatprep.subr.bf16.mxu0 %v1786
    %2563 = vmatpush1.bf16.msra.mxu0 %v1785
    %2564 = vmatprep.mubr.bf16.mxu0 %v583
    %2565 = vmatmul.mubr.bf16.gmra.mrb[0].mxu0 %v569
    %v2566 = vpop.f32.mrb[0].mxu0
    %v2567 = vadd.f32 %v521, %v2566
    %v2568 = vpop.f32.mrb[0].mxu0
    %v2569 = vadd.f32 %v525, %v2568
    %v2570 = vpop.f32.mrb[0].mxu0
    %v2571 = vpop.f32.mrb[0].mxu0
    %2572 = vdwg.mxu0
    %2573 = vmatprep.subr.bf16.mxu0 %v1793
    %2574 = vmatpush1.bf16.msra.mxu0 %v1792
    %2575 = vmatprep.subr.bf16.mxu0 %v1800
    %2576 = vmatpush1.bf16.msra.mxu0 %v1799
    %2577 = vmatprep.subr.bf16.mxu0 %v1807
    %2578 = vmatpush1.bf16.msra.mxu0 %v1806
    %2579 = vmatprep.subr.bf16.mxu0 %v1814
    %2580 = vmatpush1.bf16.msra.mxu0 %v1813
    %2581 = vmatprep.subr.bf16.mxu0 %v1821
    %2582 = vmatpush1.bf16.msra.mxu0 %v1820
    %2583 = vmatprep.subr.bf16.mxu0 %v1828
    %2584 = vmatpush1.bf16.msra.mxu0 %v1827
    %2585 = vmatprep.subr.bf16.mxu0 %v1835
    %2586 = vmatpush1.bf16.msra.mxu0 %v1834
    %2587 = vmatprep.subr.bf16.mxu0 %v1842
    %2588 = vmatpush1.bf16.msra.mxu0 %v1841
    %2589 = vmatprep.subr.bf16.mxu0 %v1849
    %2590 = vmatpush1.bf16.msra.mxu0 %v1848
    %2591 = vmatprep.subr.bf16.mxu0 %v1856
    %2592 = vmatpush1.bf16.msra.mxu0 %v1855
    %2593 = vmatprep.subr.bf16.mxu0 %v1863
    %2594 = vmatpush1.bf16.msra.mxu0 %v1862
    %2595 = vmatprep.subr.bf16.mxu0 %v1870
    %2596 = vmatpush1.bf16.msra.mxu0 %v1869
    %2597 = vmatprep.subr.bf16.mxu0 %v1877
    %2598 = vmatpush1.bf16.msra.mxu0 %v1876
    %2599 = vmatprep.subr.bf16.mxu0 %v1884
    %2600 = vmatpush1.bf16.msra.mxu0 %v1883
    %2601 = vmatprep.subr.bf16.mxu0 %v1891
    %2602 = vmatpush1.bf16.msra.mxu0 %v1890
    %2603 = vmatprep.subr.bf16.mxu0 %v1898
    %2604 = vmatpush1.bf16.msra.mxu0 %v1897
    %2605 = vmatprep.mubr.bf16.mxu0 %v593
    %2606 = vmatmul.mubr.bf16.gmra.mrb[0].mxu0 %v591
    %v2607 = vpop.f32.mrb[0].mxu0
    %v2608 = vadd.f32 %v2567, %v2607
    %v2609 = vpop.f32.mrb[0].mxu0
    %v2610 = vadd.f32 %v2569, %v2609
    %v2611 = vpop.f32.mrb[0].mxu0
    %v2612 = vpop.f32.mrb[0].mxu0
    %2613 = vdwg.mxu0
    %2614 = vmatprep.subr.bf16.mxu0 %v1905
    %2615 = vmatpush1.bf16.msra.mxu0 %v1904
    %2616 = vmatprep.subr.bf16.mxu0 %v1912
    %2617 = vmatpush1.bf16.msra.mxu0 %v1911
    %2618 = vmatprep.subr.bf16.mxu0 %v1919
    %2619 = vmatpush1.bf16.msra.mxu0 %v1918
    %2620 = vmatprep.subr.bf16.mxu0 %v1926
    %2621 = vmatpush1.bf16.msra.mxu0 %v1925
    %2622 = vmatprep.subr.bf16.mxu0 %v1933
    %2623 = vmatpush1.bf16.msra.mxu0 %v1932
    %2624 = vmatprep.subr.bf16.mxu0 %v1940
    %2625 = vmatpush1.bf16.msra.mxu0 %v1939
    %2626 = vmatprep.subr.bf16.mxu0 %v1947
    %2627 = vmatpush1.bf16.msra.mxu0 %v1946
    %2628 = vmatprep.subr.bf16.mxu0 %v1954
    %2629 = vmatpush1.bf16.msra.mxu0 %v1953
    %2630 = vmatprep.subr.bf16.mxu0 %v1961
    %2631 = vmatpush1.bf16.msra.mxu0 %v1960
    %2632 = vmatprep.subr.bf16.mxu0 %v1968
    %2633 = vmatpush1.bf16.msra.mxu0 %v1967
    %2634 = vmatprep.subr.bf16.mxu0 %v1975
    %2635 = vmatpush1.bf16.msra.mxu0 %v1974
    %2636 = vmatprep.subr.bf16.mxu0 %v1982
    %2637 = vmatpush1.bf16.msra.mxu0 %v1981
    %2638 = vmatprep.subr.bf16.mxu0 %v1989
    %2639 = vmatpush1.bf16.msra.mxu0 %v1988
    %2640 = vmatprep.subr.bf16.mxu0 %v1996
    %2641 = vmatpush1.bf16.msra.mxu0 %v1995
    %2642 = vmatprep.subr.bf16.mxu0 %v2003
    %2643 = vmatpush1.bf16.msra.mxu0 %v2002
    %2644 = vmatprep.subr.bf16.mxu0 %v2010
    %2645 = vmatpush1.bf16.msra.mxu0 %v2009
    %2646 = vmatprep.mubr.bf16.mxu0 %v590
    %2647 = vmatmul.mubr.bf16.gmra.mrb[0].mxu0 %v576
    %v2648 = vpop.f32.mrb[0].mxu0
    %v2649 = vadd.f32 %v2608, %v2648
    %v2650 = vpop.f32.mrb[0].mxu0
    %v2651 = vadd.f32 %v2610, %v2650
    %v2652 = vpop.f32.mrb[0].mxu0
    %v2653 = vpop.f32.mrb[0].mxu0
    %2654 = vdwg.mxu0
    %2655 = vmatprep.subr.bf16.mxu0 %v2017
    %2656 = vmatpush1.bf16.msra.mxu0 %v2016
    %2657 = vmatprep.subr.bf16.mxu0 0
    %2658 = vmatpush1.bf16.msra.mxu0 0
    %2659 = vmatprep.subr.bf16.mxu0 0
    %2660 = vmatpush1.bf16.msra.mxu0 0
    %2661 = vmatprep.subr.bf16.mxu0 0
    %2662 = vmatpush1.bf16.msra.mxu0 0
    %2663 = vmatprep.subr.bf16.mxu0 0
    %2664 = vmatpush1.bf16.msra.mxu0 0
    %2665 = vmatprep.subr.bf16.mxu0 0
    %2666 = vmatpush1.bf16.msra.mxu0 0
    %2667 = vmatprep.subr.bf16.mxu0 0
    %2668 = vmatpush1.bf16.msra.mxu0 0
    %2669 = vmatprep.subr.bf16.mxu0 0
    %2670 = vmatpush1.bf16.msra.mxu0 0
    %2671 = vmatprep.subr.bf16.mxu0 0
    %2672 = vmatpush1.bf16.msra.mxu0 0
    %2673 = vmatprep.subr.bf16.mxu0 0
    %2674 = vmatpush1.bf16.msra.mxu0 0
    %2675 = vmatprep.subr.bf16.mxu0 0
    %2676 = vmatpush1.bf16.msra.mxu0 0
    %2677 = vmatprep.subr.bf16.mxu0 0
    %2678 = vmatpush1.bf16.msra.mxu0 0
    %2679 = vmatprep.subr.bf16.mxu0 0
    %2680 = vmatpush1.bf16.msra.mxu0 0
    %2681 = vmatprep.subr.bf16.mxu0 0
    %2682 = vmatpush1.bf16.msra.mxu0 0
    %2683 = vmatprep.subr.bf16.mxu0 0
    %2684 = vmatpush1.bf16.msra.mxu0 0
    %2685 = vmatprep.subr.bf16.mxu0 0
    %2686 = vmatpush1.bf16.msra.mxu0 0
    %2687 = vmatprep.mubr.bf16.mxu0 0
    %2688 = vmatmul.mubr.bf16.gmra.mrb[0].mxu0 %v2366
    %v2689 = vpop.f32.mrb[0].mxu0
    %v2690 = vadd.f32 %v2649, %v2689
    %v2691 = vpop.f32.mrb[0].mxu0
    %v2692 = vadd.f32 %v2651, %v2691
    %v2693 = vpop.f32.mrb[0].mxu0
    %v2694 = vpop.f32.mrb[0].mxu0
    %2695 = vdwg.mxu0
    %2696 = vmatprep.subr.bf16.mxu0 %v1683
    %2697 = vmatpush1.bf16.msra.mxu0 %v1682
    %2698 = vmatprep.subr.bf16.mxu0 %v1690
    %2699 = vmatpush1.bf16.msra.mxu0 %v1689
    %2700 = vmatprep.subr.bf16.mxu0 %v1697
    %2701 = vmatpush1.bf16.msra.mxu0 %v1696
    %2702 = vmatprep.subr.bf16.mxu0 %v1704
    %2703 = vmatpush1.bf16.msra.mxu0 %v1703
    %2704 = vmatprep.subr.bf16.mxu0 %v1711
    %2705 = vmatpush1.bf16.msra.mxu0 %v1710
    %2706 = vmatprep.subr.bf16.mxu0 %v1718
    %2707 = vmatpush1.bf16.msra.mxu0 %v1717
    %2708 = vmatprep.subr.bf16.mxu0 %v1725
    %2709 = vmatpush1.bf16.msra.mxu0 %v1724
    %2710 = vmatprep.subr.bf16.mxu0 %v1732
    %2711 = vmatpush1.bf16.msra.mxu0 %v1731
    %2712 = vmatprep.subr.bf16.mxu0 %v1739
    %2713 = vmatpush1.bf16.msra.mxu0 %v1738
    %2714 = vmatprep.subr.bf16.mxu0 %v1746
    %2715 = vmatpush1.bf16.msra.mxu0 %v1745
    %2716 = vmatprep.subr.bf16.mxu0 %v1753
    %2717 = vmatpush1.bf16.msra.mxu0 %v1752
    %2718 = vmatprep.subr.bf16.mxu0 %v1760
    %2719 = vmatpush1.bf16.msra.mxu0 %v1759
    %2720 = vmatprep.subr.bf16.mxu0 %v1767
    %2721 = vmatpush1.bf16.msra.mxu0 %v1766
    %2722 = vmatprep.subr.bf16.mxu0 %v1774
    %2723 = vmatpush1.bf16.msra.mxu0 %v1773
    %2724 = vmatprep.subr.bf16.mxu0 %v1781
    %2725 = vmatpush1.bf16.msra.mxu0 %v1780
    %2726 = vmatprep.subr.bf16.mxu0 %v1788
    %2727 = vmatpush1.bf16.msra.mxu0 %v1787
    %2728 = vmatprep.mubr.bf16.mxu0 %v583
    %2729 = vmatmul.mubr.bf16.gmra.mrb[0].mxu0 %v569
    %v2730 = vpop.f32.mrb[0].mxu0
    %v2731 = vadd.f32 %v529, %v2730
    %v2732 = vpop.f32.mrb[0].mxu0
    %v2733 = vadd.f32 %v533, %v2732
    %v2734 = vpop.f32.mrb[0].mxu0
    %v2735 = vpop.f32.mrb[0].mxu0
    %2736 = vdwg.mxu0
    %2737 = vmatprep.subr.bf16.mxu0 %v1795
    %2738 = vmatpush1.bf16.msra.mxu0 %v1794
    %2739 = vmatprep.subr.bf16.mxu0 %v1802
    %2740 = vmatpush1.bf16.msra.mxu0 %v1801
    %2741 = vmatprep.subr.bf16.mxu0 %v1809
    %2742 = vmatpush1.bf16.msra.mxu0 %v1808
    %2743 = vmatprep.subr.bf16.mxu0 %v1816
    %2744 = vmatpush1.bf16.msra.mxu0 %v1815
    %2745 = vmatprep.subr.bf16.mxu0 %v1823
    %2746 = vmatpush1.bf16.msra.mxu0 %v1822
    %2747 = vmatprep.subr.bf16.mxu0 %v1830
    %2748 = vmatpush1.bf16.msra.mxu0 %v1829
    %2749 = vmatprep.subr.bf16.mxu0 %v1837
    %2750 = vmatpush1.bf16.msra.mxu0 %v1836
    %2751 = vmatprep.subr.bf16.mxu0 %v1844
    %2752 = vmatpush1.bf16.msra.mxu0 %v1843
    %2753 = vmatprep.subr.bf16.mxu0 %v1851
    %2754 = vmatpush1.bf16.msra.mxu0 %v1850
    %2755 = vmatprep.subr.bf16.mxu0 %v1858
    %2756 = vmatpush1.bf16.msra.mxu0 %v1857
    %2757 = vmatprep.subr.bf16.mxu0 %v1865
    %2758 = vmatpush1.bf16.msra.mxu0 %v1864
    %2759 = vmatprep.subr.bf16.mxu0 %v1872
    %2760 = vmatpush1.bf16.msra.mxu0 %v1871
    %2761 = vmatprep.subr.bf16.mxu0 %v1879
    %2762 = vmatpush1.bf16.msra.mxu0 %v1878
    %2763 = vmatprep.subr.bf16.mxu0 %v1886
    %2764 = vmatpush1.bf16.msra.mxu0 %v1885
    %2765 = vmatprep.subr.bf16.mxu0 %v1893
    %2766 = vmatpush1.bf16.msra.mxu0 %v1892
    %2767 = vmatprep.subr.bf16.mxu0 %v1900
    %2768 = vmatpush1.bf16.msra.mxu0 %v1899
    %2769 = vmatprep.mubr.bf16.mxu0 %v593
    %2770 = vmatmul.mubr.bf16.gmra.mrb[0].mxu0 %v591
    %v2771 = vpop.f32.mrb[0].mxu0
    %v2772 = vadd.f32 %v2731, %v2771
    %v2773 = vpop.f32.mrb[0].mxu0
    %v2774 = vadd.f32 %v2733, %v2773
    %v2775 = vpop.f32.mrb[0].mxu0
    %v2776 = vpop.f32.mrb[0].mxu0
    %2777 = vdwg.mxu0
    %2778 = vmatprep.subr.bf16.mxu0 %v1907
    %2779 = vmatpush1.bf16.msra.mxu0 %v1906
    %2780 = vmatprep.subr.bf16.mxu0 %v1914
    %2781 = vmatpush1.bf16.msra.mxu0 %v1913
    %2782 = vmatprep.subr.bf16.mxu0 %v1921
    %2783 = vmatpush1.bf16.msra.mxu0 %v1920
    %2784 = vmatprep.subr.bf16.mxu0 %v1928
    %2785 = vmatpush1.bf16.msra.mxu0 %v1927
    %2786 = vmatprep.subr.bf16.mxu0 %v1935
    %2787 = vmatpush1.bf16.msra.mxu0 %v1934
    %2788 = vmatprep.subr.bf16.mxu0 %v1942
    %2789 = vmatpush1.bf16.msra.mxu0 %v1941
    %2790 = vmatprep.subr.bf16.mxu0 %v1949
    %2791 = vmatpush1.bf16.msra.mxu0 %v1948
    %2792 = vmatprep.subr.bf16.mxu0 %v1956
    %2793 = vmatpush1.bf16.msra.mxu0 %v1955
    %2794 = vmatprep.subr.bf16.mxu0 %v1963
    %2795 = vmatpush1.bf16.msra.mxu0 %v1962
    %2796 = vmatprep.subr.bf16.mxu0 %v1970
    %2797 = vmatpush1.bf16.msra.mxu0 %v1969
    %2798 = vmatprep.subr.bf16.mxu0 %v1977
    %2799 = vmatpush1.bf16.msra.mxu0 %v1976
    %2800 = vmatprep.subr.bf16.mxu0 %v1984
    %2801 = vmatpush1.bf16.msra.mxu0 %v1983
    %2802 = vmatprep.subr.bf16.mxu0 %v1991
    %2803 = vmatpush1.bf16.msra.mxu0 %v1990
    %2804 = vmatprep.subr.bf16.mxu0 %v1998
    %2805 = vmatpush1.bf16.msra.mxu0 %v1997
    %2806 = vmatprep.subr.bf16.mxu0 %v2005
    %2807 = vmatpush1.bf16.msra.mxu0 %v2004
    %2808 = vmatprep.subr.bf16.mxu0 %v2012
    %2809 = vmatpush1.bf16.msra.mxu0 %v2011
    %2810 = vmatprep.mubr.bf16.mxu0 %v590
    %2811 = vmatmul.mubr.bf16.gmra.mrb[0].mxu0 %v576
    %v2812 = vpop.f32.mrb[0].mxu0
    %v2813 = vadd.f32 %v2772, %v2812
    %v2814 = vpop.f32.mrb[0].mxu0
    %v2815 = vadd.f32 %v2774, %v2814
    %v2816 = vpop.f32.mrb[0].mxu0
    %v2817 = vpop.f32.mrb[0].mxu0
    %2818 = vdwg.mxu0
    %2819 = vmatprep.subr.bf16.mxu0 %v2019
    %2820 = vmatpush1.bf16.msra.mxu0 %v2018
    %2821 = vmatprep.subr.bf16.mxu0 0
    %2822 = vmatpush1.bf16.msra.mxu0 0
    %2823 = vmatprep.subr.bf16.mxu0 0
    %2824 = vmatpush1.bf16.msra.mxu0 0
    %2825 = vmatprep.subr.bf16.mxu0 0
    %2826 = vmatpush1.bf16.msra.mxu0 0
    %2827 = vmatprep.subr.bf16.mxu0 0
    %2828 = vmatpush1.bf16.msra.mxu0 0
    %2829 = vmatprep.subr.bf16.mxu0 0
    %2830 = vmatpush1.bf16.msra.mxu0 0
    %2831 = vmatprep.subr.bf16.mxu0 0
    %2832 = vmatpush1.bf16.msra.mxu0 0
    %2833 = vmatprep.subr.bf16.mxu0 0
    %2834 = vmatpush1.bf16.msra.mxu0 0
    %2835 = vmatprep.subr.bf16.mxu0 0
    %2836 = vmatpush1.bf16.msra.mxu0 0
    %2837 = vmatprep.subr.bf16.mxu0 0
    %2838 = vmatpush1.bf16.msra.mxu0 0
    %2839 = vmatprep.subr.bf16.mxu0 0
    %2840 = vmatpush1.bf16.msra.mxu0 0
    %2841 = vmatprep.subr.bf16.mxu0 0
    %2842 = vmatpush1.bf16.msra.mxu0 0
    %2843 = vmatprep.subr.bf16.mxu0 0
    %2844 = vmatpush1.bf16.msra.mxu0 0
    %2845 = vmatprep.subr.bf16.mxu0 0
    %2846 = vmatpush1.bf16.msra.mxu0 0
    %2847 = vmatprep.subr.bf16.mxu0 0
    %2848 = vmatpush1.bf16.msra.mxu0 0
    %2849 = vmatprep.subr.bf16.mxu0 0
    %2850 = vmatpush1.bf16.msra.mxu0 0
    %2851 = vmatprep.mubr.bf16.mxu0 0
    %2852 = vmatmul.mubr.bf16.gmra.mrb[0].mxu0 %v2366
    %v2853 = vpop.f32.mrb[0].mxu0
    %v2854 = vadd.f32 %v2813, %v2853
    %v2855 = vpop.f32.mrb[0].mxu0
    %v2856 = vadd.f32 %v2815, %v2855
    %v2857 = vpop.f32.mrb[0].mxu0
    %v2858 = vpop.f32.mrb[0].mxu0
    %2859 = vdwg.mxu0
    %2860 = vmatprep.subr.bf16.mxu0 0
    %2861 = vmatpush1.bf16.msra.mxu0 %v1684
    %2862 = vmatprep.subr.bf16.mxu0 0
    %2863 = vmatpush1.bf16.msra.mxu0 %v1691
    %2864 = vmatprep.subr.bf16.mxu0 0
    %2865 = vmatpush1.bf16.msra.mxu0 %v1698
    %2866 = vmatprep.subr.bf16.mxu0 0
    %2867 = vmatpush1.bf16.msra.mxu0 %v1705
    %2868 = vmatprep.subr.bf16.mxu0 0
    %2869 = vmatpush1.bf16.msra.mxu0 %v1712
    %2870 = vmatprep.subr.bf16.mxu0 0
    %2871 = vmatpush1.bf16.msra.mxu0 %v1719
    %2872 = vmatprep.subr.bf16.mxu0 0
    %2873 = vmatpush1.bf16.msra.mxu0 %v1726
    %2874 = vmatprep.subr.bf16.mxu0 0
    %2875 = vmatpush1.bf16.msra.mxu0 %v1733
    %2876 = vmatprep.subr.bf16.mxu0 0
    %2877 = vmatpush1.bf16.msra.mxu0 %v1740
    %2878 = vmatprep.subr.bf16.mxu0 0
    %2879 = vmatpush1.bf16.msra.mxu0 %v1747
    %2880 = vmatprep.subr.bf16.mxu0 0
    %2881 = vmatpush1.bf16.msra.mxu0 %v1754
    %2882 = vmatprep.subr.bf16.mxu0 0
    %2883 = vmatpush1.bf16.msra.mxu0 %v1761
    %2884 = vmatprep.subr.bf16.mxu0 0
    %2885 = vmatpush1.bf16.msra.mxu0 %v1768
    %2886 = vmatprep.subr.bf16.mxu0 0
    %2887 = vmatpush1.bf16.msra.mxu0 %v1775
    %2888 = vmatprep.subr.bf16.mxu0 0
    %2889 = vmatpush1.bf16.msra.mxu0 %v1782
    %2890 = vmatprep.subr.bf16.mxu0 0
    %2891 = vmatpush1.bf16.msra.mxu0 %v1789
    %2892 = vmatprep.mubr.bf16.mxu0 %v583
    %2893 = vmatmul.mubr.bf16.gmra.mrb[0].mxu0 %v569
    %v2894 = vpop.f32.mrb[0].mxu0
    %v2895 = vadd.f32 %v537, %v2894
    %v2896 = vpop.f32.mrb[0].mxu0
    %v2897 = vpop.f32.mrb[0].mxu0
    %v2898 = vpop.f32.mrb[0].mxu0
    %2899 = vdwg.mxu0
    %2900 = vmatprep.subr.bf16.mxu0 0
    %2901 = vmatpush1.bf16.msra.mxu0 %v1796
    %2902 = vmatprep.subr.bf16.mxu0 0
    %2903 = vmatpush1.bf16.msra.mxu0 %v1803
    %2904 = vmatprep.subr.bf16.mxu0 0
    %2905 = vmatpush1.bf16.msra.mxu0 %v1810
    %2906 = vmatprep.subr.bf16.mxu0 0
    %2907 = vmatpush1.bf16.msra.mxu0 %v1817
    %2908 = vmatprep.subr.bf16.mxu0 0
    %2909 = vmatpush1.bf16.msra.mxu0 %v1824
    %2910 = vmatprep.subr.bf16.mxu0 0
    %2911 = vmatpush1.bf16.msra.mxu0 %v1831
    %2912 = vmatprep.subr.bf16.mxu0 0
    %2913 = vmatpush1.bf16.msra.mxu0 %v1838
    %2914 = vmatprep.subr.bf16.mxu0 0
    %2915 = vmatpush1.bf16.msra.mxu0 %v1845
    %2916 = vmatprep.subr.bf16.mxu0 0
    %2917 = vmatpush1.bf16.msra.mxu0 %v1852
    %2918 = vmatprep.subr.bf16.mxu0 0
    %2919 = vmatpush1.bf16.msra.mxu0 %v1859
    %2920 = vmatprep.subr.bf16.mxu0 0
    %2921 = vmatpush1.bf16.msra.mxu0 %v1866
    %2922 = vmatprep.subr.bf16.mxu0 0
    %2923 = vmatpush1.bf16.msra.mxu0 %v1873
    %2924 = vmatprep.subr.bf16.mxu0 0
    %2925 = vmatpush1.bf16.msra.mxu0 %v1880
    %2926 = vmatprep.subr.bf16.mxu0 0
    %2927 = vmatpush1.bf16.msra.mxu0 %v1887
    %2928 = vmatprep.subr.bf16.mxu0 0
    %2929 = vmatpush1.bf16.msra.mxu0 %v1894
    %2930 = vmatprep.subr.bf16.mxu0 0
    %2931 = vmatpush1.bf16.msra.mxu0 %v1901
    %2932 = vmatprep.mubr.bf16.mxu0 %v593
    %2933 = vmatmul.mubr.bf16.gmra.mrb[0].mxu0 %v591
    %v2934 = vpop.f32.mrb[0].mxu0
    %v2935 = vadd.f32 %v2895, %v2934
    %v2936 = vpop.f32.mrb[0].mxu0
    %v2937 = vpop.f32.mrb[0].mxu0
    %v2938 = vpop.f32.mrb[0].mxu0
    %2939 = vdwg.mxu0
    %2940 = vmatprep.subr.bf16.mxu0 0
    %2941 = vmatpush1.bf16.msra.mxu0 %v1908
    %2942 = vmatprep.subr.bf16.mxu0 0
    %2943 = vmatpush1.bf16.msra.mxu0 %v1915
    %2944 = vmatprep.subr.bf16.mxu0 0
    %2945 = vmatpush1.bf16.msra.mxu0 %v1922
    %2946 = vmatprep.subr.bf16.mxu0 0
    %2947 = vmatpush1.bf16.msra.mxu0 %v1929
    %2948 = vmatprep.subr.bf16.mxu0 0
    %2949 = vmatpush1.bf16.msra.mxu0 %v1936
    %2950 = vmatprep.subr.bf16.mxu0 0
    %2951 = vmatpush1.bf16.msra.mxu0 %v1943
    %2952 = vmatprep.subr.bf16.mxu0 0
    %2953 = vmatpush1.bf16.msra.mxu0 %v1950
    %2954 = vmatprep.subr.bf16.mxu0 0
    %2955 = vmatpush1.bf16.msra.mxu0 %v1957
    %2956 = vmatprep.subr.bf16.mxu0 0
    %2957 = vmatpush1.bf16.msra.mxu0 %v1964
    %2958 = vmatprep.subr.bf16.mxu0 0
    %2959 = vmatpush1.bf16.msra.mxu0 %v1971
    %2960 = vmatprep.subr.bf16.mxu0 0
    %2961 = vmatpush1.bf16.msra.mxu0 %v1978
    %2962 = vmatprep.subr.bf16.mxu0 0
    %2963 = vmatpush1.bf16.msra.mxu0 %v1985
    %2964 = vmatprep.subr.bf16.mxu0 0
    %2965 = vmatpush1.bf16.msra.mxu0 %v1992
    %2966 = vmatprep.subr.bf16.mxu0 0
    %2967 = vmatpush1.bf16.msra.mxu0 %v1999
    %2968 = vmatprep.subr.bf16.mxu0 0
    %2969 = vmatpush1.bf16.msra.mxu0 %v2006
    %2970 = vmatprep.subr.bf16.mxu0 0
    %2971 = vmatpush1.bf16.msra.mxu0 %v2013
    %2972 = vmatprep.mubr.bf16.mxu0 %v590
    %2973 = vmatmul.mubr.bf16.gmra.mrb[0].mxu0 %v576
    %v2974 = vpop.f32.mrb[0].mxu0
    %v2975 = vadd.f32 %v2935, %v2974
    %v2976 = vpop.f32.mrb[0].mxu0
    %v2977 = vpop.f32.mrb[0].mxu0
    %v2978 = vpop.f32.mrb[0].mxu0
    %2979 = vdwg.mxu0
    %2980 = vmatprep.subr.bf16.mxu0 0
    %2981 = vmatpush1.bf16.msra.mxu0 %v2020
    %2982 = vmatprep.subr.bf16.mxu0 0
    %2983 = vmatpush1.bf16.msra.mxu0 0
    %2984 = vmatprep.subr.bf16.mxu0 0
    %2985 = vmatpush1.bf16.msra.mxu0 0
    %2986 = vmatprep.subr.bf16.mxu0 0
    %2987 = vmatpush1.bf16.msra.mxu0 0
    %2988 = vmatprep.subr.bf16.mxu0 0
    %2989 = vmatpush1.bf16.msra.mxu0 0
    %2990 = vmatprep.subr.bf16.mxu0 0
    %2991 = vmatpush1.bf16.msra.mxu0 0
    %2992 = vmatprep.subr.bf16.mxu0 0
    %2993 = vmatpush1.bf16.msra.mxu0 0
    %2994 = vmatprep.subr.bf16.mxu0 0
    %2995 = vmatpush1.bf16.msra.mxu0 0
    %2996 = vmatprep.subr.bf16.mxu0 0
    %2997 = vmatpush1.bf16.msra.mxu0 0
    %2998 = vmatprep.subr.bf16.mxu0 0
    %2999 = vmatpush1.bf16.msra.mxu0 0
    %3000 = vmatprep.subr.bf16.mxu0 0
    %3001 = vmatpush1.bf16.msra.mxu0 0
    %3002 = vmatprep.subr.bf16.mxu0 0
    %3003 = vmatpush1.bf16.msra.mxu0 0
    %3004 = vmatprep.subr.bf16.mxu0 0
    %3005 = vmatpush1.bf16.msra.mxu0 0
    %3006 = vmatprep.subr.bf16.mxu0 0
    %3007 = vmatpush1.bf16.msra.mxu0 0
    %3008 = vmatprep.subr.bf16.mxu0 0
    %3009 = vmatpush1.bf16.msra.mxu0 0
    %3010 = vmatprep.subr.bf16.mxu0 0
    %3011 = vmatpush1.bf16.msra.mxu0 0
    %3012 = vmatprep.mubr.bf16.mxu0 0
    %3013 = vmatmul.mubr.bf16.gmra.mrb[0].mxu0 %v2366
    %v3014 = vpop.f32.mrb[0].mxu0
    %v3015 = vadd.f32 %v2975, %v3014
    %v3016 = vpop.f32.mrb[0].mxu0
    %v3017 = vpop.f32.mrb[0].mxu0
    %v3018 = vpop.f32.mrb[0].mxu0
    %3019 = vdwg.mxu0
    %v3020 = vmax.f32 %v2526, 0.0
    %v3021 = vmax.f32 %v2528, 0.0
    %v3022 = vmax.f32 %v2690, 0.0
    %v3023 = vmax.f32 %v2692, 0.0
    %v3024 = vmax.f32 %v2854, 0.0
    %v3025 = vmax.f32 %v2856, 0.0
    %v3026 = vmax.f32 %v3015, 0.0
    %v3027 = vpack.c.bf16 %v3020, %v3020
    %v3028 = vpack.c.bf16 %v3021, %v3021
    %v3029 = vpack.c.bf16 %v3022, %v3022
    %v3030 = vpack.c.bf16 %v3023, %v3023
    %v3031 = vpack.c.bf16 %v3024, %v3024
    %v3032 = vpack.c.bf16 %v3025, %v3025
    %v3033 = vpack.c.bf16 %v3026, %v3026
    %v3034 = vld [vmem:[#allocation8] sm:$0xff]
    %v3035 = vld [vmem:[#allocation8 + $0x8] sm:$0xff]
    %v3036 = vld [vmem:[#allocation8 + $0x10] sm:$0xff]
    %v3037 = vld [vmem:[#allocation8 + $0x18] sm:$0xff]
    %v3038 = vld [vmem:[#allocation8 + $0x20] sm:$0xff]
    %v3039 = vld [vmem:[#allocation8 + $0x28] sm:$0xff]
    %v3040 = vld [vmem:[#allocation8 + $0x30] sm:$0xff]
    %v3041 = vld [vmem:[#allocation8 + $0x38] sm:$0xff]
    %v3042 = vld [vmem:[#allocation8 + $0x40] sm:$0xff]
    %v3043 = vld [vmem:[#allocation8 + $0x48] sm:$0xff]
    %v3044 = vld [vmem:[#allocation8 + $0x50] sm:$0xff]
    %v3045 = vld [vmem:[#allocation8 + $0x58] sm:$0xff]
    %v3046 = vld [vmem:[#allocation8 + $0x60] sm:$0xff]
    %v3047 = vld [vmem:[#allocation8 + $0x68] sm:$0xff]
    %v3048 = vld [vmem:[#allocation8 + $0x70] sm:$0xff]
    %v3049 = vld [vmem:[#allocation8 + $0x78] sm:$0xff]
    %v3050 = vld [vmem:[#allocation8 + $0x80] sm:$0xff]
    %v3051 = vld [vmem:[#allocation8 + $0x88] sm:$0xff]
    %v3052 = vld [vmem:[#allocation8 + $0x90] sm:$0xff]
    %v3053 = vld [vmem:[#allocation8 + $0x98] sm:$0xff]
    %v3054 = vld [vmem:[#allocation8 + $0xa0] sm:$0xff]
    %v3055 = vld [vmem:[#allocation8 + $0xa8] sm:$0xff]
    %v3056 = vld [vmem:[#allocation8 + $0xb0] sm:$0xff]
    %v3057 = vld [vmem:[#allocation8 + $0xb8] sm:$0xff]
    %v3058 = vld [vmem:[#allocation8 + $0xc0] sm:$0xff]
    %v3059 = vld [vmem:[#allocation8 + $0xc8] sm:$0xff]
    %v3060 = vld [vmem:[#allocation8 + $0xd0] sm:$0xff]
    %v3061 = vld [vmem:[#allocation8 + $0xd8] sm:$0xff]
    %v3062 = vld [vmem:[#allocation8 + $0xe0] sm:$0xff]
    %v3063 = vld [vmem:[#allocation8 + $0xe8] sm:$0xff]
    %v3064 = vld [vmem:[#allocation8 + $0xf0] sm:$0xff]
    %v3065 = vld [vmem:[#allocation8 + $0xf8] sm:$0xff]
    %v3066 = vld [vmem:[#allocation8 + $0x100] sm:$0xff]
    %v3067 = vld [vmem:[#allocation8 + $0x108] sm:$0xff]
    %v3068 = vld [vmem:[#allocation8 + $0x110] sm:$0xff]
    %v3069 = vld [vmem:[#allocation8 + $0x118] sm:$0xff]
    %v3070 = vld [vmem:[#allocation8 + $0x120] sm:$0xff]
    %v3071 = vld [vmem:[#allocation8 + $0x128] sm:$0xff]
    %v3072 = vld [vmem:[#allocation8 + $0x130] sm:$0xff]
    %v3073 = vld [vmem:[#allocation8 + $0x138] sm:$0xff]
    %v3074 = vld [vmem:[#allocation8 + $0x140] sm:$0xff]
    %v3075 = vld [vmem:[#allocation8 + $0x148] sm:$0xff]
    %v3076 = vld [vmem:[#allocation8 + $0x150] sm:$0xff]
    %v3077 = vld [vmem:[#allocation8 + $0x158] sm:$0xff]
    %v3078 = vld [vmem:[#allocation8 + $0x160] sm:$0xff]
    %v3079 = vld [vmem:[#allocation8 + $0x168] sm:$0xff]
    %v3080 = vld [vmem:[#allocation8 + $0x170] sm:$0xff]
    %v3081 = vld [vmem:[#allocation8 + $0x178] sm:$0xff]
    %v3082 = vld [vmem:[#allocation8 + $0x180] sm:$0xff]
    %v3083 = vld [vmem:[#allocation8 + $0x188] sm:$0xff]
    %v3084 = vld [vmem:[#allocation8 + $0x190] sm:$0xff]
    %v3085 = vld [vmem:[#allocation8 + $0x198] sm:$0xff]
    %v3086 = vld [vmem:[#allocation8 + $0x1a0] sm:$0xff]
    %v3087 = vld [vmem:[#allocation8 + $0x1a8] sm:$0xff]
    %v3088 = vld [vmem:[#allocation8 + $0x1b0] sm:$0xff]
    %v3089 = vld [vmem:[#allocation8 + $0x1b8] sm:$0xff]
    %v3090 = vld [vmem:[#allocation8 + $0x1c0] sm:$0xff]
    %v3091 = vld [vmem:[#allocation8 + $0x1c8] sm:$0xff]
    %v3092 = vld [vmem:[#allocation8 + $0x1d0] sm:$0xff]
    %v3093 = vld [vmem:[#allocation8 + $0x1d8] sm:$0xff]
    %v3094 = vld [vmem:[#allocation8 + $0x1e0] sm:$0xff]
    %v3095 = vld [vmem:[#allocation8 + $0x1e8] sm:$0xff]
    %v3096 = vld [vmem:[#allocation8 + $0x1f0] sm:$0xff]
    %v3097 = vld [vmem:[#allocation8 + $0x1f8] sm:$0xff]
    %v3098 = vld [vmem:[#allocation8 + $0x200] sm:$0xff]
    %v3099 = vld [vmem:[#allocation8 + $0x208] sm:$0xff]
    %v3100 = vld [vmem:[#allocation8 + $0x210] sm:$0xff]
    %v3101 = vld [vmem:[#allocation8 + $0x218] sm:$0xff]
    %v3102 = vld [vmem:[#allocation8 + $0x220] sm:$0xff]
    %v3103 = vld [vmem:[#allocation8 + $0x228] sm:$0xff]
    %v3104 = vld [vmem:[#allocation8 + $0x230] sm:$0xff]
    %v3105 = vld [vmem:[#allocation8 + $0x238] sm:$0xff]
    %v3106 = vld [vmem:[#allocation8 + $0x240] sm:$0xff]
    %v3107 = vld [vmem:[#allocation8 + $0x248] sm:$0xff]
    %v3108 = vld [vmem:[#allocation8 + $0x250] sm:$0xff]
    %v3109 = vld [vmem:[#allocation8 + $0x258] sm:$0xff]
    %v3110 = vld [vmem:[#allocation8 + $0x260] sm:$0xff]
    %v3111 = vld [vmem:[#allocation8 + $0x268] sm:$0xff]
    %v3112 = vld [vmem:[#allocation8 + $0x270] sm:$0xff]
    %v3113 = vld [vmem:[#allocation8 + $0x278] sm:$0xff]
    %v3114 = vld [vmem:[#allocation8 + $0x280] sm:$0xff]
    %v3115 = vld [vmem:[#allocation8 + $0x288] sm:$0xff]
    %v3116 = vld [vmem:[#allocation8 + $0x290] sm:$0xff]
    %v3117 = vld [vmem:[#allocation8 + $0x298] sm:$0xff]
    %v3118 = vld [vmem:[#allocation8 + $0x2a0] sm:$0xff]
    %v3119 = vld [vmem:[#allocation8 + $0x2a8] sm:$0xff]
    %v3120 = vld [vmem:[#allocation8 + $0x2b0] sm:$0xff]
    %v3121 = vld [vmem:[#allocation8 + $0x2b8] sm:$0xff]
    %v3122 = vld [vmem:[#allocation8 + $0x2c0] sm:$0xff]
    %v3123 = vld [vmem:[#allocation8 + $0x2c8] sm:$0xff]
    %v3124 = vld [vmem:[#allocation8 + $0x2d0] sm:$0xff]
    %v3125 = vld [vmem:[#allocation8 + $0x2d8] sm:$0xff]
    %v3126 = vld [vmem:[#allocation8 + $0x2e0] sm:$0xff]
    %v3127 = vld [vmem:[#allocation8 + $0x2e8] sm:$0xff]
    %v3128 = vld [vmem:[#allocation8 + $0x2f0] sm:$0xff]
    %v3129 = vld [vmem:[#allocation8 + $0x2f8] sm:$0xff]
    %v3130 = vld [vmem:[#allocation8 + $0x300] sm:$0xff]
    %v3131 = vld [vmem:[#allocation8 + $0x308] sm:$0xff]
    %v3132 = vld [vmem:[#allocation8 + $0x310] sm:$0xff]
    %v3133 = vld [vmem:[#allocation8 + $0x318] sm:$0xff]
    %v3134 = vld [vmem:[#allocation8 + $0x320] sm:$0xff]
    %v3135 = vld [vmem:[#allocation8 + $0x328] sm:$0xff]
    %v3136 = vld [vmem:[#allocation8 + $0x330] sm:$0xff]
    %v3137 = vld [vmem:[#allocation8 + $0x338] sm:$0xff]
    %v3138 = vld [vmem:[#allocation8 + $0x340] sm:$0xff]
    %v3139 = vld [vmem:[#allocation8 + $0x348] sm:$0xff]
    %v3140 = vld [vmem:[#allocation8 + $0x350] sm:$0xff]
    %v3141 = vld [vmem:[#allocation8 + $0x358] sm:$0xff]
    %v3142 = vld [vmem:[#allocation8 + $0x360] sm:$0xff]
    %v3143 = vld [vmem:[#allocation8 + $0x368] sm:$0xff]
    %v3144 = vld [vmem:[#allocation8 + $0x370] sm:$0xff]
    %v3145 = vld [vmem:[#allocation8 + $0x378] sm:$0xff]
    %v3146 = vld [vmem:[#allocation8 + $0x380] sm:$0xff]
    %v3147 = vld [vmem:[#allocation8 + $0x388] sm:$0xff]
    %v3148 = vld [vmem:[#allocation8 + $0x390] sm:$0xff]
    %v3149 = vld [vmem:[#allocation8 + $0x398] sm:$0xff]
    %v3150 = vld [vmem:[#allocation8 + $0x3a0] sm:$0xff]
    %v3151 = vld [vmem:[#allocation8 + $0x3a8] sm:$0xff]
    %v3152 = vld [vmem:[#allocation8 + $0x3b0] sm:$0xff]
    %v3153 = vld [vmem:[#allocation8 + $0x3b8] sm:$0xff]
    %v3154 = vld [vmem:[#allocation8 + $0x3c0] sm:$0xff]
    %v3155 = vld [vmem:[#allocation8 + $0x3c8] sm:$0xff]
    %v3156 = vld [vmem:[#allocation8 + $0x3d0] sm:$0xff]
    %v3157 = vld [vmem:[#allocation8 + $0x3d8] sm:$0xff]
    %v3158 = vld [vmem:[#allocation8 + $0x3e0] sm:$0xff]
    %v3159 = vld [vmem:[#allocation8 + $0x3e8] sm:$0xff]
    %v3160 = vld [vmem:[#allocation8 + $0x3f0] sm:$0xff]
    %v3161 = vld [vmem:[#allocation8 + $0x3f8] sm:$0xff]
    %v3162 = vld [vmem:[#allocation8 + $0x400] sm:$0xff]
    %v3163 = vld [vmem:[#allocation8 + $0x408] sm:$0xff]
    %v3164 = vld [vmem:[#allocation8 + $0x410] sm:$0xff]
    %v3165 = vld [vmem:[#allocation8 + $0x418] sm:$0xff]
    %v3166 = vld [vmem:[#allocation8 + $0x420] sm:$0xff]
    %v3167 = vld [vmem:[#allocation8 + $0x428] sm:$0xff]
    %v3168 = vld [vmem:[#allocation8 + $0x430] sm:$0xff]
    %v3169 = vld [vmem:[#allocation8 + $0x438] sm:$0xff]
    %v3170 = vld [vmem:[#allocation8 + $0x440] sm:$0xff]
    %v3171 = vld [vmem:[#allocation8 + $0x448] sm:$0xff]
    %v3172 = vld [vmem:[#allocation8 + $0x450] sm:$0xff]
    %v3173 = vld [vmem:[#allocation8 + $0x458] sm:$0xff]
    %v3174 = vld [vmem:[#allocation8 + $0x460] sm:$0xff]
    %v3175 = vld [vmem:[#allocation8 + $0x468] sm:$0xff]
    %v3176 = vld [vmem:[#allocation8 + $0x470] sm:$0xff]
    %v3177 = vld [vmem:[#allocation8 + $0x478] sm:$0xff]
    %v3178 = vld [vmem:[#allocation8 + $0x480] sm:$0xff]
    %v3179 = vld [vmem:[#allocation8 + $0x488] sm:$0xff]
    %v3180 = vld [vmem:[#allocation8 + $0x490] sm:$0xff]
    %v3181 = vld [vmem:[#allocation8 + $0x498] sm:$0xff]
    %v3182 = vld [vmem:[#allocation8 + $0x4a0] sm:$0xff]
    %v3183 = vld [vmem:[#allocation8 + $0x4a8] sm:$0xff]
    %v3184 = vld [vmem:[#allocation8 + $0x4b0] sm:$0xff]
    %v3185 = vld [vmem:[#allocation8 + $0x4b8] sm:$0xff]
    %v3186 = vld [vmem:[#allocation8 + $0x4c0] sm:$0xff]
    %v3187 = vld [vmem:[#allocation8 + $0x4c8] sm:$0xff]
    %v3188 = vld [vmem:[#allocation8 + $0x4d0] sm:$0xff]
    %v3189 = vld [vmem:[#allocation8 + $0x4d8] sm:$0xff]
    %v3190 = vld [vmem:[#allocation8 + $0x4e0] sm:$0xff]
    %v3191 = vld [vmem:[#allocation8 + $0x4e8] sm:$0xff]
    %v3192 = vld [vmem:[#allocation8 + $0x4f0] sm:$0xff]
    %v3193 = vld [vmem:[#allocation8 + $0x4f8] sm:$0xff]
    %v3194 = vld [vmem:[#allocation8 + $0x500] sm:$0xff]
    %v3195 = vld [vmem:[#allocation8 + $0x508] sm:$0xff]
    %v3196 = vld [vmem:[#allocation8 + $0x510] sm:$0xff]
    %v3197 = vld [vmem:[#allocation8 + $0x518] sm:$0xff]
    %v3198 = vld [vmem:[#allocation8 + $0x520] sm:$0xff]
    %v3199 = vld [vmem:[#allocation8 + $0x528] sm:$0xff]
    %v3200 = vld [vmem:[#allocation8 + $0x530] sm:$0xff]
    %v3201 = vld [vmem:[#allocation8 + $0x538] sm:$0xff]
    %v3202 = vld [vmem:[#allocation8 + $0x540] sm:$0xff]
    %v3203 = vld [vmem:[#allocation8 + $0x548] sm:$0xff]
    %v3204 = vld [vmem:[#allocation8 + $0x550] sm:$0xff]
    %v3205 = vld [vmem:[#allocation8 + $0x558] sm:$0xff]
    %v3206 = vld [vmem:[#allocation8 + $0x560] sm:$0xff]
    %v3207 = vld [vmem:[#allocation8 + $0x568] sm:$0xff]
    %v3208 = vld [vmem:[#allocation8 + $0x570] sm:$0xff]
    %v3209 = vld [vmem:[#allocation8 + $0x578] sm:$0xff]
    %v3210 = vld [vmem:[#allocation8 + $0x580] sm:$0xff]
    %v3211 = vld [vmem:[#allocation8 + $0x588] sm:$0xff]
    %v3212 = vld [vmem:[#allocation8 + $0x590] sm:$0xff]
    %v3213 = vld [vmem:[#allocation8 + $0x598] sm:$0xff]
    %v3214 = vld [vmem:[#allocation8 + $0x5a0] sm:$0xff]
    %v3215 = vld [vmem:[#allocation8 + $0x5a8] sm:$0xff]
    %v3216 = vld [vmem:[#allocation8 + $0x5b0] sm:$0xff]
    %v3217 = vld [vmem:[#allocation8 + $0x5b8] sm:$0xff]
    %v3218 = vld [vmem:[#allocation8 + $0x5c0] sm:$0xff]
    %v3219 = vld [vmem:[#allocation8 + $0x5c8] sm:$0xff]
    %v3220 = vld [vmem:[#allocation8 + $0x5d0] sm:$0xff]
    %v3221 = vld [vmem:[#allocation8 + $0x5d8] sm:$0xff]
    %v3222 = vld [vmem:[#allocation8 + $0x5e0] sm:$0xff]
    %v3223 = vld [vmem:[#allocation8 + $0x5e8] sm:$0xff]
    %v3224 = vld [vmem:[#allocation8 + $0x5f0] sm:$0xff]
    %v3225 = vld [vmem:[#allocation8 + $0x5f8] sm:$0xff]
    %v3226 = vld [vmem:[#allocation8 + $0x600] sm:$0xff]
    %v3227 = vld [vmem:[#allocation8 + $0x608] sm:$0xff]
    %v3228 = vld [vmem:[#allocation8 + $0x610] sm:$0xff]
    %v3229 = vld [vmem:[#allocation8 + $0x618] sm:$0xff]
    %v3230 = vld [vmem:[#allocation8 + $0x620] sm:$0xff]
    %v3231 = vld [vmem:[#allocation8 + $0x628] sm:$0xff]
    %v3232 = vld [vmem:[#allocation8 + $0x630] sm:$0xff]
    %v3233 = vld [vmem:[#allocation8 + $0x638] sm:$0xff]
    %v3234 = vld [vmem:[#allocation10] sm:$0xf]
    %v3236 = vlaneseq
    %v3237 = vshrl.u32 %v3236, 7
    %v3238 = vsub.s32 0, %v3237
    %v3239 = vrot.slane %v3234, %v3238
    %v3240 = vlaneseq
    %v3241 = vshrl.u32 %v3240, 7
    %v3242 = vsub.s32 1, %v3241
    %v3243 = vrot.slane %v3234, %v3242
    %v3244 = vlaneseq
    %v3245 = vshrl.u32 %v3244, 7
    %v3246 = vsub.s32 2, %v3245
    %v3247 = vrot.slane %v3234, %v3246
    %v3248 = vlaneseq
    %v3249 = vshrl.u32 %v3248, 7
    %v3250 = vsub.s32 3, %v3249
    %v3251 = vrot.slane %v3234, %v3250
    %v3456 = vunpack.c.l.b16 %v3034
    %v3457 = vunpack.c.h.b16 %v3034
    %v3458 = vunpack.c.l.b16 %v3035
    %v3459 = vunpack.c.h.b16 %v3035
    %v3460 = vunpack.c.l.b16 %v3036
    %v3461 = vunpack.c.h.b16 %v3036
    %v3462 = vunpack.c.l.b16 %v3037
    %v3463 = vunpack.c.h.b16 %v3037
    %v3464 = vunpack.c.l.b16 %v3038
    %v3465 = vunpack.c.h.b16 %v3038
    %v3466 = vunpack.c.l.b16 %v3039
    %v3467 = vunpack.c.h.b16 %v3039
    %v3468 = vunpack.c.l.b16 %v3040
    %v3469 = vunpack.c.h.b16 %v3040
    %v3470 = vunpack.c.l.b16 %v3041
    %v3471 = vunpack.c.h.b16 %v3041
    %v3472 = vunpack.c.l.b16 %v3042
    %v3473 = vunpack.c.h.b16 %v3042
    %v3474 = vunpack.c.l.b16 %v3043
    %v3475 = vunpack.c.h.b16 %v3043
    %v3476 = vunpack.c.l.b16 %v3044
    %v3477 = vunpack.c.h.b16 %v3044
    %v3478 = vunpack.c.l.b16 %v3045
    %v3479 = vunpack.c.h.b16 %v3045
    %v3480 = vunpack.c.l.b16 %v3046
    %v3481 = vunpack.c.h.b16 %v3046
    %v3482 = vunpack.c.l.b16 %v3047
    %v3483 = vunpack.c.h.b16 %v3047
    %v3484 = vunpack.c.l.b16 %v3048
    %v3485 = vunpack.c.h.b16 %v3048
    %v3486 = vunpack.c.l.b16 %v3049
    %v3487 = vunpack.c.h.b16 %v3049
    %v3488 = vunpack.c.l.b16 %v3050
    %v3489 = vunpack.c.h.b16 %v3050
    %v3490 = vunpack.c.l.b16 %v3051
    %v3491 = vunpack.c.h.b16 %v3051
    %v3492 = vunpack.c.l.b16 %v3052
    %v3493 = vunpack.c.h.b16 %v3052
    %v3494 = vunpack.c.l.b16 %v3053
    %v3495 = vunpack.c.h.b16 %v3053
    %v3496 = vunpack.c.l.b16 %v3054
    %v3497 = vunpack.c.h.b16 %v3054
    %v3498 = vunpack.c.l.b16 %v3055
    %v3499 = vunpack.c.h.b16 %v3055
    %v3500 = vunpack.c.l.b16 %v3056
    %v3501 = vunpack.c.h.b16 %v3056
    %v3502 = vunpack.c.l.b16 %v3057
    %v3503 = vunpack.c.h.b16 %v3057
    %v3504 = vunpack.c.l.b16 %v3058
    %v3505 = vunpack.c.h.b16 %v3058
    %v3506 = vunpack.c.l.b16 %v3059
    %v3507 = vunpack.c.h.b16 %v3059
    %v3508 = vunpack.c.l.b16 %v3060
    %v3509 = vunpack.c.h.b16 %v3060
    %v3510 = vunpack.c.l.b16 %v3061
    %v3511 = vunpack.c.h.b16 %v3061
    %v3512 = vunpack.c.l.b16 %v3062
    %v3513 = vunpack.c.h.b16 %v3062
    %v3514 = vunpack.c.l.b16 %v3063
    %v3515 = vunpack.c.h.b16 %v3063
    %v3516 = vunpack.c.l.b16 %v3064
    %v3517 = vunpack.c.h.b16 %v3064
    %v3518 = vunpack.c.l.b16 %v3065
    %v3519 = vunpack.c.h.b16 %v3065
    %v3520 = vunpack.c.l.b16 %v3066
    %v3521 = vunpack.c.h.b16 %v3066
    %v3522 = vunpack.c.l.b16 %v3067
    %v3523 = vunpack.c.h.b16 %v3067
    %v3524 = vunpack.c.l.b16 %v3068
    %v3525 = vunpack.c.h.b16 %v3068
    %v3526 = vunpack.c.l.b16 %v3069
    %v3527 = vunpack.c.h.b16 %v3069
    %v3528 = vunpack.c.l.b16 %v3070
    %v3529 = vunpack.c.h.b16 %v3070
    %v3530 = vunpack.c.l.b16 %v3071
    %v3531 = vunpack.c.h.b16 %v3071
    %v3532 = vunpack.c.l.b16 %v3072
    %v3533 = vunpack.c.h.b16 %v3072
    %v3534 = vunpack.c.l.b16 %v3073
    %v3535 = vunpack.c.h.b16 %v3073
    %v3536 = vunpack.c.l.b16 %v3074
    %v3537 = vunpack.c.h.b16 %v3074
    %v3538 = vunpack.c.l.b16 %v3075
    %v3539 = vunpack.c.h.b16 %v3075
    %v3540 = vunpack.c.l.b16 %v3076
    %v3541 = vunpack.c.h.b16 %v3076
    %v3542 = vunpack.c.l.b16 %v3077
    %v3543 = vunpack.c.h.b16 %v3077
    %v3544 = vunpack.c.l.b16 %v3078
    %v3545 = vunpack.c.h.b16 %v3078
    %v3546 = vunpack.c.l.b16 %v3079
    %v3547 = vunpack.c.h.b16 %v3079
    %v3548 = vunpack.c.l.b16 %v3080
    %v3549 = vunpack.c.h.b16 %v3080
    %v3550 = vunpack.c.l.b16 %v3081
    %v3551 = vunpack.c.h.b16 %v3081
    %v3552 = vunpack.c.l.b16 %v3082
    %v3553 = vunpack.c.h.b16 %v3082
    %v3554 = vunpack.c.l.b16 %v3083
    %v3555 = vunpack.c.h.b16 %v3083
    %v3556 = vunpack.c.l.b16 %v3084
    %v3557 = vunpack.c.h.b16 %v3084
    %v3558 = vunpack.c.l.b16 %v3085
    %v3559 = vunpack.c.h.b16 %v3085
    %v3560 = vunpack.c.l.b16 %v3086
    %v3561 = vunpack.c.h.b16 %v3086
    %v3562 = vunpack.c.l.b16 %v3087
    %v3563 = vunpack.c.h.b16 %v3087
    %v3564 = vunpack.c.l.b16 %v3088
    %v3565 = vunpack.c.h.b16 %v3088
    %v3566 = vunpack.c.l.b16 %v3089
    %v3567 = vunpack.c.h.b16 %v3089
    %v3568 = vunpack.c.l.b16 %v3090
    %v3569 = vunpack.c.h.b16 %v3090
    %v3570 = vunpack.c.l.b16 %v3091
    %v3571 = vunpack.c.h.b16 %v3091
    %v3572 = vunpack.c.l.b16 %v3092
    %v3573 = vunpack.c.h.b16 %v3092
    %v3574 = vunpack.c.l.b16 %v3093
    %v3575 = vunpack.c.h.b16 %v3093
    %v3576 = vunpack.c.l.b16 %v3094
    %v3577 = vunpack.c.h.b16 %v3094
    %v3578 = vunpack.c.l.b16 %v3095
    %v3579 = vunpack.c.h.b16 %v3095
    %v3580 = vunpack.c.l.b16 %v3096
    %v3581 = vunpack.c.h.b16 %v3096
    %v3582 = vunpack.c.l.b16 %v3097
    %v3583 = vunpack.c.h.b16 %v3097
    %v3584 = vunpack.c.l.b16 %v3098
    %v3585 = vunpack.c.h.b16 %v3098
    %v3586 = vunpack.c.l.b16 %v3099
    %v3587 = vunpack.c.h.b16 %v3099
    %v3588 = vunpack.c.l.b16 %v3100
    %v3589 = vunpack.c.h.b16 %v3100
    %v3590 = vunpack.c.l.b16 %v3101
    %v3591 = vunpack.c.h.b16 %v3101
    %v3592 = vunpack.c.l.b16 %v3102
    %v3593 = vunpack.c.h.b16 %v3102
    %v3594 = vunpack.c.l.b16 %v3103
    %v3595 = vunpack.c.h.b16 %v3103
    %v3596 = vunpack.c.l.b16 %v3104
    %v3597 = vunpack.c.h.b16 %v3104
    %v3598 = vunpack.c.l.b16 %v3105
    %v3599 = vunpack.c.h.b16 %v3105
    %v3600 = vunpack.c.l.b16 %v3106
    %v3601 = vunpack.c.h.b16 %v3106
    %v3602 = vunpack.c.l.b16 %v3107
    %v3603 = vunpack.c.h.b16 %v3107
    %v3604 = vunpack.c.l.b16 %v3108
    %v3605 = vunpack.c.h.b16 %v3108
    %v3606 = vunpack.c.l.b16 %v3109
    %v3607 = vunpack.c.h.b16 %v3109
    %v3608 = vunpack.c.l.b16 %v3110
    %v3609 = vunpack.c.h.b16 %v3110
    %v3610 = vunpack.c.l.b16 %v3111
    %v3611 = vunpack.c.h.b16 %v3111
    %v3612 = vunpack.c.l.b16 %v3112
    %v3613 = vunpack.c.h.b16 %v3112
    %v3614 = vunpack.c.l.b16 %v3113
    %v3615 = vunpack.c.h.b16 %v3113
    %v3616 = vunpack.c.l.b16 %v3114
    %v3617 = vunpack.c.h.b16 %v3114
    %v3618 = vunpack.c.l.b16 %v3115
    %v3619 = vunpack.c.h.b16 %v3115
    %v3620 = vunpack.c.l.b16 %v3116
    %v3621 = vunpack.c.h.b16 %v3116
    %v3622 = vunpack.c.l.b16 %v3117
    %v3623 = vunpack.c.h.b16 %v3117
    %v3624 = vunpack.c.l.b16 %v3118
    %v3625 = vunpack.c.h.b16 %v3118
    %v3626 = vunpack.c.l.b16 %v3119
    %v3627 = vunpack.c.h.b16 %v3119
    %v3628 = vunpack.c.l.b16 %v3120
    %v3629 = vunpack.c.h.b16 %v3120
    %v3630 = vunpack.c.l.b16 %v3121
    %v3631 = vunpack.c.h.b16 %v3121
    %v3632 = vunpack.c.l.b16 %v3122
    %v3633 = vunpack.c.h.b16 %v3122
    %v3634 = vunpack.c.l.b16 %v3123
    %v3635 = vunpack.c.h.b16 %v3123
    %v3636 = vunpack.c.l.b16 %v3124
    %v3637 = vunpack.c.h.b16 %v3124
    %v3638 = vunpack.c.l.b16 %v3125
    %v3639 = vunpack.c.h.b16 %v3125
    %v3640 = vunpack.c.l.b16 %v3126
    %v3641 = vunpack.c.h.b16 %v3126
    %v3642 = vunpack.c.l.b16 %v3127
    %v3643 = vunpack.c.h.b16 %v3127
    %v3644 = vunpack.c.l.b16 %v3128
    %v3645 = vunpack.c.h.b16 %v3128
    %v3646 = vunpack.c.l.b16 %v3129
    %v3647 = vunpack.c.h.b16 %v3129
    %v3648 = vunpack.c.l.b16 %v3130
    %v3649 = vunpack.c.h.b16 %v3130
    %v3650 = vunpack.c.l.b16 %v3131
    %v3651 = vunpack.c.h.b16 %v3131
    %v3652 = vunpack.c.l.b16 %v3132
    %v3653 = vunpack.c.h.b16 %v3132
    %v3654 = vunpack.c.l.b16 %v3133
    %v3655 = vunpack.c.h.b16 %v3133
    %v3656 = vunpack.c.l.b16 %v3134
    %v3657 = vunpack.c.h.b16 %v3134
    %v3658 = vunpack.c.l.b16 %v3135
    %v3659 = vunpack.c.h.b16 %v3135
    %v3660 = vunpack.c.l.b16 %v3136
    %v3661 = vunpack.c.h.b16 %v3136
    %v3662 = vunpack.c.l.b16 %v3137
    %v3663 = vunpack.c.h.b16 %v3137
    %v3664 = vunpack.c.l.b16 %v3138
    %v3665 = vunpack.c.h.b16 %v3138
    %v3666 = vunpack.c.l.b16 %v3139
    %v3667 = vunpack.c.h.b16 %v3139
    %v3668 = vunpack.c.l.b16 %v3140
    %v3669 = vunpack.c.h.b16 %v3140
    %v3670 = vunpack.c.l.b16 %v3141
    %v3671 = vunpack.c.h.b16 %v3141
    %v3672 = vunpack.c.l.b16 %v3142
    %v3673 = vunpack.c.h.b16 %v3142
    %v3674 = vunpack.c.l.b16 %v3143
    %v3675 = vunpack.c.h.b16 %v3143
    %v3676 = vunpack.c.l.b16 %v3144
    %v3677 = vunpack.c.h.b16 %v3144
    %v3678 = vunpack.c.l.b16 %v3145
    %v3679 = vunpack.c.h.b16 %v3145
    %v3680 = vunpack.c.l.b16 %v3146
    %v3681 = vunpack.c.h.b16 %v3146
    %v3682 = vunpack.c.l.b16 %v3147
    %v3683 = vunpack.c.h.b16 %v3147
    %v3684 = vunpack.c.l.b16 %v3148
    %v3685 = vunpack.c.h.b16 %v3148
    %v3686 = vunpack.c.l.b16 %v3149
    %v3687 = vunpack.c.h.b16 %v3149
    %v3688 = vunpack.c.l.b16 %v3150
    %v3689 = vunpack.c.h.b16 %v3150
    %v3690 = vunpack.c.l.b16 %v3151
    %v3691 = vunpack.c.h.b16 %v3151
    %v3692 = vunpack.c.l.b16 %v3152
    %v3693 = vunpack.c.h.b16 %v3152
    %v3694 = vunpack.c.l.b16 %v3153
    %v3695 = vunpack.c.h.b16 %v3153
    %v3696 = vunpack.c.l.b16 %v3154
    %v3697 = vunpack.c.h.b16 %v3154
    %v3698 = vunpack.c.l.b16 %v3155
    %v3699 = vunpack.c.h.b16 %v3155
    %v3700 = vunpack.c.l.b16 %v3156
    %v3701 = vunpack.c.h.b16 %v3156
    %v3702 = vunpack.c.l.b16 %v3157
    %v3703 = vunpack.c.h.b16 %v3157
    %v3704 = vunpack.c.l.b16 %v3158
    %v3705 = vunpack.c.h.b16 %v3158
    %v3706 = vunpack.c.l.b16 %v3159
    %v3707 = vunpack.c.h.b16 %v3159
    %v3708 = vunpack.c.l.b16 %v3160
    %v3709 = vunpack.c.h.b16 %v3160
    %v3710 = vunpack.c.l.b16 %v3161
    %v3711 = vunpack.c.h.b16 %v3161
    %v3712 = vunpack.c.l.b16 %v3162
    %v3713 = vunpack.c.h.b16 %v3162
    %v3714 = vunpack.c.l.b16 %v3163
    %v3715 = vunpack.c.h.b16 %v3163
    %v3716 = vunpack.c.l.b16 %v3164
    %v3717 = vunpack.c.h.b16 %v3164
    %v3718 = vunpack.c.l.b16 %v3165
    %v3719 = vunpack.c.h.b16 %v3165
    %v3720 = vunpack.c.l.b16 %v3166
    %v3721 = vunpack.c.h.b16 %v3166
    %v3722 = vunpack.c.l.b16 %v3167
    %v3723 = vunpack.c.h.b16 %v3167
    %v3724 = vunpack.c.l.b16 %v3168
    %v3725 = vunpack.c.h.b16 %v3168
    %v3726 = vunpack.c.l.b16 %v3169
    %v3727 = vunpack.c.h.b16 %v3169
    %v3728 = vunpack.c.l.b16 %v3170
    %v3729 = vunpack.c.h.b16 %v3170
    %v3730 = vunpack.c.l.b16 %v3171
    %v3731 = vunpack.c.h.b16 %v3171
    %v3732 = vunpack.c.l.b16 %v3172
    %v3733 = vunpack.c.h.b16 %v3172
    %v3734 = vunpack.c.l.b16 %v3173
    %v3735 = vunpack.c.h.b16 %v3173
    %v3736 = vunpack.c.l.b16 %v3174
    %v3737 = vunpack.c.h.b16 %v3174
    %v3738 = vunpack.c.l.b16 %v3175
    %v3739 = vunpack.c.h.b16 %v3175
    %v3740 = vunpack.c.l.b16 %v3176
    %v3741 = vunpack.c.h.b16 %v3176
    %v3742 = vunpack.c.l.b16 %v3177
    %v3743 = vunpack.c.h.b16 %v3177
    %v3744 = vunpack.c.l.b16 %v3178
    %v3745 = vunpack.c.h.b16 %v3178
    %v3746 = vunpack.c.l.b16 %v3179
    %v3747 = vunpack.c.h.b16 %v3179
    %v3748 = vunpack.c.l.b16 %v3180
    %v3749 = vunpack.c.h.b16 %v3180
    %v3750 = vunpack.c.l.b16 %v3181
    %v3751 = vunpack.c.h.b16 %v3181
    %v3752 = vunpack.c.l.b16 %v3182
    %v3753 = vunpack.c.h.b16 %v3182
    %v3754 = vunpack.c.l.b16 %v3183
    %v3755 = vunpack.c.h.b16 %v3183
    %v3756 = vunpack.c.l.b16 %v3184
    %v3757 = vunpack.c.h.b16 %v3184
    %v3758 = vunpack.c.l.b16 %v3185
    %v3759 = vunpack.c.h.b16 %v3185
    %v3760 = vunpack.c.l.b16 %v3186
    %v3761 = vunpack.c.h.b16 %v3186
    %v3762 = vunpack.c.l.b16 %v3187
    %v3763 = vunpack.c.h.b16 %v3187
    %v3764 = vunpack.c.l.b16 %v3188
    %v3765 = vunpack.c.h.b16 %v3188
    %v3766 = vunpack.c.l.b16 %v3189
    %v3767 = vunpack.c.h.b16 %v3189
    %v3768 = vunpack.c.l.b16 %v3190
    %v3769 = vunpack.c.h.b16 %v3190
    %v3770 = vunpack.c.l.b16 %v3191
    %v3771 = vunpack.c.h.b16 %v3191
    %v3772 = vunpack.c.l.b16 %v3192
    %v3773 = vunpack.c.h.b16 %v3192
    %v3774 = vunpack.c.l.b16 %v3193
    %v3775 = vunpack.c.h.b16 %v3193
    %v3776 = vunpack.c.l.b16 %v3194
    %v3777 = vunpack.c.h.b16 %v3194
    %v3778 = vunpack.c.l.b16 %v3195
    %v3779 = vunpack.c.h.b16 %v3195
    %v3780 = vunpack.c.l.b16 %v3196
    %v3781 = vunpack.c.h.b16 %v3196
    %v3782 = vunpack.c.l.b16 %v3197
    %v3783 = vunpack.c.h.b16 %v3197
    %v3784 = vunpack.c.l.b16 %v3198
    %v3785 = vunpack.c.h.b16 %v3198
    %v3786 = vunpack.c.l.b16 %v3199
    %v3787 = vunpack.c.h.b16 %v3199
    %v3788 = vunpack.c.l.b16 %v3200
    %v3789 = vunpack.c.h.b16 %v3200
    %v3790 = vunpack.c.l.b16 %v3201
    %v3791 = vunpack.c.h.b16 %v3201
    %v3792 = vunpack.c.l.b16 %v3202
    %v3793 = vunpack.c.h.b16 %v3202
    %v3794 = vunpack.c.l.b16 %v3203
    %v3795 = vunpack.c.h.b16 %v3203
    %v3796 = vunpack.c.l.b16 %v3204
    %v3797 = vunpack.c.h.b16 %v3204
    %v3798 = vunpack.c.l.b16 %v3205
    %v3799 = vunpack.c.h.b16 %v3205
    %v3800 = vunpack.c.l.b16 %v3206
    %v3801 = vunpack.c.h.b16 %v3206
    %v3802 = vunpack.c.l.b16 %v3207
    %v3803 = vunpack.c.h.b16 %v3207
    %v3804 = vunpack.c.l.b16 %v3208
    %v3805 = vunpack.c.h.b16 %v3208
    %v3806 = vunpack.c.l.b16 %v3209
    %v3807 = vunpack.c.h.b16 %v3209
    %v3808 = vunpack.c.l.b16 %v3210
    %v3809 = vunpack.c.h.b16 %v3210
    %v3810 = vunpack.c.l.b16 %v3211
    %v3811 = vunpack.c.h.b16 %v3211
    %v3812 = vunpack.c.l.b16 %v3212
    %v3813 = vunpack.c.h.b16 %v3212
    %v3814 = vunpack.c.l.b16 %v3213
    %v3815 = vunpack.c.h.b16 %v3213
    %v3816 = vunpack.c.l.b16 %v3214
    %v3817 = vunpack.c.h.b16 %v3214
    %v3818 = vunpack.c.l.b16 %v3215
    %v3819 = vunpack.c.h.b16 %v3215
    %v3820 = vunpack.c.l.b16 %v3216
    %v3821 = vunpack.c.h.b16 %v3216
    %v3822 = vunpack.c.l.b16 %v3217
    %v3823 = vunpack.c.h.b16 %v3217
    %v3824 = vunpack.c.l.b16 %v3218
    %v3825 = vunpack.c.h.b16 %v3218
    %v3826 = vunpack.c.l.b16 %v3219
    %v3827 = vunpack.c.h.b16 %v3219
    %v3828 = vunpack.c.l.b16 %v3220
    %v3829 = vunpack.c.h.b16 %v3220
    %v3830 = vunpack.c.l.b16 %v3221
    %v3831 = vunpack.c.h.b16 %v3221
    %v3832 = vunpack.c.l.b16 %v3222
    %v3833 = vunpack.c.h.b16 %v3222
    %v3834 = vunpack.c.l.b16 %v3223
    %v3835 = vunpack.c.h.b16 %v3223
    %v3836 = vunpack.c.l.b16 %v3224
    %v3837 = vunpack.c.h.b16 %v3224
    %v3838 = vunpack.c.l.b16 %v3225
    %v3839 = vunpack.c.h.b16 %v3225
    %v3840 = vunpack.c.l.b16 %v3226
    %v3841 = vunpack.c.h.b16 %v3226
    %v3842 = vunpack.c.l.b16 %v3227
    %v3843 = vunpack.c.h.b16 %v3227
    %v3844 = vunpack.c.l.b16 %v3228
    %v3845 = vunpack.c.h.b16 %v3228
    %v3846 = vunpack.c.l.b16 %v3229
    %v3847 = vunpack.c.h.b16 %v3229
    %v3848 = vunpack.c.l.b16 %v3230
    %v3849 = vunpack.c.h.b16 %v3230
    %v3850 = vunpack.c.l.b16 %v3231
    %v3851 = vunpack.c.h.b16 %v3231
    %v3852 = vunpack.c.l.b16 %v3232
    %v3853 = vunpack.c.h.b16 %v3232
    %v3854 = vunpack.c.l.b16 %v3233
    %v3855 = vunpack.c.h.b16 %v3233
    %v3856 = vpack.c.b16 %v3460, %v3456
    %v3857 = vpack.c.b16 %v3461, %v3457
    %v3858 = vpack.c.b16 %v3462, %v3458
    %v3859 = vpack.c.b16 %v3463, %v3459
    %v3860 = vpack.c.b16 %v3468, %v3464
    %v3861 = vpack.c.b16 %v3469, %v3465
    %v3862 = vpack.c.b16 %v3470, %v3466
    %v3863 = vpack.c.b16 %v3471, %v3467
    %v3864 = vpack.c.b16 %v3476, %v3472
    %v3865 = vpack.c.b16 %v3477, %v3473
    %v3866 = vpack.c.b16 %v3478, %v3474
    %v3867 = vpack.c.b16 %v3479, %v3475
    %v3868 = vpack.c.b16 %v3484, %v3480
    %v3869 = vpack.c.b16 %v3485, %v3481
    %v3870 = vpack.c.b16 %v3486, %v3482
    %v3871 = vpack.c.b16 %v3487, %v3483
    %v3872 = vpack.c.b16 %v3492, %v3488
    %v3873 = vpack.c.b16 %v3493, %v3489
    %v3874 = vpack.c.b16 %v3494, %v3490
    %v3875 = vpack.c.b16 %v3495, %v3491
    %v3876 = vpack.c.b16 %v3500, %v3496
    %v3877 = vpack.c.b16 %v3501, %v3497
    %v3878 = vpack.c.b16 %v3502, %v3498
    %v3879 = vpack.c.b16 %v3503, %v3499
    %v3880 = vpack.c.b16 %v3508, %v3504
    %v3881 = vpack.c.b16 %v3509, %v3505
    %v3882 = vpack.c.b16 %v3510, %v3506
    %v3883 = vpack.c.b16 %v3511, %v3507
    %v3884 = vpack.c.b16 %v3516, %v3512
    %v3885 = vpack.c.b16 %v3517, %v3513
    %v3886 = vpack.c.b16 %v3518, %v3514
    %v3887 = vpack.c.b16 %v3519, %v3515
    %v3888 = vpack.c.b16 %v3524, %v3520
    %v3889 = vpack.c.b16 %v3525, %v3521
    %v3890 = vpack.c.b16 %v3526, %v3522
    %v3891 = vpack.c.b16 %v3527, %v3523
    %v3892 = vpack.c.b16 %v3532, %v3528
    %v3893 = vpack.c.b16 %v3533, %v3529
    %v3894 = vpack.c.b16 %v3534, %v3530
    %v3895 = vpack.c.b16 %v3535, %v3531
    %v3896 = vpack.c.b16 %v3540, %v3536
    %v3897 = vpack.c.b16 %v3541, %v3537
    %v3898 = vpack.c.b16 %v3542, %v3538
    %v3899 = vpack.c.b16 %v3543, %v3539
    %v3900 = vpack.c.b16 %v3548, %v3544
    %v3901 = vpack.c.b16 %v3549, %v3545
    %v3902 = vpack.c.b16 %v3550, %v3546
    %v3903 = vpack.c.b16 %v3551, %v3547
    %v3904 = vpack.c.b16 %v3556, %v3552
    %v3905 = vpack.c.b16 %v3557, %v3553
    %v3906 = vpack.c.b16 %v3558, %v3554
    %v3907 = vpack.c.b16 %v3559, %v3555
    %v3908 = vpack.c.b16 %v3564, %v3560
    %v3909 = vpack.c.b16 %v3565, %v3561
    %v3910 = vpack.c.b16 %v3566, %v3562
    %v3911 = vpack.c.b16 %v3567, %v3563
    %v3912 = vpack.c.b16 %v3572, %v3568
    %v3913 = vpack.c.b16 %v3573, %v3569
    %v3914 = vpack.c.b16 %v3574, %v3570
    %v3915 = vpack.c.b16 %v3575, %v3571
    %v3916 = vpack.c.b16 %v3580, %v3576
    %v3917 = vpack.c.b16 %v3581, %v3577
    %v3918 = vpack.c.b16 %v3582, %v3578
    %v3919 = vpack.c.b16 %v3583, %v3579
    %v3920 = vpack.c.b16 %v3588, %v3584
    %v3921 = vpack.c.b16 %v3589, %v3585
    %v3922 = vpack.c.b16 %v3590, %v3586
    %v3923 = vpack.c.b16 %v3591, %v3587
    %v3924 = vpack.c.b16 %v3596, %v3592
    %v3925 = vpack.c.b16 %v3597, %v3593
    %v3926 = vpack.c.b16 %v3598, %v3594
    %v3927 = vpack.c.b16 %v3599, %v3595
    %v3928 = vpack.c.b16 %v3604, %v3600
    %v3929 = vpack.c.b16 %v3605, %v3601
    %v3930 = vpack.c.b16 %v3606, %v3602
    %v3931 = vpack.c.b16 %v3607, %v3603
    %v3932 = vpack.c.b16 %v3612, %v3608
    %v3933 = vpack.c.b16 %v3613, %v3609
    %v3934 = vpack.c.b16 %v3614, %v3610
    %v3935 = vpack.c.b16 %v3615, %v3611
    %v3936 = vpack.c.b16 %v3620, %v3616
    %v3937 = vpack.c.b16 %v3621, %v3617
    %v3938 = vpack.c.b16 %v3622, %v3618
    %v3939 = vpack.c.b16 %v3623, %v3619
    %v3940 = vpack.c.b16 %v3628, %v3624
    %v3941 = vpack.c.b16 %v3629, %v3625
    %v3942 = vpack.c.b16 %v3630, %v3626
    %v3943 = vpack.c.b16 %v3631, %v3627
    %v3944 = vpack.c.b16 %v3636, %v3632
    %v3945 = vpack.c.b16 %v3637, %v3633
    %v3946 = vpack.c.b16 %v3638, %v3634
    %v3947 = vpack.c.b16 %v3639, %v3635
    %v3948 = vpack.c.b16 %v3644, %v3640
    %v3949 = vpack.c.b16 %v3645, %v3641
    %v3950 = vpack.c.b16 %v3646, %v3642
    %v3951 = vpack.c.b16 %v3647, %v3643
    %v3952 = vpack.c.b16 %v3652, %v3648
    %v3953 = vpack.c.b16 %v3653, %v3649
    %v3954 = vpack.c.b16 %v3654, %v3650
    %v3955 = vpack.c.b16 %v3655, %v3651
    %v3956 = vpack.c.b16 %v3660, %v3656
    %v3957 = vpack.c.b16 %v3661, %v3657
    %v3958 = vpack.c.b16 %v3662, %v3658
    %v3959 = vpack.c.b16 %v3663, %v3659
    %v3960 = vpack.c.b16 %v3668, %v3664
    %v3961 = vpack.c.b16 %v3669, %v3665
    %v3962 = vpack.c.b16 %v3670, %v3666
    %v3963 = vpack.c.b16 %v3671, %v3667
    %v3964 = vpack.c.b16 %v3676, %v3672
    %v3965 = vpack.c.b16 %v3677, %v3673
    %v3966 = vpack.c.b16 %v3678, %v3674
    %v3967 = vpack.c.b16 %v3679, %v3675
    %v3968 = vpack.c.b16 %v3684, %v3680
    %v3969 = vpack.c.b16 %v3685, %v3681
    %v3970 = vpack.c.b16 %v3686, %v3682
    %v3971 = vpack.c.b16 %v3687, %v3683
    %v3972 = vpack.c.b16 %v3692, %v3688
    %v3973 = vpack.c.b16 %v3693, %v3689
    %v3974 = vpack.c.b16 %v3694, %v3690
    %v3975 = vpack.c.b16 %v3695, %v3691
    %v3976 = vpack.c.b16 %v3700, %v3696
    %v3977 = vpack.c.b16 %v3701, %v3697
    %v3978 = vpack.c.b16 %v3702, %v3698
    %v3979 = vpack.c.b16 %v3703, %v3699
    %v3980 = vpack.c.b16 %v3708, %v3704
    %v3981 = vpack.c.b16 %v3709, %v3705
    %v3982 = vpack.c.b16 %v3710, %v3706
    %v3983 = vpack.c.b16 %v3711, %v3707
    %v3984 = vpack.c.b16 %v3716, %v3712
    %v3985 = vpack.c.b16 %v3717, %v3713
    %v3986 = vpack.c.b16 %v3718, %v3714
    %v3987 = vpack.c.b16 %v3719, %v3715
    %v3988 = vpack.c.b16 %v3724, %v3720
    %v3989 = vpack.c.b16 %v3725, %v3721
    %v3990 = vpack.c.b16 %v3726, %v3722
    %v3991 = vpack.c.b16 %v3727, %v3723
    %v3992 = vpack.c.b16 %v3732, %v3728
    %v3993 = vpack.c.b16 %v3733, %v3729
    %v3994 = vpack.c.b16 %v3734, %v3730
    %v3995 = vpack.c.b16 %v3735, %v3731
    %v3996 = vpack.c.b16 %v3740, %v3736
    %v3997 = vpack.c.b16 %v3741, %v3737
    %v3998 = vpack.c.b16 %v3742, %v3738
    %v3999 = vpack.c.b16 %v3743, %v3739
    %v4000 = vpack.c.b16 %v3748, %v3744
    %v4001 = vpack.c.b16 %v3749, %v3745
    %v4002 = vpack.c.b16 %v3750, %v3746
    %v4003 = vpack.c.b16 %v3751, %v3747
    %v4004 = vpack.c.b16 %v3756, %v3752
    %v4005 = vpack.c.b16 %v3757, %v3753
    %v4006 = vpack.c.b16 %v3758, %v3754
    %v4007 = vpack.c.b16 %v3759, %v3755
    %v4008 = vpack.c.b16 %v3764, %v3760
    %v4009 = vpack.c.b16 %v3765, %v3761
    %v4010 = vpack.c.b16 %v3766, %v3762
    %v4011 = vpack.c.b16 %v3767, %v3763
    %v4012 = vpack.c.b16 %v3772, %v3768
    %v4013 = vpack.c.b16 %v3773, %v3769
    %v4014 = vpack.c.b16 %v3774, %v3770
    %v4015 = vpack.c.b16 %v3775, %v3771
    %v4016 = vpack.c.b16 %v3780, %v3776
    %v4017 = vpack.c.b16 %v3781, %v3777
    %v4018 = vpack.c.b16 %v3782, %v3778
    %v4019 = vpack.c.b16 %v3783, %v3779
    %v4020 = vpack.c.b16 %v3788, %v3784
    %v4021 = vpack.c.b16 %v3789, %v3785
    %v4022 = vpack.c.b16 %v3790, %v3786
    %v4023 = vpack.c.b16 %v3791, %v3787
    %v4024 = vpack.c.b16 %v3796, %v3792
    %v4025 = vpack.c.b16 %v3797, %v3793
    %v4026 = vpack.c.b16 %v3798, %v3794
    %v4027 = vpack.c.b16 %v3799, %v3795
    %v4028 = vpack.c.b16 %v3804, %v3800
    %v4029 = vpack.c.b16 %v3805, %v3801
    %v4030 = vpack.c.b16 %v3806, %v3802
    %v4031 = vpack.c.b16 %v3807, %v3803
    %v4032 = vpack.c.b16 %v3812, %v3808
    %v4033 = vpack.c.b16 %v3813, %v3809
    %v4034 = vpack.c.b16 %v3814, %v3810
    %v4035 = vpack.c.b16 %v3815, %v3811
    %v4036 = vpack.c.b16 %v3820, %v3816
    %v4037 = vpack.c.b16 %v3821, %v3817
    %v4038 = vpack.c.b16 %v3822, %v3818
    %v4039 = vpack.c.b16 %v3823, %v3819
    %v4040 = vpack.c.b16 %v3828, %v3824
    %v4041 = vpack.c.b16 %v3829, %v3825
    %v4042 = vpack.c.b16 %v3830, %v3826
    %v4043 = vpack.c.b16 %v3831, %v3827
    %v4044 = vpack.c.b16 %v3836, %v3832
    %v4045 = vpack.c.b16 %v3837, %v3833
    %v4046 = vpack.c.b16 %v3838, %v3834
    %v4047 = vpack.c.b16 %v3839, %v3835
    %v4048 = vpack.c.b16 %v3844, %v3840
    %v4049 = vpack.c.b16 %v3845, %v3841
    %v4050 = vpack.c.b16 %v3846, %v3842
    %v4051 = vpack.c.b16 %v3847, %v3843
    %v4052 = vpack.c.b16 %v3852, %v3848
    %v4053 = vpack.c.b16 %v3853, %v3849
    %v4054 = vpack.c.b16 %v3854, %v3850
    %v4055 = vpack.c.b16 %v3855, %v3851
    %vm4256 = vcmask 261120
    %v4258 = vsel %vm4256, %v3033, 0
    %4260 = vmatprep.subr.bf16.mxu0 %v3857
    %4261 = vmatpush1.bf16.msra.mxu0 %v3856
    %4262 = vmatprep.subr.bf16.mxu0 %v3861
    %4263 = vmatpush1.bf16.msra.mxu0 %v3860
    %4264 = vmatprep.subr.bf16.mxu0 %v3865
    %4265 = vmatpush1.bf16.msra.mxu0 %v3864
    %4266 = vmatprep.subr.bf16.mxu0 %v3869
    %4267 = vmatpush1.bf16.msra.mxu0 %v3868
    %4268 = vmatprep.subr.bf16.mxu0 %v3873
    %4269 = vmatpush1.bf16.msra.mxu0 %v3872
    %4270 = vmatprep.subr.bf16.mxu0 %v3877
    %4271 = vmatpush1.bf16.msra.mxu0 %v3876
    %4272 = vmatprep.subr.bf16.mxu0 %v3881
    %4273 = vmatpush1.bf16.msra.mxu0 %v3880
    %4274 = vmatprep.subr.bf16.mxu0 %v3885
    %4275 = vmatpush1.bf16.msra.mxu0 %v3884
    %4276 = vmatprep.subr.bf16.mxu0 %v3889
    %4277 = vmatpush1.bf16.msra.mxu0 %v3888
    %4278 = vmatprep.subr.bf16.mxu0 %v3893
    %4279 = vmatpush1.bf16.msra.mxu0 %v3892
    %4280 = vmatprep.subr.bf16.mxu0 %v3897
    %4281 = vmatpush1.bf16.msra.mxu0 %v3896
    %4282 = vmatprep.subr.bf16.mxu0 %v3901
    %4283 = vmatpush1.bf16.msra.mxu0 %v3900
    %4284 = vmatprep.subr.bf16.mxu0 %v3905
    %4285 = vmatpush1.bf16.msra.mxu0 %v3904
    %4286 = vmatprep.subr.bf16.mxu0 %v3909
    %4287 = vmatpush1.bf16.msra.mxu0 %v3908
    %4288 = vmatprep.subr.bf16.mxu0 %v3913
    %4289 = vmatpush1.bf16.msra.mxu0 %v3912
    %4290 = vmatprep.subr.bf16.mxu0 %v3917
    %4291 = vmatpush1.bf16.msra.mxu0 %v3916
    %4292 = vmatprep.mubr.bf16.mxu0 %v3028
    %4293 = vmatmul.mubr.bf16.gmra.mrb[0].mxu0 %v3027
    %v4294 = vpop.f32.mrb[0].mxu0
    %v4295 = vadd.f32 %v3239, %v4294
    %v4296 = vpop.f32.mrb[0].mxu0
    %v4297 = vadd.f32 %v3243, %v4296
    %v4298 = vpop.f32.mrb[0].mxu0
    %v4299 = vpop.f32.mrb[0].mxu0
    %4300 = vdwg.mxu0
    %4301 = vmatprep.subr.bf16.mxu0 %v3921
    %4302 = vmatpush1.bf16.msra.mxu0 %v3920
    %4303 = vmatprep.subr.bf16.mxu0 %v3925
    %4304 = vmatpush1.bf16.msra.mxu0 %v3924
    %4305 = vmatprep.subr.bf16.mxu0 %v3929
    %4306 = vmatpush1.bf16.msra.mxu0 %v3928
    %4307 = vmatprep.subr.bf16.mxu0 %v3933
    %4308 = vmatpush1.bf16.msra.mxu0 %v3932
    %4309 = vmatprep.subr.bf16.mxu0 %v3937
    %4310 = vmatpush1.bf16.msra.mxu0 %v3936
    %4311 = vmatprep.subr.bf16.mxu0 %v3941
    %4312 = vmatpush1.bf16.msra.mxu0 %v3940
    %4313 = vmatprep.subr.bf16.mxu0 %v3945
    %4314 = vmatpush1.bf16.msra.mxu0 %v3944
    %4315 = vmatprep.subr.bf16.mxu0 %v3949
    %4316 = vmatpush1.bf16.msra.mxu0 %v3948
    %4317 = vmatprep.subr.bf16.mxu0 %v3953
    %4318 = vmatpush1.bf16.msra.mxu0 %v3952
    %4319 = vmatprep.subr.bf16.mxu0 %v3957
    %4320 = vmatpush1.bf16.msra.mxu0 %v3956
    %4321 = vmatprep.subr.bf16.mxu0 %v3961
    %4322 = vmatpush1.bf16.msra.mxu0 %v3960
    %4323 = vmatprep.subr.bf16.mxu0 %v3965
    %4324 = vmatpush1.bf16.msra.mxu0 %v3964
    %4325 = vmatprep.subr.bf16.mxu0 %v3969
    %4326 = vmatpush1.bf16.msra.mxu0 %v3968
    %4327 = vmatprep.subr.bf16.mxu0 %v3973
    %4328 = vmatpush1.bf16.msra.mxu0 %v3972
    %4329 = vmatprep.subr.bf16.mxu0 %v3977
    %4330 = vmatpush1.bf16.msra.mxu0 %v3976
    %4331 = vmatprep.subr.bf16.mxu0 %v3981
    %4332 = vmatpush1.bf16.msra.mxu0 %v3980
    %4333 = vmatprep.mubr.bf16.mxu0 %v3030
    %4334 = vmatmul.mubr.bf16.gmra.mrb[0].mxu0 %v3029
    %v4335 = vpop.f32.mrb[0].mxu0
    %v4336 = vadd.f32 %v4295, %v4335
    %v4337 = vpop.f32.mrb[0].mxu0
    %v4338 = vadd.f32 %v4297, %v4337
    %v4339 = vpop.f32.mrb[0].mxu0
    %v4340 = vpop.f32.mrb[0].mxu0
    %4341 = vdwg.mxu0
    %4342 = vmatprep.subr.bf16.mxu0 %v3985
    %4343 = vmatpush1.bf16.msra.mxu0 %v3984
    %4344 = vmatprep.subr.bf16.mxu0 %v3989
    %4345 = vmatpush1.bf16.msra.mxu0 %v3988
    %4346 = vmatprep.subr.bf16.mxu0 %v3993
    %4347 = vmatpush1.bf16.msra.mxu0 %v3992
    %4348 = vmatprep.subr.bf16.mxu0 %v3997
    %4349 = vmatpush1.bf16.msra.mxu0 %v3996
    %4350 = vmatprep.subr.bf16.mxu0 %v4001
    %4351 = vmatpush1.bf16.msra.mxu0 %v4000
    %4352 = vmatprep.subr.bf16.mxu0 %v4005
    %4353 = vmatpush1.bf16.msra.mxu0 %v4004
    %4354 = vmatprep.subr.bf16.mxu0 %v4009
    %4355 = vmatpush1.bf16.msra.mxu0 %v4008
    %4356 = vmatprep.subr.bf16.mxu0 %v4013
    %4357 = vmatpush1.bf16.msra.mxu0 %v4012
    %4358 = vmatprep.subr.bf16.mxu0 %v4017
    %4359 = vmatpush1.bf16.msra.mxu0 %v4016
    %4360 = vmatprep.subr.bf16.mxu0 %v4021
    %4361 = vmatpush1.bf16.msra.mxu0 %v4020
    %4362 = vmatprep.subr.bf16.mxu0 %v4025
    %4363 = vmatpush1.bf16.msra.mxu0 %v4024
    %4364 = vmatprep.subr.bf16.mxu0 %v4029
    %4365 = vmatpush1.bf16.msra.mxu0 %v4028
    %4366 = vmatprep.subr.bf16.mxu0 %v4033
    %4367 = vmatpush1.bf16.msra.mxu0 %v4032
    %4368 = vmatprep.subr.bf16.mxu0 %v4037
    %4369 = vmatpush1.bf16.msra.mxu0 %v4036
    %4370 = vmatprep.subr.bf16.mxu0 %v4041
    %4371 = vmatpush1.bf16.msra.mxu0 %v4040
    %4372 = vmatprep.subr.bf16.mxu0 %v4045
    %4373 = vmatpush1.bf16.msra.mxu0 %v4044
    %4374 = vmatprep.mubr.bf16.mxu0 %v3032
    %4375 = vmatmul.mubr.bf16.gmra.mrb[0].mxu0 %v3031
    %v4376 = vpop.f32.mrb[0].mxu0
    %v4377 = vadd.f32 %v4336, %v4376
    %v4378 = vpop.f32.mrb[0].mxu0
    %v4379 = vadd.f32 %v4338, %v4378
    %v4380 = vpop.f32.mrb[0].mxu0
    %v4381 = vpop.f32.mrb[0].mxu0
    %4382 = vdwg.mxu0
    %4383 = vmatprep.subr.bf16.mxu0 %v4049
    %4384 = vmatpush1.bf16.msra.mxu0 %v4048
    %4385 = vmatprep.subr.bf16.mxu0 %v4053
    %4386 = vmatpush1.bf16.msra.mxu0 %v4052
    %4387 = vmatprep.subr.bf16.mxu0 0
    %4388 = vmatpush1.bf16.msra.mxu0 0
    %4389 = vmatprep.subr.bf16.mxu0 0
    %4390 = vmatpush1.bf16.msra.mxu0 0
    %4391 = vmatprep.subr.bf16.mxu0 0
    %4392 = vmatpush1.bf16.msra.mxu0 0
    %4393 = vmatprep.subr.bf16.mxu0 0
    %4394 = vmatpush1.bf16.msra.mxu0 0
    %4395 = vmatprep.subr.bf16.mxu0 0
    %4396 = vmatpush1.bf16.msra.mxu0 0
    %4397 = vmatprep.subr.bf16.mxu0 0
    %4398 = vmatpush1.bf16.msra.mxu0 0
    %4399 = vmatprep.subr.bf16.mxu0 0
    %4400 = vmatpush1.bf16.msra.mxu0 0
    %4401 = vmatprep.subr.bf16.mxu0 0
    %4402 = vmatpush1.bf16.msra.mxu0 0
    %4403 = vmatprep.subr.bf16.mxu0 0
    %4404 = vmatpush1.bf16.msra.mxu0 0
    %4405 = vmatprep.subr.bf16.mxu0 0
    %4406 = vmatpush1.bf16.msra.mxu0 0
    %4407 = vmatprep.subr.bf16.mxu0 0
    %4408 = vmatpush1.bf16.msra.mxu0 0
    %4409 = vmatprep.subr.bf16.mxu0 0
    %4410 = vmatpush1.bf16.msra.mxu0 0
    %4411 = vmatprep.subr.bf16.mxu0 0
    %4412 = vmatpush1.bf16.msra.mxu0 0
    %4413 = vmatprep.subr.bf16.mxu0 0
    %4414 = vmatpush1.bf16.msra.mxu0 0
    %4415 = vmatprep.mubr.bf16.mxu0 0
    %4416 = vmatmul.mubr.bf16.gmra.mrb[0].mxu0 %v4258
    %v4417 = vpop.f32.mrb[0].mxu0
    %v4418 = vadd.f32 %v4377, %v4417
    %v4419 = vpop.f32.mrb[0].mxu0
    %v4420 = vadd.f32 %v4379, %v4419
    %v4421 = vpop.f32.mrb[0].mxu0
    %v4422 = vpop.f32.mrb[0].mxu0
    %4423 = vdwg.mxu0
    %4424 = vmatprep.subr.bf16.mxu0 %v3859
    %4425 = vmatpush1.bf16.msra.mxu0 %v3858
    %4426 = vmatprep.subr.bf16.mxu0 %v3863
    %4427 = vmatpush1.bf16.msra.mxu0 %v3862
    %4428 = vmatprep.subr.bf16.mxu0 %v3867
    %4429 = vmatpush1.bf16.msra.mxu0 %v3866
    %4430 = vmatprep.subr.bf16.mxu0 %v3871
    %4431 = vmatpush1.bf16.msra.mxu0 %v3870
    %4432 = vmatprep.subr.bf16.mxu0 %v3875
    %4433 = vmatpush1.bf16.msra.mxu0 %v3874
    %4434 = vmatprep.subr.bf16.mxu0 %v3879
    %4435 = vmatpush1.bf16.msra.mxu0 %v3878
    %4436 = vmatprep.subr.bf16.mxu0 %v3883
    %4437 = vmatpush1.bf16.msra.mxu0 %v3882
    %4438 = vmatprep.subr.bf16.mxu0 %v3887
    %4439 = vmatpush1.bf16.msra.mxu0 %v3886
    %4440 = vmatprep.subr.bf16.mxu0 %v3891
    %4441 = vmatpush1.bf16.msra.mxu0 %v3890
    %4442 = vmatprep.subr.bf16.mxu0 %v3895
    %4443 = vmatpush1.bf16.msra.mxu0 %v3894
    %4444 = vmatprep.subr.bf16.mxu0 %v3899
    %4445 = vmatpush1.bf16.msra.mxu0 %v3898
    %4446 = vmatprep.subr.bf16.mxu0 %v3903
    %4447 = vmatpush1.bf16.msra.mxu0 %v3902
    %4448 = vmatprep.subr.bf16.mxu0 %v3907
    %4449 = vmatpush1.bf16.msra.mxu0 %v3906
    %4450 = vmatprep.subr.bf16.mxu0 %v3911
    %4451 = vmatpush1.bf16.msra.mxu0 %v3910
    %4452 = vmatprep.subr.bf16.mxu0 %v3915
    %4453 = vmatpush1.bf16.msra.mxu0 %v3914
    %4454 = vmatprep.subr.bf16.mxu0 %v3919
    %4455 = vmatpush1.bf16.msra.mxu0 %v3918
    %4456 = vmatprep.mubr.bf16.mxu0 %v3028
    %4457 = vmatmul.mubr.bf16.gmra.mrb[0].mxu0 %v3027
    %v4458 = vpop.f32.mrb[0].mxu0
    %v4459 = vadd.f32 %v3247, %v4458
    %v4460 = vpop.f32.mrb[0].mxu0
    %v4461 = vadd.f32 %v3251, %v4460
    %v4462 = vpop.f32.mrb[0].mxu0
    %v4463 = vpop.f32.mrb[0].mxu0
    %4464 = vdwg.mxu0
    %4465 = vmatprep.subr.bf16.mxu0 %v3923
    %4466 = vmatpush1.bf16.msra.mxu0 %v3922
    %4467 = vmatprep.subr.bf16.mxu0 %v3927
    %4468 = vmatpush1.bf16.msra.mxu0 %v3926
    %4469 = vmatprep.subr.bf16.mxu0 %v3931
    %4470 = vmatpush1.bf16.msra.mxu0 %v3930
    %4471 = vmatprep.subr.bf16.mxu0 %v3935
    %4472 = vmatpush1.bf16.msra.mxu0 %v3934
    %4473 = vmatprep.subr.bf16.mxu0 %v3939
    %4474 = vmatpush1.bf16.msra.mxu0 %v3938
    %4475 = vmatprep.subr.bf16.mxu0 %v3943
    %4476 = vmatpush1.bf16.msra.mxu0 %v3942
    %4477 = vmatprep.subr.bf16.mxu0 %v3947
    %4478 = vmatpush1.bf16.msra.mxu0 %v3946
    %4479 = vmatprep.subr.bf16.mxu0 %v3951
    %4480 = vmatpush1.bf16.msra.mxu0 %v3950
    %4481 = vmatprep.subr.bf16.mxu0 %v3955
    %4482 = vmatpush1.bf16.msra.mxu0 %v3954
    %4483 = vmatprep.subr.bf16.mxu0 %v3959
    %4484 = vmatpush1.bf16.msra.mxu0 %v3958
    %4485 = vmatprep.subr.bf16.mxu0 %v3963
    %4486 = vmatpush1.bf16.msra.mxu0 %v3962
    %4487 = vmatprep.subr.bf16.mxu0 %v3967
    %4488 = vmatpush1.bf16.msra.mxu0 %v3966
    %4489 = vmatprep.subr.bf16.mxu0 %v3971
    %4490 = vmatpush1.bf16.msra.mxu0 %v3970
    %4491 = vmatprep.subr.bf16.mxu0 %v3975
    %4492 = vmatpush1.bf16.msra.mxu0 %v3974
    %4493 = vmatprep.subr.bf16.mxu0 %v3979
    %4494 = vmatpush1.bf16.msra.mxu0 %v3978
    %4495 = vmatprep.subr.bf16.mxu0 %v3983
    %4496 = vmatpush1.bf16.msra.mxu0 %v3982
    %4497 = vmatprep.mubr.bf16.mxu0 %v3030
    %4498 = vmatmul.mubr.bf16.gmra.mrb[0].mxu0 %v3029
    %v4499 = vpop.f32.mrb[0].mxu0
    %v4500 = vadd.f32 %v4459, %v4499
    %v4501 = vpop.f32.mrb[0].mxu0
    %v4502 = vadd.f32 %v4461, %v4501
    %v4503 = vpop.f32.mrb[0].mxu0
    %v4504 = vpop.f32.mrb[0].mxu0
    %4505 = vdwg.mxu0
    %4506 = vmatprep.subr.bf16.mxu0 %v3987
    %4507 = vmatpush1.bf16.msra.mxu0 %v3986
    %4508 = vmatprep.subr.bf16.mxu0 %v3991
    %4509 = vmatpush1.bf16.msra.mxu0 %v3990
    %4510 = vmatprep.subr.bf16.mxu0 %v3995
    %4511 = vmatpush1.bf16.msra.mxu0 %v3994
    %4512 = vmatprep.subr.bf16.mxu0 %v3999
    %4513 = vmatpush1.bf16.msra.mxu0 %v3998
    %4514 = vmatprep.subr.bf16.mxu0 %v4003
    %4515 = vmatpush1.bf16.msra.mxu0 %v4002
    %4516 = vmatprep.subr.bf16.mxu0 %v4007
    %4517 = vmatpush1.bf16.msra.mxu0 %v4006
    %4518 = vmatprep.subr.bf16.mxu0 %v4011
    %4519 = vmatpush1.bf16.msra.mxu0 %v4010
    %4520 = vmatprep.subr.bf16.mxu0 %v4015
    %4521 = vmatpush1.bf16.msra.mxu0 %v4014
    %4522 = vmatprep.subr.bf16.mxu0 %v4019
    %4523 = vmatpush1.bf16.msra.mxu0 %v4018
    %4524 = vmatprep.subr.bf16.mxu0 %v4023
    %4525 = vmatpush1.bf16.msra.mxu0 %v4022
    %4526 = vmatprep.subr.bf16.mxu0 %v4027
    %4527 = vmatpush1.bf16.msra.mxu0 %v4026
    %4528 = vmatprep.subr.bf16.mxu0 %v4031
    %4529 = vmatpush1.bf16.msra.mxu0 %v4030
    %4530 = vmatprep.subr.bf16.mxu0 %v4035
    %4531 = vmatpush1.bf16.msra.mxu0 %v4034
    %4532 = vmatprep.subr.bf16.mxu0 %v4039
    %4533 = vmatpush1.bf16.msra.mxu0 %v4038
    %4534 = vmatprep.subr.bf16.mxu0 %v4043
    %4535 = vmatpush1.bf16.msra.mxu0 %v4042
    %4536 = vmatprep.subr.bf16.mxu0 %v4047
    %4537 = vmatpush1.bf16.msra.mxu0 %v4046
    %4538 = vmatprep.mubr.bf16.mxu0 %v3032
    %4539 = vmatmul.mubr.bf16.gmra.mrb[0].mxu0 %v3031
    %v4540 = vpop.f32.mrb[0].mxu0
    %v4541 = vadd.f32 %v4500, %v4540
    %v4542 = vpop.f32.mrb[0].mxu0
    %v4543 = vadd.f32 %v4502, %v4542
    %v4544 = vpop.f32.mrb[0].mxu0
    %v4545 = vpop.f32.mrb[0].mxu0
    %4546 = vdwg.mxu0
    %4547 = vmatprep.subr.bf16.mxu0 %v4051
    %4548 = vmatpush1.bf16.msra.mxu0 %v4050
    %4549 = vmatprep.subr.bf16.mxu0 %v4055
    %4550 = vmatpush1.bf16.msra.mxu0 %v4054
    %4551 = vmatprep.subr.bf16.mxu0 0
    %4552 = vmatpush1.bf16.msra.mxu0 0
    %4553 = vmatprep.subr.bf16.mxu0 0
    %4554 = vmatpush1.bf16.msra.mxu0 0
    %4555 = vmatprep.subr.bf16.mxu0 0
    %4556 = vmatpush1.bf16.msra.mxu0 0
    %4557 = vmatprep.subr.bf16.mxu0 0
    %4558 = vmatpush1.bf16.msra.mxu0 0
    %4559 = vmatprep.subr.bf16.mxu0 0
    %4560 = vmatpush1.bf16.msra.mxu0 0
    %4561 = vmatprep.subr.bf16.mxu0 0
    %4562 = vmatpush1.bf16.msra.mxu0 0
    %4563 = vmatprep.subr.bf16.mxu0 0
    %4564 = vmatpush1.bf16.msra.mxu0 0
    %4565 = vmatprep.subr.bf16.mxu0 0
    %4566 = vmatpush1.bf16.msra.mxu0 0
    %4567 = vmatprep.subr.bf16.mxu0 0
    %4568 = vmatpush1.bf16.msra.mxu0 0
    %4569 = vmatprep.subr.bf16.mxu0 0
    %4570 = vmatpush1.bf16.msra.mxu0 0
    %4571 = vmatprep.subr.bf16.mxu0 0
    %4572 = vmatpush1.bf16.msra.mxu0 0
    %4573 = vmatprep.subr.bf16.mxu0 0
    %4574 = vmatpush1.bf16.msra.mxu0 0
    %4575 = vmatprep.subr.bf16.mxu0 0
    %4576 = vmatpush1.bf16.msra.mxu0 0
    %4577 = vmatprep.subr.bf16.mxu0 0
    %4578 = vmatpush1.bf16.msra.mxu0 0
    %4579 = vmatprep.mubr.bf16.mxu0 0
    %4580 = vmatmul.mubr.bf16.gmra.mrb[0].mxu0 %v4258
    %v4581 = vpop.f32.mrb[0].mxu0
    %v4582 = vadd.f32 %v4541, %v4581
    %v4583 = vpop.f32.mrb[0].mxu0
    %v4584 = vadd.f32 %v4543, %v4583
    %v4585 = vpop.f32.mrb[0].mxu0
    %v4586 = vpop.f32.mrb[0].mxu0
    %4587 = vdwg.mxu0
    %v4588 = vmax.f32 %v4418, 0.0
    %v4589 = vmax.f32 %v4420, 0.0
    %v4590 = vmax.f32 %v4582, 0.0
    %v4591 = vmax.f32 %v4584, 0.0
    %v4592 = vpack.c.bf16 %v4588, %v4588
    %v4593 = vpack.c.bf16 %v4589, %v4589
    %v4594 = vpack.c.bf16 %v4590, %v4590
    %v4595 = vpack.c.bf16 %v4591, %v4591
    %v4596 = vld [vmem:[#allocation11] sm:$0xf]
    %v4597 = vld [vmem:[#allocation11 + $0x4] sm:$0xf]
    %v4598 = vld [vmem:[#allocation11 + $0x8] sm:$0xf]
    %v4599 = vld [vmem:[#allocation11 + $0xc] sm:$0xf]
    %v4600 = vld [vmem:[#allocation11 + $0x10] sm:$0xf]
    %v4601 = vld [vmem:[#allocation11 + $0x14] sm:$0xf]
    %v4602 = vld [vmem:[#allocation11 + $0x18] sm:$0xf]
    %v4603 = vld [vmem:[#allocation11 + $0x1c] sm:$0xf]
    %v4604 = vld [vmem:[#allocation11 + $0x20] sm:$0xf]
    %v4605 = vld [vmem:[#allocation11 + $0x24] sm:$0xf]
    %v4606 = vld [vmem:[#allocation11 + $0x28] sm:$0xf]
    %v4607 = vld [vmem:[#allocation11 + $0x2c] sm:$0xf]
    %v4608 = vld [vmem:[#allocation11 + $0x30] sm:$0xf]
    %v4609 = vld [vmem:[#allocation11 + $0x34] sm:$0xf]
    %v4610 = vld [vmem:[#allocation11 + $0x38] sm:$0xf]
    %v4611 = vld [vmem:[#allocation11 + $0x3c] sm:$0xf]
    %v4612 = vld [vmem:[#allocation11 + $0x40] sm:$0xf]
    %v4613 = vld [vmem:[#allocation11 + $0x44] sm:$0xf]
    %v4614 = vld [vmem:[#allocation11 + $0x48] sm:$0xf]
    %v4615 = vld [vmem:[#allocation11 + $0x4c] sm:$0xf]
    %v4616 = vld [vmem:[#allocation11 + $0x50] sm:$0xf]
    %v4617 = vld [vmem:[#allocation11 + $0x54] sm:$0xf]
    %v4618 = vld [vmem:[#allocation11 + $0x58] sm:$0xf]
    %v4619 = vld [vmem:[#allocation11 + $0x5c] sm:$0xf]
    %v4620 = vld [vmem:[#allocation11 + $0x60] sm:$0xf]
    %v4621 = vld [vmem:[#allocation11 + $0x64] sm:$0xf]
    %v4622 = vld [vmem:[#allocation11 + $0x68] sm:$0xf]
    %v4623 = vld [vmem:[#allocation11 + $0x6c] sm:$0xf]
    %v4624 = vld [vmem:[#allocation11 + $0x70] sm:$0xf]
    %v4625 = vld [vmem:[#allocation11 + $0x74] sm:$0xf]
    %v4626 = vld [vmem:[#allocation11 + $0x78] sm:$0xf]
    %v4627 = vld [vmem:[#allocation11 + $0x7c] sm:$0xf]
    %v4628 = vld [vmem:[#allocation11 + $0x80] sm:$0xf]
    %v4629 = vld [vmem:[#allocation11 + $0x84] sm:$0xf]
    %v4630 = vld [vmem:[#allocation11 + $0x88] sm:$0xf]
    %v4631 = vld [vmem:[#allocation11 + $0x8c] sm:$0xf]
    %v4632 = vld [vmem:[#allocation11 + $0x90] sm:$0xf]
    %v4633 = vld [vmem:[#allocation11 + $0x94] sm:$0xf]
    %v4634 = vld [vmem:[#allocation11 + $0x98] sm:$0xf]
    %v4635 = vld [vmem:[#allocation11 + $0x9c] sm:$0xf]
    %v4636 = vld [vmem:[#allocation11 + $0xa0] sm:$0xf]
    %v4637 = vld [vmem:[#allocation11 + $0xa4] sm:$0xf]
    %v4638 = vld [vmem:[#allocation11 + $0xa8] sm:$0xf]
    %v4639 = vld [vmem:[#allocation11 + $0xac] sm:$0xf]
    %v4640 = vld [vmem:[#allocation11 + $0xb0] sm:$0xf]
    %v4641 = vld [vmem:[#allocation11 + $0xb4] sm:$0xf]
    %v4642 = vld [vmem:[#allocation11 + $0xb8] sm:$0xf]
    %v4643 = vld [vmem:[#allocation11 + $0xbc] sm:$0xf]
    %v4644 = vld [vmem:[#allocation11 + $0xc0] sm:$0xf]
    %v4645 = vld [vmem:[#allocation11 + $0xc4] sm:$0xf]
    %v4646 = vld [vmem:[#allocation11 + $0xc8] sm:$0xf]
    %v4647 = vld [vmem:[#allocation11 + $0xcc] sm:$0xf]
    %v4648 = vld [vmem:[#allocation11 + $0xd0] sm:$0xf]
    %v4649 = vld [vmem:[#allocation11 + $0xd4] sm:$0xf]
    %v4650 = vld [vmem:[#allocation11 + $0xd8] sm:$0xf]
    %v4651 = vld [vmem:[#allocation11 + $0xdc] sm:$0xf]
    %v4652 = vld [vmem:[#allocation11 + $0xe0] sm:$0xf]
    %v4653 = vld [vmem:[#allocation11 + $0xe4] sm:$0xf]
    %v4654 = vld [vmem:[#allocation11 + $0xe8] sm:$0xf]
    %v4655 = vld [vmem:[#allocation11 + $0xec] sm:$0xf]
    %v4656 = vld [vmem:[#allocation11 + $0xf0] sm:$0xf]
    %v4657 = vld [vmem:[#allocation11 + $0xf4] sm:$0xf]
    %v4658 = vld [vmem:[#allocation11 + $0xf8] sm:$0xf]
    %v4659 = vld [vmem:[#allocation11 + $0xfc] sm:$0xf]
    %v4660 = vld [vmem:[#allocation13] sm:$0x1]
    %v4662 = vlaneseq
    %v4663 = vshrl.u32 %v4662, 7
    %v4664 = vsub.s32 0, %v4663
    %v4665 = vrot.slane %v4660, %v4664
    %v4731 = vunpack.c.l.b16 %v4596
    %v4732 = vunpack.c.l.b16 %v4597
    %v4733 = vunpack.c.l.b16 %v4598
    %v4734 = vunpack.c.l.b16 %v4599
    %v4735 = vunpack.c.l.b16 %v4600
    %v4736 = vunpack.c.l.b16 %v4601
    %v4737 = vunpack.c.l.b16 %v4602
    %v4738 = vunpack.c.l.b16 %v4603
    %v4739 = vunpack.c.l.b16 %v4604
    %v4740 = vunpack.c.l.b16 %v4605
    %v4741 = vunpack.c.l.b16 %v4606
    %v4742 = vunpack.c.l.b16 %v4607
    %v4743 = vunpack.c.l.b16 %v4608
    %v4744 = vunpack.c.l.b16 %v4609
    %v4745 = vunpack.c.l.b16 %v4610
    %v4746 = vunpack.c.l.b16 %v4611
    %v4747 = vunpack.c.l.b16 %v4612
    %v4748 = vunpack.c.l.b16 %v4613
    %v4749 = vunpack.c.l.b16 %v4614
    %v4750 = vunpack.c.l.b16 %v4615
    %v4751 = vunpack.c.l.b16 %v4616
    %v4752 = vunpack.c.l.b16 %v4617
    %v4753 = vunpack.c.l.b16 %v4618
    %v4754 = vunpack.c.l.b16 %v4619
    %v4755 = vunpack.c.l.b16 %v4620
    %v4756 = vunpack.c.l.b16 %v4621
    %v4757 = vunpack.c.l.b16 %v4622
    %v4758 = vunpack.c.l.b16 %v4623
    %v4759 = vunpack.c.l.b16 %v4624
    %v4760 = vunpack.c.l.b16 %v4625
    %v4761 = vunpack.c.l.b16 %v4626
    %v4762 = vunpack.c.l.b16 %v4627
    %v4763 = vunpack.c.l.b16 %v4628
    %v4764 = vunpack.c.l.b16 %v4629
    %v4765 = vunpack.c.l.b16 %v4630
    %v4766 = vunpack.c.l.b16 %v4631
    %v4767 = vunpack.c.l.b16 %v4632
    %v4768 = vunpack.c.l.b16 %v4633
    %v4769 = vunpack.c.l.b16 %v4634
    %v4770 = vunpack.c.l.b16 %v4635
    %v4771 = vunpack.c.l.b16 %v4636
    %v4772 = vunpack.c.l.b16 %v4637
    %v4773 = vunpack.c.l.b16 %v4638
    %v4774 = vunpack.c.l.b16 %v4639
    %v4775 = vunpack.c.l.b16 %v4640
    %v4776 = vunpack.c.l.b16 %v4641
    %v4777 = vunpack.c.l.b16 %v4642
    %v4778 = vunpack.c.l.b16 %v4643
    %v4779 = vunpack.c.l.b16 %v4644
    %v4780 = vunpack.c.l.b16 %v4645
    %v4781 = vunpack.c.l.b16 %v4646
    %v4782 = vunpack.c.l.b16 %v4647
    %v4783 = vunpack.c.l.b16 %v4648
    %v4784 = vunpack.c.l.b16 %v4649
    %v4785 = vunpack.c.l.b16 %v4650
    %v4786 = vunpack.c.l.b16 %v4651
    %v4787 = vunpack.c.l.b16 %v4652
    %v4788 = vunpack.c.l.b16 %v4653
    %v4789 = vunpack.c.l.b16 %v4654
    %v4790 = vunpack.c.l.b16 %v4655
    %v4791 = vunpack.c.l.b16 %v4656
    %v4792 = vunpack.c.l.b16 %v4657
    %v4793 = vunpack.c.l.b16 %v4658
    %v4794 = vunpack.c.l.b16 %v4659
    %v4795 = vpack.c.b16 %v4732, %v4731
    %v4796 = vpack.c.b16 %v4734, %v4733
    %v4797 = vpack.c.b16 %v4736, %v4735
    %v4798 = vpack.c.b16 %v4738, %v4737
    %v4799 = vpack.c.b16 %v4740, %v4739
    %v4800 = vpack.c.b16 %v4742, %v4741
    %v4801 = vpack.c.b16 %v4744, %v4743
    %v4802 = vpack.c.b16 %v4746, %v4745
    %v4803 = vpack.c.b16 %v4748, %v4747
    %v4804 = vpack.c.b16 %v4750, %v4749
    %v4805 = vpack.c.b16 %v4752, %v4751
    %v4806 = vpack.c.b16 %v4754, %v4753
    %v4807 = vpack.c.b16 %v4756, %v4755
    %v4808 = vpack.c.b16 %v4758, %v4757
    %v4809 = vpack.c.b16 %v4760, %v4759
    %v4810 = vpack.c.b16 %v4762, %v4761
    %v4811 = vpack.c.b16 %v4764, %v4763
    %v4812 = vpack.c.b16 %v4766, %v4765
    %v4813 = vpack.c.b16 %v4768, %v4767
    %v4814 = vpack.c.b16 %v4770, %v4769
    %v4815 = vpack.c.b16 %v4772, %v4771
    %v4816 = vpack.c.b16 %v4774, %v4773
    %v4817 = vpack.c.b16 %v4776, %v4775
    %v4818 = vpack.c.b16 %v4778, %v4777
    %v4819 = vpack.c.b16 %v4780, %v4779
    %v4820 = vpack.c.b16 %v4782, %v4781
    %v4821 = vpack.c.b16 %v4784, %v4783
    %v4822 = vpack.c.b16 %v4786, %v4785
    %v4823 = vpack.c.b16 %v4788, %v4787
    %v4824 = vpack.c.b16 %v4790, %v4789
    %v4825 = vpack.c.b16 %v4792, %v4791
    %v4826 = vpack.c.b16 %v4794, %v4793
    %4859 = vmatprep.subr.bf16.mxu0 0
    %4860 = vmatpush1.bf16.msra.mxu0 %v4795
    %4861 = vmatprep.subr.bf16.mxu0 0
    %4862 = vmatpush1.bf16.msra.mxu0 %v4796
    %4863 = vmatprep.subr.bf16.mxu0 0
    %4864 = vmatpush1.bf16.msra.mxu0 %v4797
    %4865 = vmatprep.subr.bf16.mxu0 0
    %4866 = vmatpush1.bf16.msra.mxu0 %v4798
    %4867 = vmatprep.subr.bf16.mxu0 0
    %4868 = vmatpush1.bf16.msra.mxu0 %v4799
    %4869 = vmatprep.subr.bf16.mxu0 0
    %4870 = vmatpush1.bf16.msra.mxu0 %v4800
    %4871 = vmatprep.subr.bf16.mxu0 0
    %4872 = vmatpush1.bf16.msra.mxu0 %v4801
    %4873 = vmatprep.subr.bf16.mxu0 0
    %4874 = vmatpush1.bf16.msra.mxu0 %v4802
    %4875 = vmatprep.subr.bf16.mxu0 0
    %4876 = vmatpush1.bf16.msra.mxu0 %v4803
    %4877 = vmatprep.subr.bf16.mxu0 0
    %4878 = vmatpush1.bf16.msra.mxu0 %v4804
    %4879 = vmatprep.subr.bf16.mxu0 0
    %4880 = vmatpush1.bf16.msra.mxu0 %v4805
    %4881 = vmatprep.subr.bf16.mxu0 0
    %4882 = vmatpush1.bf16.msra.mxu0 %v4806
    %4883 = vmatprep.subr.bf16.mxu0 0
    %4884 = vmatpush1.bf16.msra.mxu0 %v4807
    %4885 = vmatprep.subr.bf16.mxu0 0
    %4886 = vmatpush1.bf16.msra.mxu0 %v4808
    %4887 = vmatprep.subr.bf16.mxu0 0
    %4888 = vmatpush1.bf16.msra.mxu0 %v4809
    %4889 = vmatprep.subr.bf16.mxu0 0
    %4890 = vmatpush1.bf16.msra.mxu0 %v4810
    %4891 = vmatprep.mubr.bf16.mxu0 %v4593
    %4892 = vmatmul.mubr.bf16.gmra.mrb[0].mxu0 %v4592
    %v4893 = vpop.f32.mrb[0].mxu0
    %v4894 = vadd.f32 %v4665, %v4893
    %v4895 = vpop.f32.mrb[0].mxu0
    %v4896 = vpop.f32.mrb[0].mxu0
    %v4897 = vpop.f32.mrb[0].mxu0
    %4898 = vdwg.mxu0
    %4899 = vmatprep.subr.bf16.mxu0 0
    %4900 = vmatpush1.bf16.msra.mxu0 %v4811
    %4901 = vmatprep.subr.bf16.mxu0 0
    %4902 = vmatpush1.bf16.msra.mxu0 %v4812
    %4903 = vmatprep.subr.bf16.mxu0 0
    %4904 = vmatpush1.bf16.msra.mxu0 %v4813
    %4905 = vmatprep.subr.bf16.mxu0 0
    %4906 = vmatpush1.bf16.msra.mxu0 %v4814
    %4907 = vmatprep.subr.bf16.mxu0 0
    %4908 = vmatpush1.bf16.msra.mxu0 %v4815
    %4909 = vmatprep.subr.bf16.mxu0 0
    %4910 = vmatpush1.bf16.msra.mxu0 %v4816
    %4911 = vmatprep.subr.bf16.mxu0 0
    %4912 = vmatpush1.bf16.msra.mxu0 %v4817
    %4913 = vmatprep.subr.bf16.mxu0 0
    %4914 = vmatpush1.bf16.msra.mxu0 %v4818
    %4915 = vmatprep.subr.bf16.mxu0 0
    %4916 = vmatpush1.bf16.msra.mxu0 %v4819
    %4917 = vmatprep.subr.bf16.mxu0 0
    %4918 = vmatpush1.bf16.msra.mxu0 %v4820
    %4919 = vmatprep.subr.bf16.mxu0 0
    %4920 = vmatpush1.bf16.msra.mxu0 %v4821
    %4921 = vmatprep.subr.bf16.mxu0 0
    %4922 = vmatpush1.bf16.msra.mxu0 %v4822
    %4923 = vmatprep.subr.bf16.mxu0 0
    %4924 = vmatpush1.bf16.msra.mxu0 %v4823
    %4925 = vmatprep.subr.bf16.mxu0 0
    %4926 = vmatpush1.bf16.msra.mxu0 %v4824
    %4927 = vmatprep.subr.bf16.mxu0 0
    %4928 = vmatpush1.bf16.msra.mxu0 %v4825
    %4929 = vmatprep.subr.bf16.mxu0 0
    %4930 = vmatpush1.bf16.msra.mxu0 %v4826
    %4931 = vmatprep.mubr.bf16.mxu0 %v4595
    %4932 = vmatmul.mubr.bf16.gmra.mrb[0].mxu0 %v4594
    %v4933 = vpop.f32.mrb[0].mxu0
    %v4934 = vadd.f32 %v4894, %v4933
    %v4935 = vpop.f32.mrb[0].mxu0
    %v4936 = vpop.f32.mrb[0].mxu0
    %v4937 = vpop.f32.mrb[0].mxu0
    %4938 = vdwg.mxu0
    %v4939 = vsub.f32 0.0, %v4934
    %v4940 = vmul.f32 %v4939, 1.442695
    %v4941 = vpow.pop %v4940
    %v4942 = vadd.f32 %v4941, 1.0
    %v4943 = vrcp.pop %v4942
    %v4944 = vmul.f32 1.0, %v4943
    %4945 = vst [vmem:[#allocation14] sm:$0x3] %v4944
    // Predicated region
    $region58: #{tpu_custom_call.1} parent=1 // pred_check
      _
    $region59: #{tpu_custom_call.1} parent=1 // pred_check_branch
      %4947 = sbr.rel (0) target = $region61
    $region60: #{tpu_custom_call.1} parent=1 // pred_region
      %s4949 = ssub.s32 32, 32
      %4950 = vsyncadd [#allocation4], %s4949
      %s4952 = sshll.u32 [#allocation14], 4
      %s4953 = int_to_ptr.vmem [resolvable:$true] %s4952
      %4955 = dma.vmem_to_hbm [thread:$0]  %s4953, 32, %s7, [#allocation4]
    $region61: #{tpu_custom_call.1} parent=1 // pred_fallthru
      _
    // Predicated region
    $region62: #{tpu_custom_call.1} parent=1 // pred_check
      _
    $region63: #{tpu_custom_call.1} parent=1 // pred_check_branch
      %4957 = sbr.rel (0) target = $region65
    $region64: #{tpu_custom_call.1} parent=1 // pred_region
      %4958 = dma.done [#allocation4], 32
    $region65: #{tpu_custom_call.1} parent=1 // pred_fallthru
      _
    %4959 = vsyncpa [#allocation3], 1
    %4960 = vsyncpa [#allocation6], 1
    %4961 = vsyncpa [#allocation9], 1
    %4962 = vsyncpa [#allocation12], 1
    %4963 = vsyncpa [#allocation4], 1

</llo_original>
